<compile_context>
chip_gen: v6e
topology: v6e:2x2x1
jax: 0.10.0
libtpu: 0.0.40
codegen_flags: <defaults>
</compile_context>

<pallas_src>
import functools

import jax
import jax.numpy as jnp
from jax.experimental import pallas as pl
from jax.experimental.pallas import tpu as pltpu


def _conv_kernel(x_ref, w_ref, o_ref, stats_ref, acc_ref, *, stride, dilate):
    """x_ref:     (Hp, Wp, Cp)    spatially zero-padded, channel-padded input
       w_ref:     (3, 3, Cp, Cp)  conv weight (kh, kw, Cin, Cout), zero-padded
       o_ref:     (Ho, Wo, Cp)    conv output (f32)
       stats_ref: (2, Cp)         row 0 = sum over (Ho,Wo), row 1 = sum of sq.
       acc_ref:   (Ho*Wo, Cp)     f32 VMEM accumulator scratch
    """
    Ho, Wo, Cp = o_ref.shape

    # stride == 1 (common case): slice the VMEM ref directly per tap -- no
    # whole-tile materialization.  stride > 1 falls back to slicing a loaded
    # value (strided ref loads are riskier to lower).
    # TODO(synk): for stride > 1, push the spatial subsampling into the DMA /
    # index_map instead of an in-kernel strided slice.
    x_full = None if stride == 1 else x_ref[...]

    first = True
    for dy in range(3):
        for dx in range(3):
            oy = dy * dilate
            ox = dx * dilate
            if stride == 1:
                patch = x_ref[oy:oy + Ho, ox:ox + Wo, :]
            else:
                patch = x_full[oy:oy + stride * (Ho - 1) + 1:stride,
                               ox:ox + stride * (Wo - 1) + 1:stride, :]
            tap = jnp.dot(patch.reshape(Ho * Wo, Cp), w_ref[dy, dx],
                          preferred_element_type=jnp.float32)
            if first:
                acc_ref[...] = tap
                first = False
            else:
                acc_ref[...] += tap

    acc = acc_ref[...]
    o_ref[...] = acc.reshape(Ho, Wo, Cp).astype(o_ref.dtype)

    # Per-sample partial BatchNorm statistics (summed over this sample's
    # spatial extent); the tiny cross-sample reduction happens in the wrapper.
    s = jnp.sum(acc, axis=0, keepdims=True)             # (1, Cp)
    ss = jnp.sum(acc * acc, axis=0, keepdims=True)      # (1, Cp)
    stats_ref[...] = jnp.concatenate([s, ss], axis=0)   # (2, Cp)


def _bn_apply_kernel(y_ref, scale_ref, shift_ref, o_ref):
    """y_ref: (Ho, Wo, Cp); scale/shift: (1, Cp).  Lane-dense affine store."""
    o_ref[...] = (y_ref[...] * scale_ref[...] + shift_ref[...]).astype(o_ref.dtype)


def basic_conv(x, weight, gamma, beta, *, stride=1, padding=1, dilate=1,
               eps=1e-5, matmul_dtype=jnp.float32):
    """x: (N, C, H, W) f32, weight: (Cout=C, Cin=C, 3, 3), gamma/beta: (C,).

    matmul_dtype=jnp.bfloat16 is recommended on v6e/v7x (bf16-native MXU,
    halves activation DMA bytes); default float32 matches PyTorch numerics.
    """
    N, C, H, W = x.shape
    KH = KW = 3
    Ho = (H + 2 * padding - dilate * (KH - 1) - 1) // stride + 1
    Wo = (W + 2 * padding - dilate * (KW - 1) - 1) // stride + 1
    Hp, Wp = H + 2 * padding, W + 2 * padding

    # Lane-dense channel padding: last dim a multiple of 128.
    Cp = ((C + 127) // 128) * 128

    # ---- glue: NCHW -> NHWC, spatial zero-pad, channel zero-pad -------------
    # TODO(synk): fold the layout change + spatial padding into the kernel
    # (index_map + boundary masking) to save these extra HBM passes (matters
    # most on v5e's lower HBM bandwidth).
    x_nhwc = jnp.transpose(x, (0, 2, 3, 1))
    x_pad = jnp.pad(x_nhwc, ((0, 0), (padding, padding), (padding, padding),
                             (0, Cp - C))).astype(matmul_dtype)
    w = jnp.transpose(weight, (2, 3, 1, 0))                       # (3,3,Ci,Co)
    w = jnp.pad(w, ((0, 0), (0, 0), (0, Cp - C), (0, Cp - C))).astype(matmul_dtype)

    cparams = pltpu.CompilerParams(
        dimension_semantics=("parallel",),     # both TensorCores on v7x
        vmem_limit_bytes=32 * 1024 * 1024,     # explicit; safe on v5e/v6e/v7x
    )

    # ---- pass 1: conv + per-sample BN partial stats -------------------------
    conv_out, stats = pl.pallas_call(
        functools.partial(_conv_kernel, stride=stride, dilate=dilate),
        grid_spec=pltpu.PrefetchScalarGridSpec(
            num_scalar_prefetch=0,
            grid=(N,),
            in_specs=[
                pl.BlockSpec((None, Hp, Wp, Cp), lambda n: (n, 0, 0, 0)),
                pl.BlockSpec((KH, KW, Cp, Cp), lambda n: (0, 0, 0, 0)),
            ],
            out_specs=[
                pl.BlockSpec((None, Ho, Wo, Cp), lambda n: (n, 0, 0, 0)),
                pl.BlockSpec((None, 2, Cp), lambda n: (n, 0, 0)),
            ],
            scratch_shapes=[pltpu.VMEM((Ho * Wo, Cp), jnp.float32)],
        ),
        out_shape=(
            jax.ShapeDtypeStruct((N, Ho, Wo, Cp), jnp.float32),
            jax.ShapeDtypeStruct((N, 2, Cp), jnp.float32),
        ),
        compiler_params=cparams,
    )(x_pad, w)

    # ---- tiny cross-sample reduction + BN affine params (plain JAX) ---------
    count = N * Ho * Wo
    total = jnp.sum(stats[:, 0, :], axis=0)                    # (Cp,)
    total_sq = jnp.sum(stats[:, 1, :], axis=0)                 # (Cp,)
    mean = total / count
    var = jnp.maximum(total_sq / count - mean * mean, 0.0)     # biased variance
    inv_std = jax.lax.rsqrt(var + eps)
    gamma_p = jnp.pad(gamma.astype(jnp.float32), (0, Cp - C))
    beta_p = jnp.pad(beta.astype(jnp.float32), (0, Cp - C))
    scale = (gamma_p * inv_std).reshape(1, Cp)
    shift = (beta_p - mean * gamma_p * inv_std).reshape(1, Cp)

    # ---- pass 2: training-mode BatchNorm2d normalization --------------------
    out_nhwc = pl.pallas_call(
        _bn_apply_kernel,
        grid_spec=pltpu.PrefetchScalarGridSpec(
            num_scalar_prefetch=0,
            grid=(N,),
            in_specs=[
                pl.BlockSpec((None, Ho, Wo, Cp), lambda n: (n, 0, 0, 0)),
                pl.BlockSpec((1, Cp), lambda n: (0, 0)),
                pl.BlockSpec((1, Cp), lambda n: (0, 0)),
            ],
            out_specs=pl.BlockSpec((None, Ho, Wo, Cp), lambda n: (n, 0, 0, 0)),
        ),
        out_shape=jax.ShapeDtypeStruct((N, Ho, Wo, Cp), x.dtype),
        compiler_params=cparams,
    )(conv_out, scale, shift)

    # Strip channel padding and return NCHW (one fused XLA slice+transpose).
    return jnp.transpose(out_nhwc[..., :C], (0, 3, 1, 2))


if __name__ == "__main__":
    key = jax.random.PRNGKey(0)
    kx, kw = jax.random.split(key)

    N, C, H, W = 2, 4, 16, 16
    stride, padding, dilate = 1, 1, 1

    x = jax.random.normal(kx, (N, C, H, W), dtype=jnp.float32)
    # Conv2d weight (Cout, Cin, 3, 3), bias=False.  Deterministic init.
    weight = jax.random.normal(kw, (C, C, 3, 3), dtype=jnp.float32) * 0.1
    # BatchNorm2d default init: gamma = 1, beta = 0.
    gamma = jnp.ones((C,), dtype=jnp.float32)
    beta = jnp.zeros((C,), dtype=jnp.float32)

    out = basic_conv(x, weight, gamma, beta,
                     stride=stride, padding=padding, dilate=dilate)
    out = jax.block_until_ready(out)

    assert out.shape == (N, C, H, W), out.shape
    assert bool(jnp.all(jnp.isfinite(out)))
    print("KERNEL_OK")
</pallas_src>

<mosaic_0001>
module attributes {stable_mosaic.version = 11 : i64} {
  func.func @_conv_kernel(%arg0: i32, %arg1: memref<1x18x18x128xf32, #tpu.memory_space<vmem>>, %arg2: memref<3x3x128x128xf32, #tpu.memory_space<vmem>>, %arg3: memref<1x16x16x128xf32, #tpu.memory_space<vmem>>, %arg4: memref<1x2x128xf32, #tpu.memory_space<vmem>>, %arg5: memref<256x128xf32, #tpu.memory_space<vmem>>) attributes {dimension_semantics = [#tpu.dimension_semantics<parallel>], iteration_bounds = array<i64: 2>, scalar_prefetch = 0 : i64, scratch_operands = 1 : i64, tpu.core_type = #tpu.core_type<tc>, window_params = [{transform_indices = @transform_0, window_bounds = array<i64: 1, 18, 18, 128>}, {pipeline_mode = #tpu.pipeline_mode<synchronous>, transform_indices = @transform_1, window_bounds = array<i64: 3, 3, 128, 128>}, {transform_indices = @transform_2, window_bounds = array<i64: 1, 16, 16, 128>}, {transform_indices = @transform_3, window_bounds = array<i64: 1, 2, 128>}]} {
    %c0 = arith.constant 0 : index
    %c0_0 = arith.constant 0 : index
    %c0_1 = arith.constant 0 : index
    %c0_2 = arith.constant 0 : index
    %0 = vector.load %arg1[%c0, %c0_0, %c0_1, %c0_2] : memref<1x18x18x128xf32, #tpu.memory_space<vmem>>, vector<1x16x16x128xf32>
    %1 = vector.shape_cast %0 : vector<1x16x16x128xf32> to vector<16x16x128xf32>
    %2 = vector.shape_cast %1 : vector<16x16x128xf32> to vector<256x128xf32>
    %c0_3 = arith.constant 0 : index
    %c0_4 = arith.constant 0 : index
    %c0_5 = arith.constant 0 : index
    %c0_6 = arith.constant 0 : index
    %3 = vector.load %arg2[%c0_3, %c0_4, %c0_5, %c0_6] : memref<3x3x128x128xf32, #tpu.memory_space<vmem>>, vector<1x1x128x128xf32>
    %4 = vector.shape_cast %3 : vector<1x1x128x128xf32> to vector<128x128xf32>
    %cst = arith.constant dense<0.000000e+00> : vector<256x128xf32>
    %5 = tpu.matmul %2, %4, %cst {dimension_numbers = #tpu.dot_dimension_numbers<[1], [0], [0], [1], [0, 0, 1, 1], [], []>} : vector<256x128xf32>, vector<128x128xf32>, vector<256x128xf32> -> vector<256x128xf32>
    %c0_7 = arith.constant 0 : index
    %c0_8 = arith.constant 0 : index
    %6 = vector.load %arg5[%c0_7, %c0_8] : memref<256x128xf32, #tpu.memory_space<vmem>>, vector<256x128xf32>
    tpu.vector_store %arg5[%c0_7, %c0_8], %5 {strides = array<i32>} : memref<256x128xf32, #tpu.memory_space<vmem>>, vector<256x128xf32>,
    %c0_9 = arith.constant 0 : index
    %c0_10 = arith.constant 0 : index
    %c1 = arith.constant 1 : index
    %c0_11 = arith.constant 0 : index
    %7 = vector.load %arg1[%c0_9, %c0_10, %c1, %c0_11] : memref<1x18x18x128xf32, #tpu.memory_space<vmem>>, vector<1x16x16x128xf32>
    %8 = vector.shape_cast %7 : vector<1x16x16x128xf32> to vector<16x16x128xf32>
    %9 = vector.shape_cast %8 : vector<16x16x128xf32> to vector<256x128xf32>
    %c0_12 = arith.constant 0 : index
    %c1_13 = arith.constant 1 : index
    %c0_14 = arith.constant 0 : index
    %c0_15 = arith.constant 0 : index
    %10 = vector.load %arg2[%c0_12, %c1_13, %c0_14, %c0_15] : memref<3x3x128x128xf32, #tpu.memory_space<vmem>>, vector<1x1x128x128xf32>
    %11 = vector.shape_cast %10 : vector<1x1x128x128xf32> to vector<128x128xf32>
    %cst_16 = arith.constant dense<0.000000e+00> : vector<256x128xf32>
    %12 = tpu.matmul %9, %11, %cst_16 {dimension_numbers = #tpu.dot_dimension_numbers<[1], [0], [0], [1], [0, 0, 1, 1], [], []>} : vector<256x128xf32>, vector<128x128xf32>, vector<256x128xf32> -> vector<256x128xf32>
    %c0_17 = arith.constant 0 : index
    %c0_18 = arith.constant 0 : index
    %13 = vector.load %arg5[%c0_17, %c0_18] : memref<256x128xf32, #tpu.memory_space<vmem>>, vector<256x128xf32>
    %14 = arith.addf %13, %12 : vector<256x128xf32>
    %c0_19 = arith.constant 0 : index
    %c0_20 = arith.constant 0 : index
    %15 = vector.load %arg5[%c0_19, %c0_20] : memref<256x128xf32, #tpu.memory_space<vmem>>, vector<256x128xf32>
    tpu.vector_store %arg5[%c0_19, %c0_20], %14 {strides = array<i32>} : memref<256x128xf32, #tpu.memory_space<vmem>>, vector<256x128xf32>,
    %c0_21 = arith.constant 0 : index
    %c0_22 = arith.constant 0 : index
    %c2 = arith.constant 2 : index
    %c0_23 = arith.constant 0 : index
    %16 = vector.load %arg1[%c0_21, %c0_22, %c2, %c0_23] : memref<1x18x18x128xf32, #tpu.memory_space<vmem>>, vector<1x16x16x128xf32>
    %17 = vector.shape_cast %16 : vector<1x16x16x128xf32> to vector<16x16x128xf32>
    %18 = vector.shape_cast %17 : vector<16x16x128xf32> to vector<256x128xf32>
    %c0_24 = arith.constant 0 : index
    %c2_25 = arith.constant 2 : index
    %c0_26 = arith.constant 0 : index
    %c0_27 = arith.constant 0 : index
    %19 = vector.load %arg2[%c0_24, %c2_25, %c0_26, %c0_27] : memref<3x3x128x128xf32, #tpu.memory_space<vmem>>, vector<1x1x128x128xf32>
    %20 = vector.shape_cast %19 : vector<1x1x128x128xf32> to vector<128x128xf32>
    %cst_28 = arith.constant dense<0.000000e+00> : vector<256x128xf32>
    %21 = tpu.matmul %18, %20, %cst_28 {dimension_numbers = #tpu.dot_dimension_numbers<[1], [0], [0], [1], [0, 0, 1, 1], [], []>} : vector<256x128xf32>, vector<128x128xf32>, vector<256x128xf32> -> vector<256x128xf32>
    %c0_29 = arith.constant 0 : index
    %c0_30 = arith.constant 0 : index
    %22 = vector.load %arg5[%c0_29, %c0_30] : memref<256x128xf32, #tpu.memory_space<vmem>>, vector<256x128xf32>
    %23 = arith.addf %22, %21 : vector<256x128xf32>
    %c0_31 = arith.constant 0 : index
    %c0_32 = arith.constant 0 : index
    %24 = vector.load %arg5[%c0_31, %c0_32] : memref<256x128xf32, #tpu.memory_space<vmem>>, vector<256x128xf32>
    tpu.vector_store %arg5[%c0_31, %c0_32], %23 {strides = array<i32>} : memref<256x128xf32, #tpu.memory_space<vmem>>, vector<256x128xf32>,
    %c0_33 = arith.constant 0 : index
    %c1_34 = arith.constant 1 : index
    %c0_35 = arith.constant 0 : index
    %c0_36 = arith.constant 0 : index
    %25 = vector.load %arg1[%c0_33, %c1_34, %c0_35, %c0_36] : memref<1x18x18x128xf32, #tpu.memory_space<vmem>>, vector<1x16x16x128xf32>
    %26 = vector.shape_cast %25 : vector<1x16x16x128xf32> to vector<16x16x128xf32>
    %27 = vector.shape_cast %26 : vector<16x16x128xf32> to vector<256x128xf32>
    %c1_37 = arith.constant 1 : index
    %c0_38 = arith.constant 0 : index
    %c0_39 = arith.constant 0 : index
    %c0_40 = arith.constant 0 : index
    %28 = vector.load %arg2[%c1_37, %c0_38, %c0_39, %c0_40] : memref<3x3x128x128xf32, #tpu.memory_space<vmem>>, vector<1x1x128x128xf32>
    %29 = vector.shape_cast %28 : vector<1x1x128x128xf32> to vector<128x128xf32>
    %cst_41 = arith.constant dense<0.000000e+00> : vector<256x128xf32>
    %30 = tpu.matmul %27, %29, %cst_41 {dimension_numbers = #tpu.dot_dimension_numbers<[1], [0], [0], [1], [0, 0, 1, 1], [], []>} : vector<256x128xf32>, vector<128x128xf32>, vector<256x128xf32> -> vector<256x128xf32>
    %c0_42 = arith.constant 0 : index
    %c0_43 = arith.constant 0 : index
    %31 = vector.load %arg5[%c0_42, %c0_43] : memref<256x128xf32, #tpu.memory_space<vmem>>, vector<256x128xf32>
    %32 = arith.addf %31, %30 : vector<256x128xf32>
    %c0_44 = arith.constant 0 : index
    %c0_45 = arith.constant 0 : index
    %33 = vector.load %arg5[%c0_44, %c0_45] : memref<256x128xf32, #tpu.memory_space<vmem>>, vector<256x128xf32>
    tpu.vector_store %arg5[%c0_44, %c0_45], %32 {strides = array<i32>} : memref<256x128xf32, #tpu.memory_space<vmem>>, vector<256x128xf32>,
    %c0_46 = arith.constant 0 : index
    %c1_47 = arith.constant 1 : index
    %c1_48 = arith.constant 1 : index
    %c0_49 = arith.constant 0 : index
    %34 = vector.load %arg1[%c0_46, %c1_47, %c1_48, %c0_49] : memref<1x18x18x128xf32, #tpu.memory_space<vmem>>, vector<1x16x16x128xf32>
    %35 = vector.shape_cast %34 : vector<1x16x16x128xf32> to vector<16x16x128xf32>
    %36 = vector.shape_cast %35 : vector<16x16x128xf32> to vector<256x128xf32>
    %c1_50 = arith.constant 1 : index
    %c1_51 = arith.constant 1 : index
    %c0_52 = arith.constant 0 : index
    %c0_53 = arith.constant 0 : index
    %37 = vector.load %arg2[%c1_50, %c1_51, %c0_52, %c0_53] : memref<3x3x128x128xf32, #tpu.memory_space<vmem>>, vector<1x1x128x128xf32>
    %38 = vector.shape_cast %37 : vector<1x1x128x128xf32> to vector<128x128xf32>
    %cst_54 = arith.constant dense<0.000000e+00> : vector<256x128xf32>
    %39 = tpu.matmul %36, %38, %cst_54 {dimension_numbers = #tpu.dot_dimension_numbers<[1], [0], [0], [1], [0, 0, 1, 1], [], []>} : vector<256x128xf32>, vector<128x128xf32>, vector<256x128xf32> -> vector<256x128xf32>
    %c0_55 = arith.constant 0 : index
    %c0_56 = arith.constant 0 : index
    %40 = vector.load %arg5[%c0_55, %c0_56] : memref<256x128xf32, #tpu.memory_space<vmem>>, vector<256x128xf32>
    %41 = arith.addf %40, %39 : vector<256x128xf32>
    %c0_57 = arith.constant 0 : index
    %c0_58 = arith.constant 0 : index
    %42 = vector.load %arg5[%c0_57, %c0_58] : memref<256x128xf32, #tpu.memory_space<vmem>>, vector<256x128xf32>
    tpu.vector_store %arg5[%c0_57, %c0_58], %41 {strides = array<i32>} : memref<256x128xf32, #tpu.memory_space<vmem>>, vector<256x128xf32>,
    %c0_59 = arith.constant 0 : index
    %c1_60 = arith.constant 1 : index
    %c2_61 = arith.constant 2 : index
    %c0_62 = arith.constant 0 : index
    %43 = vector.load %arg1[%c0_59, %c1_60, %c2_61, %c0_62] : memref<1x18x18x128xf32, #tpu.memory_space<vmem>>, vector<1x16x16x128xf32>
    %44 = vector.shape_cast %43 : vector<1x16x16x128xf32> to vector<16x16x128xf32>
    %45 = vector.shape_cast %44 : vector<16x16x128xf32> to vector<256x128xf32>
    %c1_63 = arith.constant 1 : index
    %c2_64 = arith.constant 2 : index
    %c0_65 = arith.constant 0 : index
    %c0_66 = arith.constant 0 : index
    %46 = vector.load %arg2[%c1_63, %c2_64, %c0_65, %c0_66] : memref<3x3x128x128xf32, #tpu.memory_space<vmem>>, vector<1x1x128x128xf32>
    %47 = vector.shape_cast %46 : vector<1x1x128x128xf32> to vector<128x128xf32>
    %cst_67 = arith.constant dense<0.000000e+00> : vector<256x128xf32>
    %48 = tpu.matmul %45, %47, %cst_67 {dimension_numbers = #tpu.dot_dimension_numbers<[1], [0], [0], [1], [0, 0, 1, 1], [], []>} : vector<256x128xf32>, vector<128x128xf32>, vector<256x128xf32> -> vector<256x128xf32>
    %c0_68 = arith.constant 0 : index
    %c0_69 = arith.constant 0 : index
    %49 = vector.load %arg5[%c0_68, %c0_69] : memref<256x128xf32, #tpu.memory_space<vmem>>, vector<256x128xf32>
    %50 = arith.addf %49, %48 : vector<256x128xf32>
    %c0_70 = arith.constant 0 : index
    %c0_71 = arith.constant 0 : index
    %51 = vector.load %arg5[%c0_70, %c0_71] : memref<256x128xf32, #tpu.memory_space<vmem>>, vector<256x128xf32>
    tpu.vector_store %arg5[%c0_70, %c0_71], %50 {strides = array<i32>} : memref<256x128xf32, #tpu.memory_space<vmem>>, vector<256x128xf32>,
    %c0_72 = arith.constant 0 : index
    %c2_73 = arith.constant 2 : index
    %c0_74 = arith.constant 0 : index
    %c0_75 = arith.constant 0 : index
    %52 = vector.load %arg1[%c0_72, %c2_73, %c0_74, %c0_75] : memref<1x18x18x128xf32, #tpu.memory_space<vmem>>, vector<1x16x16x128xf32>
    %53 = vector.shape_cast %52 : vector<1x16x16x128xf32> to vector<16x16x128xf32>
    %54 = vector.shape_cast %53 : vector<16x16x128xf32> to vector<256x128xf32>
    %c2_76 = arith.constant 2 : index
    %c0_77 = arith.constant 0 : index
    %c0_78 = arith.constant 0 : index
    %c0_79 = arith.constant 0 : index
    %55 = vector.load %arg2[%c2_76, %c0_77, %c0_78, %c0_79] : memref<3x3x128x128xf32, #tpu.memory_space<vmem>>, vector<1x1x128x128xf32>
    %56 = vector.shape_cast %55 : vector<1x1x128x128xf32> to vector<128x128xf32>
    %cst_80 = arith.constant dense<0.000000e+00> : vector<256x128xf32>
    %57 = tpu.matmul %54, %56, %cst_80 {dimension_numbers = #tpu.dot_dimension_numbers<[1], [0], [0], [1], [0, 0, 1, 1], [], []>} : vector<256x128xf32>, vector<128x128xf32>, vector<256x128xf32> -> vector<256x128xf32>
    %c0_81 = arith.constant 0 : index
    %c0_82 = arith.constant 0 : index
    %58 = vector.load %arg5[%c0_81, %c0_82] : memref<256x128xf32, #tpu.memory_space<vmem>>, vector<256x128xf32>
    %59 = arith.addf %58, %57 : vector<256x128xf32>
    %c0_83 = arith.constant 0 : index
    %c0_84 = arith.constant 0 : index
    %60 = vector.load %arg5[%c0_83, %c0_84] : memref<256x128xf32, #tpu.memory_space<vmem>>, vector<256x128xf32>
    tpu.vector_store %arg5[%c0_83, %c0_84], %59 {strides = array<i32>} : memref<256x128xf32, #tpu.memory_space<vmem>>, vector<256x128xf32>,
    %c0_85 = arith.constant 0 : index
    %c2_86 = arith.constant 2 : index
    %c1_87 = arith.constant 1 : index
    %c0_88 = arith.constant 0 : index
    %61 = vector.load %arg1[%c0_85, %c2_86, %c1_87, %c0_88] : memref<1x18x18x128xf32, #tpu.memory_space<vmem>>, vector<1x16x16x128xf32>
    %62 = vector.shape_cast %61 : vector<1x16x16x128xf32> to vector<16x16x128xf32>
    %63 = vector.shape_cast %62 : vector<16x16x128xf32> to vector<256x128xf32>
    %c2_89 = arith.constant 2 : index
    %c1_90 = arith.constant 1 : index
    %c0_91 = arith.constant 0 : index
    %c0_92 = arith.constant 0 : index
    %64 = vector.load %arg2[%c2_89, %c1_90, %c0_91, %c0_92] : memref<3x3x128x128xf32, #tpu.memory_space<vmem>>, vector<1x1x128x128xf32>
    %65 = vector.shape_cast %64 : vector<1x1x128x128xf32> to vector<128x128xf32>
    %cst_93 = arith.constant dense<0.000000e+00> : vector<256x128xf32>
    %66 = tpu.matmul %63, %65, %cst_93 {dimension_numbers = #tpu.dot_dimension_numbers<[1], [0], [0], [1], [0, 0, 1, 1], [], []>} : vector<256x128xf32>, vector<128x128xf32>, vector<256x128xf32> -> vector<256x128xf32>
    %c0_94 = arith.constant 0 : index
    %c0_95 = arith.constant 0 : index
    %67 = vector.load %arg5[%c0_94, %c0_95] : memref<256x128xf32, #tpu.memory_space<vmem>>, vector<256x128xf32>
    %68 = arith.addf %67, %66 : vector<256x128xf32>
    %c0_96 = arith.constant 0 : index
    %c0_97 = arith.constant 0 : index
    %69 = vector.load %arg5[%c0_96, %c0_97] : memref<256x128xf32, #tpu.memory_space<vmem>>, vector<256x128xf32>
    tpu.vector_store %arg5[%c0_96, %c0_97], %68 {strides = array<i32>} : memref<256x128xf32, #tpu.memory_space<vmem>>, vector<256x128xf32>,
    %c0_98 = arith.constant 0 : index
    %c2_99 = arith.constant 2 : index
    %c2_100 = arith.constant 2 : index
    %c0_101 = arith.constant 0 : index
    %70 = vector.load %arg1[%c0_98, %c2_99, %c2_100, %c0_101] : memref<1x18x18x128xf32, #tpu.memory_space<vmem>>, vector<1x16x16x128xf32>
    %71 = vector.shape_cast %70 : vector<1x16x16x128xf32> to vector<16x16x128xf32>
    %72 = vector.shape_cast %71 : vector<16x16x128xf32> to vector<256x128xf32>
    %c2_102 = arith.constant 2 : index
    %c2_103 = arith.constant 2 : index
    %c0_104 = arith.constant 0 : index
    %c0_105 = arith.constant 0 : index
    %73 = vector.load %arg2[%c2_102, %c2_103, %c0_104, %c0_105] : memref<3x3x128x128xf32, #tpu.memory_space<vmem>>, vector<1x1x128x128xf32>
    %74 = vector.shape_cast %73 : vector<1x1x128x128xf32> to vector<128x128xf32>
    %cst_106 = arith.constant dense<0.000000e+00> : vector<256x128xf32>
    %75 = tpu.matmul %72, %74, %cst_106 {dimension_numbers = #tpu.dot_dimension_numbers<[1], [0], [0], [1], [0, 0, 1, 1], [], []>} : vector<256x128xf32>, vector<128x128xf32>, vector<256x128xf32> -> vector<256x128xf32>
    %c0_107 = arith.constant 0 : index
    %c0_108 = arith.constant 0 : index
    %76 = vector.load %arg5[%c0_107, %c0_108] : memref<256x128xf32, #tpu.memory_space<vmem>>, vector<256x128xf32>
    %77 = arith.addf %76, %75 : vector<256x128xf32>
    %c0_109 = arith.constant 0 : index
    %c0_110 = arith.constant 0 : index
    %78 = vector.load %arg5[%c0_109, %c0_110] : memref<256x128xf32, #tpu.memory_space<vmem>>, vector<256x128xf32>
    tpu.vector_store %arg5[%c0_109, %c0_110], %77 {strides = array<i32>} : memref<256x128xf32, #tpu.memory_space<vmem>>, vector<256x128xf32>,
    %c0_111 = arith.constant 0 : index
    %c0_112 = arith.constant 0 : index
    %79 = vector.load %arg5[%c0_111, %c0_112] : memref<256x128xf32, #tpu.memory_space<vmem>>, vector<256x128xf32>
    %80 = vector.shape_cast %79 : vector<256x128xf32> to vector<16x16x128xf32>
    %c0_113 = arith.constant 0 : index
    %c0_114 = arith.constant 0 : index
    %c0_115 = arith.constant 0 : index
    %c0_116 = arith.constant 0 : index
    %81 = vector.load %arg3[%c0_113, %c0_114, %c0_115, %c0_116] : memref<1x16x16x128xf32, #tpu.memory_space<vmem>>, vector<1x16x16x128xf32>
    %82 = vector.shape_cast %81 : vector<1x16x16x128xf32> to vector<16x16x128xf32>
    %83 = vector.shape_cast %80 : vector<16x16x128xf32> to vector<1x16x16x128xf32>
    tpu.vector_store %arg3[%c0_113, %c0_114, %c0_115, %c0_116], %83 {strides = array<i32>} : memref<1x16x16x128xf32, #tpu.memory_space<vmem>>, vector<1x16x16x128xf32>,
    %cst_117 = arith.constant dense<0.000000e+00> : vector<128xf32>
    %84 = vector.multi_reduction <add>, %79, %cst_117 [0] : vector<256x128xf32> to vector<128xf32>
    %85 = vector.shape_cast %84 : vector<128xf32> to vector<1x128xf32>
    %86 = arith.mulf %79, %79 : vector<256x128xf32>
    %cst_118 = arith.constant dense<0.000000e+00> : vector<128xf32>
    %87 = vector.multi_reduction <add>, %86, %cst_118 [0] : vector<256x128xf32> to vector<128xf32>
    %88 = vector.shape_cast %87 : vector<128xf32> to vector<1x128xf32>
    %89 = tpu.concatenate %85, %88 in 0 : vector<1x128xf32>, vector<1x128xf32> -> vector<2x128xf32>
    %c0_119 = arith.constant 0 : index
    %c0_120 = arith.constant 0 : index
    %c0_121 = arith.constant 0 : index
    %90 = vector.load %arg4[%c0_119, %c0_120, %c0_121] : memref<1x2x128xf32, #tpu.memory_space<vmem>>, vector<1x2x128xf32>
    %91 = vector.shape_cast %90 : vector<1x2x128xf32> to vector<2x128xf32>
    %92 = vector.shape_cast %89 : vector<2x128xf32> to vector<1x2x128xf32>
    tpu.vector_store %arg4[%c0_119, %c0_120, %c0_121], %92 {strides = array<i32>} : memref<1x2x128xf32, #tpu.memory_space<vmem>>, vector<1x2x128xf32>,
    return
  }
  func.func @transform_0(%arg0: i32) -> (i32, i32, i32, i32) {
    %c0_i32 = arith.constant 0 : i32
    %c0_i32_0 = arith.constant 0 : i32
    %c0_i32_1 = arith.constant 0 : i32
    %c0_i32_2 = arith.constant 0 : i32
    return %arg0, %c0_i32, %c0_i32_0, %c0_i32_1 : i32, i32, i32, i32
  }
  func.func @transform_1(%arg0: i32) -> (i32, i32, i32, i32) {
    %c0_i32 = arith.constant 0 : i32
    %c0_i32_0 = arith.constant 0 : i32
    %c0_i32_1 = arith.constant 0 : i32
    %c0_i32_2 = arith.constant 0 : i32
    %c0_i32_3 = arith.constant 0 : i32
    return %c0_i32, %c0_i32_0, %c0_i32_1, %c0_i32_2 : i32, i32, i32, i32
  }
  func.func @transform_2(%arg0: i32) -> (i32, i32, i32, i32) {
    %c0_i32 = arith.constant 0 : i32
    %c0_i32_0 = arith.constant 0 : i32
    %c0_i32_1 = arith.constant 0 : i32
    %c0_i32_2 = arith.constant 0 : i32
    return %arg0, %c0_i32, %c0_i32_0, %c0_i32_1 : i32, i32, i32, i32
  }
  func.func @transform_3(%arg0: i32) -> (i32, i32, i32) {
    %c0_i32 = arith.constant 0 : i32
    %c0_i32_0 = arith.constant 0 : i32
    %c0_i32_1 = arith.constant 0 : i32
    return %arg0, %c0_i32, %c0_i32_0 : i32, i32, i32
  }
}

</mosaic_0001>

<llo_original>
// kernel: tpu_custom_call.1
$region0: #{tpu_custom_call.1}
  #allocation0 [shape = 'u32[]', space=smem, size = 0x4, offset = 0x4, fixed_abs, tag = 'smem constant byte address 0x4 - core index']
  #allocation1 [shape = 'u32[144,128]{1,0:T(1,128)}', space=vmem, size = 0x12000, scoped, tag = 'internal scratch']
  #allocation2 [shape = 'f32[256,128]{1,0:T(8,128)}', space=vmem, size = 0x20000, scoped, tag = 'scratch operand']
  %s0 = inlined_call_operand.vmem [shape: f32[2,18,18,128], index: 0, kind: input, shape index: {}]
  %s1 = inlined_call_operand.vmem [shape: f32[3,3,128,128], index: 1, kind: input, shape index: {}]
  %s2 = inlined_call_operand.hbm [shape: f32[2,16,16,128], index: 2, kind: output, shape index: {0}]
  %s3 = inlined_call_operand.hbm [shape: f32[2,2,128], index: 3, kind: output, shape index: {1}]
  %4 = xla_tuple %s2, %s3
  %s5 = sld [smem:[#allocation0]]
  $region49: #{tpu_custom_call.1} parent=0
    _
  %s7 = ssub.s32 1, %s5
  %s8 = scalar_select 0, %s7, %s5
  $region1: #{tpu_custom_call.1} parent=0
    #allocation3 [shape = 'u8[262144]{0}', space=vmem, size = 0x40000, scoped, tag = 'output window, operand 0']
    #allocation4 [shape = 's32[2]{0}', space=sflag, size = 0x8, scoped, tag = 'scoped memory for tpu_custom_call.1']
    #allocation5 [shape = 'u8[2048]{0}', space=vmem, size = 0x800, scoped, tag = 'output window, operand 1']
    #allocation6 [shape = 's32[2]{0}', space=sflag, size = 0x8, scoped, tag = 'scoped memory for tpu_custom_call.1']
    %9 = vsyncpa [#allocation4], 0
    %s10 = scalar_lea.sflag [#allocation4], 1
    %11 = vsyncpa %s10, 0
    %12 = vsyncpa [#allocation6], 0
    %s13 = scalar_lea.sflag [#allocation6], 1
    %14 = vsyncpa %s13, 0
    loop: start=0, step=1, limit=4
    $region2: #{tpu_custom_call.1} parent=1 // loop_pre_header
      _
    $region3: #{tpu_custom_call.1} parent=1 // loop_header
      %s16 = sphi 0, %s20
      %p17 = scmp.ge.s32.totalorder %s16, 4
      %s26 = sphi 0, %s28
      %s29 = sphi 0, %s26
      %s30 = sphi 0, %s29
      %s46 = sphi 0, %s30
      %s50 = sphi 0, %s50
      %s52 = sphi 0, %s50
      %s53 = sphi 0, %s52
      %s67 = sphi 0, %s53
      %s73 = sphi 0, %s75
      %s76 = sphi 0, %s73
      %s77 = sphi 0, %s76
      %s93 = sphi 0, %s77
      %s99 = sphi 0, %s101
      %s102 = sphi 0, %s99
      %s103 = sphi 0, %s102
      %s119 = sphi 0, %s103
    $region4: #{tpu_custom_call.1} parent=1 // loop_header_branch
      %19 = sbr.rel (%p17) target = $region8
    $region5: #{tpu_custom_call.1} parent=1 // loop_body
      %s21 = ssub.s32 %s16, 1
      %s22 = ssub.s32 %s16, 2
      %s23 = sadd.s32 %s16, 1
      %s24 = ssub.s32 %s16, %s23
      %p25 = scmp.eq.s32.totalorder %s24, 0
      %s27 = sadd.s32 %s26, 1
      %s28 = scalar_select %p25, %s26, %s27
      %p31 = pneg %p25
      %p32 = scmp.eq.s32.totalorder %s16, 1
      %p33 = por %p31, %p32
      %p34 = scmp.ne.s32.totalorder %s26, %s29
      %p35 = scmp.eq.s32.totalorder %s16, 0
      %p36 = por %p34, %p35
      %p37 = scmp.ne.s32.totalorder %s26, %s29
      %p38 = scmp.eq.s32.totalorder %s21, 1
      %p39 = por %p37, %p38
      %p40 = scmp.ne.s32.totalorder %s29, %s30
      %p41 = scmp.eq.s32.totalorder %s21, 0
      %p42 = por %p40, %p41
      %p43 = scmp.ne.s32.totalorder %s29, %s30
      %p44 = scmp.eq.s32.totalorder %s22, 1
      %p45 = por %p43, %p44
      %p47 = scmp.ne.s32.totalorder %s30, %s46
      %p48 = scmp.eq.s32.totalorder %s22, 0
      %p49 = por %p47, %p48
      %s51 = sadd.s32 %s50, 1
      %p54 = scmp.eq.s32.totalorder %s16, 1
      %p55 = scmp.ne.s32.totalorder %s50, %s52
      %p56 = scmp.eq.s32.totalorder %s16, 0
      %p57 = por %p55, %p56
      %p58 = scmp.ne.s32.totalorder %s50, %s52
      %p59 = scmp.eq.s32.totalorder %s21, 1
      %p60 = por %p58, %p59
      %p61 = scmp.ne.s32.totalorder %s52, %s53
      %p62 = scmp.eq.s32.totalorder %s21, 0
      %p63 = por %p61, %p62
      %p64 = scmp.ne.s32.totalorder %s52, %s53
      %p65 = scmp.eq.s32.totalorder %s22, 1
      %p66 = por %p64, %p65
      %p68 = scmp.ne.s32.totalorder %s53, %s67
      %p69 = scmp.eq.s32.totalorder %s22, 0
      %p70 = por %p68, %p69
      %s71 = ssub.s32 %s16, %s23
      %p72 = scmp.eq.s32.totalorder %s71, 0
      %s74 = sadd.s32 %s73, 1
      %s75 = scalar_select %p72, %s73, %s74
      %p78 = pneg %p72
      %p79 = scmp.eq.s32.totalorder %s16, 1
      %p80 = por %p78, %p79
      %p81 = scmp.ne.s32.totalorder %s73, %s76
      %p82 = scmp.eq.s32.totalorder %s16, 0
      %p83 = por %p81, %p82
      %p84 = scmp.ne.s32.totalorder %s73, %s76
      %p85 = scmp.eq.s32.totalorder %s21, 1
      %p86 = por %p84, %p85
      %p87 = scmp.ne.s32.totalorder %s76, %s77
      %p88 = scmp.eq.s32.totalorder %s21, 0
      %p89 = por %p87, %p88
      %p90 = scmp.ne.s32.totalorder %s76, %s77
      %p91 = scmp.eq.s32.totalorder %s22, 1
      %p92 = por %p90, %p91
      %p94 = scmp.ne.s32.totalorder %s77, %s93
      %p95 = scmp.eq.s32.totalorder %s22, 0
      %p96 = por %p94, %p95
      %s97 = ssub.s32 %s16, %s23
      %p98 = scmp.eq.s32.totalorder %s97, 0
      %s100 = sadd.s32 %s99, 1
      %s101 = scalar_select %p98, %s99, %s100
      %p104 = pneg %p98
      %p105 = scmp.eq.s32.totalorder %s16, 1
      %p106 = por %p104, %p105
      %p107 = scmp.ne.s32.totalorder %s99, %s102
      %p108 = scmp.eq.s32.totalorder %s16, 0
      %p109 = por %p107, %p108
      %p110 = scmp.ne.s32.totalorder %s99, %s102
      %p111 = scmp.eq.s32.totalorder %s21, 1
      %p112 = por %p110, %p111
      %p113 = scmp.ne.s32.totalorder %s102, %s103
      %p114 = scmp.eq.s32.totalorder %s21, 0
      %p115 = por %p113, %p114
      %p116 = scmp.ne.s32.totalorder %s102, %s103
      %p117 = scmp.eq.s32.totalorder %s22, 1
      %p118 = por %p116, %p117
      %p120 = scmp.ne.s32.totalorder %s103, %s119
      %p121 = scmp.eq.s32.totalorder %s22, 0
      %p122 = por %p120, %p121
      %p123 = scmp.le.s32.totalorder 1, %s16
      %p124 = scmp.lt.s32.totalorder %s16, 3
      %p125 = pnand %p123, %p124
      %p126 = pneg %p125
      // Predicated region
      $region9: #{tpu_custom_call.1} parent=5 // pred_check
        _
      $region10: #{tpu_custom_call.1} parent=5 // pred_check_branch
        %128 = sbr.rel (%p125) target = $region12
      $region11: #{tpu_custom_call.1} parent=5 // pred_region
        %s129 = ssub.s32 %s16, 1
        // Predicated region
        $region13: #{tpu_custom_call.1} parent=11 // pred_check
          %p130 = pneg %p63
        $region14: #{tpu_custom_call.1} parent=11 // pred_check_branch
          %132 = sbr.rel (%p130) target = $region16
        $region15: #{tpu_custom_call.1} parent=11 // pred_region
          _
        $region16: #{tpu_custom_call.1} parent=11 // pred_fallthru
          _
      $region12: #{tpu_custom_call.1} parent=5 // pred_fallthru
        _
      %p133 = scmp.lt.s32.totalorder %s16, 2
      // Predicated region
      $region17: #{tpu_custom_call.1} parent=5 // pred_check
        %p134 = pneg %p133
      $region18: #{tpu_custom_call.1} parent=5 // pred_check_branch
        %136 = sbr.rel (%p134) target = $region20
      $region19: #{tpu_custom_call.1} parent=5 // pred_region
        // Predicated region
        $region21: #{tpu_custom_call.1} parent=19 // pred_check
          %p137 = pneg %p36
        $region22: #{tpu_custom_call.1} parent=19 // pred_check_branch
          %139 = sbr.rel (%p137) target = $region24
        $region23: #{tpu_custom_call.1} parent=19 // pred_region
          %p140 = scmp.lt.s32.totalorder %s16, 1
          %s141 = scalar_select %p140, %s16, 1
          %s142 = smul.addr %s141, 54
          %s143 = smul.addr %s142, 8
          %s144 = scalar_lea.vmem %s0, %s143
        $region24: #{tpu_custom_call.1} parent=19 // pred_fallthru
          _
      $region20: #{tpu_custom_call.1} parent=5 // pred_fallthru
        _
      %p145 = scmp.le.s32.totalorder 1, %s16
      %p146 = scmp.lt.s32.totalorder %s16, 3
      %p147 = pnand %p145, %p146
      %p148 = pneg %p147
      // Predicated region
      $region25: #{tpu_custom_call.1} parent=5 // pred_check
        _
      $region26: #{tpu_custom_call.1} parent=5 // pred_check_branch
        %150 = sbr.rel (%p147) target = $region28
      $region27: #{tpu_custom_call.1} parent=5 // pred_region
        %s151 = ssub.s32 %s16, 1
        %p152 = scmp.lt.s32.totalorder %s21, 1
        %s153 = scalar_select %p152, %s21, 1
        %s154 = smul.addr %s153, 54
        %s155 = smul.addr %s154, 8
        %s156 = scalar_lea.vmem %s0, %s155
        %p157 = pneg %p42
        %p158 = pneg %p39
        %p159 = pneg %p63
        %p160 = pneg %p60
        %p161 = pneg %p89
        %p162 = pneg %p86
        %s163 = sand.u32 %s76, 1
        %s164 = scalar_lea.sflag [#allocation4], %s163
        %s165 = sand.u32 %s76, 1
        %s166 = smul.addr %s165, 256
        %s167 = scalar_lea.vmem [#allocation3], %s166
        %p168 = pneg %p115
        %p169 = pneg %p112
        %s170 = sand.u32 %s102, 1
        %s171 = scalar_lea.sflag [#allocation6], %s170
        %s172 = sand.u32 %s102, 1
        %s173 = smul.addr %s172, 2
        %s174 = scalar_lea.vmem [#allocation5], %s173
        %p175 = scmp.lt.s32.totalorder %s21, 1
        %s176 = scalar_select %p175, %s21, 1
        %s177 = smul.addr %s176, 54
        %s178 = smul.addr %s177, 8
        %s179 = scalar_lea.vmem %s0, %s178
        %v180 = vld [vmem:[%s179] sm:$0xff]
        %v181 = vld [vmem:[%s179 + $0x8] sm:$0xff]
        %v182 = vld [vmem:[%s179 + $0x18] sm:$0xff]
        %v183 = vld [vmem:[%s179 + $0x20] sm:$0xff]
        %v184 = vld [vmem:[%s179 + $0x30] sm:$0xff]
        %v185 = vld [vmem:[%s179 + $0x38] sm:$0xff]
        %v186 = vld [vmem:[%s179 + $0x48] sm:$0xff]
        %v187 = vld [vmem:[%s179 + $0x50] sm:$0xff]
        %v188 = vld [vmem:[%s179 + $0x60] sm:$0xff]
        %v189 = vld [vmem:[%s179 + $0x68] sm:$0xff]
        %v190 = vld [vmem:[%s179 + $0x78] sm:$0xff]
        %v191 = vld [vmem:[%s179 + $0x80] sm:$0xff]
        %v192 = vld [vmem:[%s179 + $0x90] sm:$0xff]
        %v193 = vld [vmem:[%s179 + $0x98] sm:$0xff]
        %v194 = vld [vmem:[%s179 + $0xa8] sm:$0xff]
        %v195 = vld [vmem:[%s179 + $0xb0] sm:$0xff]
        %v196 = vld [vmem:[%s179 + $0xc0] sm:$0xff]
        %v197 = vld [vmem:[%s179 + $0xc8] sm:$0xff]
        %v198 = vld [vmem:[%s179 + $0xd8] sm:$0xff]
        %v199 = vld [vmem:[%s179 + $0xe0] sm:$0xff]
        %v200 = vld [vmem:[%s179 + $0xf0] sm:$0xff]
        %v201 = vld [vmem:[%s179 + $0xf8] sm:$0xff]
        %v202 = vld [vmem:[%s179 + $0x108] sm:$0xff]
        %v203 = vld [vmem:[%s179 + $0x110] sm:$0xff]
        %v204 = vld [vmem:[%s179 + $0x120] sm:$0xff]
        %v205 = vld [vmem:[%s179 + $0x128] sm:$0xff]
        %v206 = vld [vmem:[%s179 + $0x138] sm:$0xff]
        %v207 = vld [vmem:[%s179 + $0x140] sm:$0xff]
        %v208 = vld [vmem:[%s179 + $0x150] sm:$0xff]
        %v209 = vld [vmem:[%s179 + $0x158] sm:$0xff]
        %v210 = vld [vmem:[%s179 + $0x168] sm:$0xff]
        %v211 = vld [vmem:[%s179 + $0x170] sm:$0xff]
        %v212 = vld [vmem:[%s1] sm:$0xff]
        %v213 = vld [vmem:[%s1 + $0x8] sm:$0xff]
        %v214 = vld [vmem:[%s1 + $0x10] sm:$0xff]
        %v215 = vld [vmem:[%s1 + $0x18] sm:$0xff]
        %v216 = vld [vmem:[%s1 + $0x20] sm:$0xff]
        %v217 = vld [vmem:[%s1 + $0x28] sm:$0xff]
        %v218 = vld [vmem:[%s1 + $0x30] sm:$0xff]
        %v219 = vld [vmem:[%s1 + $0x38] sm:$0xff]
        %v220 = vld [vmem:[%s1 + $0x40] sm:$0xff]
        %v221 = vld [vmem:[%s1 + $0x48] sm:$0xff]
        %v222 = vld [vmem:[%s1 + $0x50] sm:$0xff]
        %v223 = vld [vmem:[%s1 + $0x58] sm:$0xff]
        %v224 = vld [vmem:[%s1 + $0x60] sm:$0xff]
        %v225 = vld [vmem:[%s1 + $0x68] sm:$0xff]
        %v226 = vld [vmem:[%s1 + $0x70] sm:$0xff]
        %v227 = vld [vmem:[%s1 + $0x78] sm:$0xff]
        %228 = vmatprep.subr.mxu0 0.0
        %229 = vmatpush1.msra.mxu0 %v227
        %230 = vmatprep.subr.mxu0 0.0
        %231 = vmatpush1.msra.mxu0 %v226
        %232 = vmatprep.subr.mxu0 0.0
        %233 = vmatpush1.msra.mxu0 %v225
        %234 = vmatprep.subr.mxu0 0.0
        %235 = vmatpush1.msra.mxu0 %v224
        %236 = vmatprep.subr.mxu0 0.0
        %237 = vmatpush1.msra.mxu0 %v223
        %238 = vmatprep.subr.mxu0 0.0
        %239 = vmatpush1.msra.mxu0 %v222
        %240 = vmatprep.subr.mxu0 0.0
        %241 = vmatpush1.msra.mxu0 %v221
        %242 = vmatprep.subr.mxu0 0.0
        %243 = vmatpush1.msra.mxu0 %v220
        %244 = vmatprep.subr.mxu0 0.0
        %245 = vmatpush1.msra.mxu0 %v219
        %246 = vmatprep.subr.mxu0 0.0
        %247 = vmatpush1.msra.mxu0 %v218
        %248 = vmatprep.subr.mxu0 0.0
        %249 = vmatpush1.msra.mxu0 %v217
        %250 = vmatprep.subr.mxu0 0.0
        %251 = vmatpush1.msra.mxu0 %v216
        %252 = vmatprep.subr.mxu0 0.0
        %253 = vmatpush1.msra.mxu0 %v215
        %254 = vmatprep.subr.mxu0 0.0
        %255 = vmatpush1.msra.mxu0 %v214
        %256 = vmatprep.subr.mxu0 0.0
        %257 = vmatpush1.msra.mxu0 %v213
        %258 = vmatprep.subr.mxu0 0.0
        %259 = vmatpush1.msra.mxu0 %v212
        %260 = vmatprep.subr.mxu0 0.0
        %261 = vmatpush2.msra.mxu0 0.0
        %262 = vmatprep.subr.mxu0 0.0
        %263 = vmatpush2.msra.mxu0 0.0
        %264 = vmatprep.subr.mxu0 0.0
        %265 = vmatpush2.msra.mxu0 0.0
        %266 = vmatprep.subr.mxu0 0.0
        %267 = vmatpush2.msra.mxu0 0.0
        %268 = vmatprep.subr.mxu0 0.0
        %269 = vmatpush2.msra.mxu0 0.0
        %270 = vmatprep.subr.mxu0 0.0
        %271 = vmatpush2.msra.mxu0 0.0
        %272 = vmatprep.subr.mxu0 0.0
        %273 = vmatpush2.msra.mxu0 0.0
        %274 = vmatprep.subr.mxu0 0.0
        %275 = vmatpush2.msra.mxu0 0.0
        %276 = vmatprep.subr.mxu0 0.0
        %277 = vmatpush2.msra.mxu0 0.0
        %278 = vmatprep.subr.mxu0 0.0
        %279 = vmatpush2.msra.mxu0 0.0
        %280 = vmatprep.subr.mxu0 0.0
        %281 = vmatpush2.msra.mxu0 0.0
        %282 = vmatprep.subr.mxu0 0.0
        %283 = vmatpush2.msra.mxu0 0.0
        %284 = vmatprep.subr.mxu0 0.0
        %285 = vmatpush2.msra.mxu0 0.0
        %286 = vmatprep.subr.mxu0 0.0
        %287 = vmatpush2.msra.mxu0 0.0
        %288 = vmatprep.subr.mxu0 0.0
        %289 = vmatpush2.msra.mxu0 0.0
        %290 = vmatprep.subr.mxu0 0.0
        %291 = vmatpush2.msra.mxu0 0.0
        %292 = vmatprep.mubr.f32.mxu0 0.0
        %293 = vmatmul.mubr.f32.gmra.mxu0 %v180
        %v294 = vpop.f32.mrf.mxu0
        %v295 = vadd.f32 0.0, %v294
        %v296 = vpop.f32.mrf.mxu0
        %297 = vmatprep.mubr.f32.mxu0 0.0
        %298 = vmatmul.mubr.f32.gmra.mxu0 %v181
        %v299 = vpop.f32.mrf.mxu0
        %v300 = vadd.f32 0.0, %v299
        %v301 = vpop.f32.mrf.mxu0
        %302 = vmatprep.mubr.f32.mxu0 0.0
        %303 = vmatmul.mubr.f32.gmra.mxu0 %v182
        %v304 = vpop.f32.mrf.mxu0
        %v305 = vadd.f32 0.0, %v304
        %v306 = vpop.f32.mrf.mxu0
        %307 = vmatprep.mubr.f32.mxu0 0.0
        %308 = vmatmul.mubr.f32.gmra.mxu0 %v183
        %v309 = vpop.f32.mrf.mxu0
        %v310 = vadd.f32 0.0, %v309
        %v311 = vpop.f32.mrf.mxu0
        %312 = vmatprep.mubr.f32.mxu0 0.0
        %313 = vmatmul.mubr.f32.gmra.mxu0 %v184
        %v314 = vpop.f32.mrf.mxu0
        %v315 = vadd.f32 0.0, %v314
        %v316 = vpop.f32.mrf.mxu0
        %317 = vmatprep.mubr.f32.mxu0 0.0
        %318 = vmatmul.mubr.f32.gmra.mxu0 %v185
        %v319 = vpop.f32.mrf.mxu0
        %v320 = vadd.f32 0.0, %v319
        %v321 = vpop.f32.mrf.mxu0
        %322 = vmatprep.mubr.f32.mxu0 0.0
        %323 = vmatmul.mubr.f32.gmra.mxu0 %v186
        %v324 = vpop.f32.mrf.mxu0
        %v325 = vadd.f32 0.0, %v324
        %v326 = vpop.f32.mrf.mxu0
        %327 = vmatprep.mubr.f32.mxu0 0.0
        %328 = vmatmul.mubr.f32.gmra.mxu0 %v187
        %v329 = vpop.f32.mrf.mxu0
        %v330 = vadd.f32 0.0, %v329
        %v331 = vpop.f32.mrf.mxu0
        %332 = vmatprep.mubr.f32.mxu0 0.0
        %333 = vmatmul.mubr.f32.gmra.mxu0 %v188
        %v334 = vpop.f32.mrf.mxu0
        %v335 = vadd.f32 0.0, %v334
        %v336 = vpop.f32.mrf.mxu0
        %337 = vmatprep.mubr.f32.mxu0 0.0
        %338 = vmatmul.mubr.f32.gmra.mxu0 %v189
        %v339 = vpop.f32.mrf.mxu0
        %v340 = vadd.f32 0.0, %v339
        %v341 = vpop.f32.mrf.mxu0
        %342 = vmatprep.mubr.f32.mxu0 0.0
        %343 = vmatmul.mubr.f32.gmra.mxu0 %v190
        %v344 = vpop.f32.mrf.mxu0
        %v345 = vadd.f32 0.0, %v344
        %v346 = vpop.f32.mrf.mxu0
        %347 = vmatprep.mubr.f32.mxu0 0.0
        %348 = vmatmul.mubr.f32.gmra.mxu0 %v191
        %v349 = vpop.f32.mrf.mxu0
        %v350 = vadd.f32 0.0, %v349
        %v351 = vpop.f32.mrf.mxu0
        %352 = vmatprep.mubr.f32.mxu0 0.0
        %353 = vmatmul.mubr.f32.gmra.mxu0 %v192
        %v354 = vpop.f32.mrf.mxu0
        %v355 = vadd.f32 0.0, %v354
        %v356 = vpop.f32.mrf.mxu0
        %357 = vmatprep.mubr.f32.mxu0 0.0
        %358 = vmatmul.mubr.f32.gmra.mxu0 %v193
        %v359 = vpop.f32.mrf.mxu0
        %v360 = vadd.f32 0.0, %v359
        %v361 = vpop.f32.mrf.mxu0
        %362 = vmatprep.mubr.f32.mxu0 0.0
        %363 = vmatmul.mubr.f32.gmra.mxu0 %v194
        %v364 = vpop.f32.mrf.mxu0
        %v365 = vadd.f32 0.0, %v364
        %v366 = vpop.f32.mrf.mxu0
        %367 = vmatprep.mubr.f32.mxu0 0.0
        %368 = vmatmul.mubr.f32.gmra.mxu0 %v195
        %v369 = vpop.f32.mrf.mxu0
        %v370 = vadd.f32 0.0, %v369
        %v371 = vpop.f32.mrf.mxu0
        %372 = vmatprep.mubr.f32.mxu0 0.0
        %373 = vmatmul.mubr.f32.gmra.mxu0 %v196
        %v374 = vpop.f32.mrf.mxu0
        %v375 = vadd.f32 0.0, %v374
        %v376 = vpop.f32.mrf.mxu0
        %377 = vmatprep.mubr.f32.mxu0 0.0
        %378 = vmatmul.mubr.f32.gmra.mxu0 %v197
        %v379 = vpop.f32.mrf.mxu0
        %v380 = vadd.f32 0.0, %v379
        %v381 = vpop.f32.mrf.mxu0
        %382 = vmatprep.mubr.f32.mxu0 0.0
        %383 = vmatmul.mubr.f32.gmra.mxu0 %v198
        %v384 = vpop.f32.mrf.mxu0
        %v385 = vadd.f32 0.0, %v384
        %v386 = vpop.f32.mrf.mxu0
        %387 = vmatprep.mubr.f32.mxu0 0.0
        %388 = vmatmul.mubr.f32.gmra.mxu0 %v199
        %v389 = vpop.f32.mrf.mxu0
        %v390 = vadd.f32 0.0, %v389
        %v391 = vpop.f32.mrf.mxu0
        %392 = vmatprep.mubr.f32.mxu0 0.0
        %393 = vmatmul.mubr.f32.gmra.mxu0 %v200
        %v394 = vpop.f32.mrf.mxu0
        %v395 = vadd.f32 0.0, %v394
        %v396 = vpop.f32.mrf.mxu0
        %397 = vmatprep.mubr.f32.mxu0 0.0
        %398 = vmatmul.mubr.f32.gmra.mxu0 %v201
        %v399 = vpop.f32.mrf.mxu0
        %v400 = vadd.f32 0.0, %v399
        %v401 = vpop.f32.mrf.mxu0
        %402 = vmatprep.mubr.f32.mxu0 0.0
        %403 = vmatmul.mubr.f32.gmra.mxu0 %v202
        %v404 = vpop.f32.mrf.mxu0
        %v405 = vadd.f32 0.0, %v404
        %v406 = vpop.f32.mrf.mxu0
        %407 = vmatprep.mubr.f32.mxu0 0.0
        %408 = vmatmul.mubr.f32.gmra.mxu0 %v203
        %v409 = vpop.f32.mrf.mxu0
        %v410 = vadd.f32 0.0, %v409
        %v411 = vpop.f32.mrf.mxu0
        %412 = vmatprep.mubr.f32.mxu0 0.0
        %413 = vmatmul.mubr.f32.gmra.mxu0 %v204
        %v414 = vpop.f32.mrf.mxu0
        %v415 = vadd.f32 0.0, %v414
        %v416 = vpop.f32.mrf.mxu0
        %417 = vmatprep.mubr.f32.mxu0 0.0
        %418 = vmatmul.mubr.f32.gmra.mxu0 %v205
        %v419 = vpop.f32.mrf.mxu0
        %v420 = vadd.f32 0.0, %v419
        %v421 = vpop.f32.mrf.mxu0
        %422 = vmatprep.mubr.f32.mxu0 0.0
        %423 = vmatmul.mubr.f32.gmra.mxu0 %v206
        %v424 = vpop.f32.mrf.mxu0
        %v425 = vadd.f32 0.0, %v424
        %v426 = vpop.f32.mrf.mxu0
        %427 = vmatprep.mubr.f32.mxu0 0.0
        %428 = vmatmul.mubr.f32.gmra.mxu0 %v207
        %v429 = vpop.f32.mrf.mxu0
        %v430 = vadd.f32 0.0, %v429
        %v431 = vpop.f32.mrf.mxu0
        %432 = vmatprep.mubr.f32.mxu0 0.0
        %433 = vmatmul.mubr.f32.gmra.mxu0 %v208
        %v434 = vpop.f32.mrf.mxu0
        %v435 = vadd.f32 0.0, %v434
        %v436 = vpop.f32.mrf.mxu0
        %437 = vmatprep.mubr.f32.mxu0 0.0
        %438 = vmatmul.mubr.f32.gmra.mxu0 %v209
        %v439 = vpop.f32.mrf.mxu0
        %v440 = vadd.f32 0.0, %v439
        %v441 = vpop.f32.mrf.mxu0
        %442 = vmatprep.mubr.f32.mxu0 0.0
        %443 = vmatmul.mubr.f32.gmra.mxu0 %v210
        %v444 = vpop.f32.mrf.mxu0
        %v445 = vadd.f32 0.0, %v444
        %v446 = vpop.f32.mrf.mxu0
        %447 = vmatprep.mubr.f32.mxu0 0.0
        %448 = vmatmul.mubr.f32.gmra.mxu0 %v211
        %v449 = vpop.f32.mrf.mxu0
        %v450 = vadd.f32 0.0, %v449
        %v451 = vpop.f32.mrf.mxu0
        %452 = vdwg.mxu0
        %453 = vst [vmem:[#allocation2] sm:$0xff] %v295
        %454 = vst [vmem:[#allocation2 + $0x8] sm:$0xff] %v300
        %455 = vst [vmem:[#allocation2 + $0x10] sm:$0xff] %v305
        %456 = vst [vmem:[#allocation2 + $0x18] sm:$0xff] %v310
        %457 = vst [vmem:[#allocation2 + $0x20] sm:$0xff] %v315
        %458 = vst [vmem:[#allocation2 + $0x28] sm:$0xff] %v320
        %459 = vst [vmem:[#allocation2 + $0x30] sm:$0xff] %v325
        %460 = vst [vmem:[#allocation2 + $0x38] sm:$0xff] %v330
        %461 = vst [vmem:[#allocation2 + $0x40] sm:$0xff] %v335
        %462 = vst [vmem:[#allocation2 + $0x48] sm:$0xff] %v340
        %463 = vst [vmem:[#allocation2 + $0x50] sm:$0xff] %v345
        %464 = vst [vmem:[#allocation2 + $0x58] sm:$0xff] %v350
        %465 = vst [vmem:[#allocation2 + $0x60] sm:$0xff] %v355
        %466 = vst [vmem:[#allocation2 + $0x68] sm:$0xff] %v360
        %467 = vst [vmem:[#allocation2 + $0x70] sm:$0xff] %v365
        %468 = vst [vmem:[#allocation2 + $0x78] sm:$0xff] %v370
        %469 = vst [vmem:[#allocation2 + $0x80] sm:$0xff] %v375
        %470 = vst [vmem:[#allocation2 + $0x88] sm:$0xff] %v380
        %471 = vst [vmem:[#allocation2 + $0x90] sm:$0xff] %v385
        %472 = vst [vmem:[#allocation2 + $0x98] sm:$0xff] %v390
        %473 = vst [vmem:[#allocation2 + $0xa0] sm:$0xff] %v395
        %474 = vst [vmem:[#allocation2 + $0xa8] sm:$0xff] %v400
        %475 = vst [vmem:[#allocation2 + $0xb0] sm:$0xff] %v405
        %476 = vst [vmem:[#allocation2 + $0xb8] sm:$0xff] %v410
        %477 = vst [vmem:[#allocation2 + $0xc0] sm:$0xff] %v415
        %478 = vst [vmem:[#allocation2 + $0xc8] sm:$0xff] %v420
        %479 = vst [vmem:[#allocation2 + $0xd0] sm:$0xff] %v425
        %480 = vst [vmem:[#allocation2 + $0xd8] sm:$0xff] %v430
        %481 = vst [vmem:[#allocation2 + $0xe0] sm:$0xff] %v435
        %482 = vst [vmem:[#allocation2 + $0xe8] sm:$0xff] %v440
        %483 = vst [vmem:[#allocation2 + $0xf0] sm:$0xff] %v445
        %484 = vst [vmem:[#allocation2 + $0xf8] sm:$0xff] %v450
        %v485 = vld [vmem:[%s179 + $0x1] sm:$0xff]
        %v486 = vld [vmem:[%s179 + $0x9] sm:$0xff]
        %v487 = vld [vmem:[%s179 + $0x19] sm:$0xff]
        %v488 = vld [vmem:[%s179 + $0x21] sm:$0xff]
        %v489 = vld [vmem:[%s179 + $0x31] sm:$0xff]
        %v490 = vld [vmem:[%s179 + $0x39] sm:$0xff]
        %v491 = vld [vmem:[%s179 + $0x49] sm:$0xff]
        %v492 = vld [vmem:[%s179 + $0x51] sm:$0xff]
        %v493 = vld [vmem:[%s179 + $0x61] sm:$0xff]
        %v494 = vld [vmem:[%s179 + $0x69] sm:$0xff]
        %v495 = vld [vmem:[%s179 + $0x79] sm:$0xff]
        %v496 = vld [vmem:[%s179 + $0x81] sm:$0xff]
        %v497 = vld [vmem:[%s179 + $0x91] sm:$0xff]
        %v498 = vld [vmem:[%s179 + $0x99] sm:$0xff]
        %v499 = vld [vmem:[%s179 + $0xa9] sm:$0xff]
        %v500 = vld [vmem:[%s179 + $0xb1] sm:$0xff]
        %v501 = vld [vmem:[%s179 + $0xc1] sm:$0xff]
        %v502 = vld [vmem:[%s179 + $0xc9] sm:$0xff]
        %v503 = vld [vmem:[%s179 + $0xd9] sm:$0xff]
        %v504 = vld [vmem:[%s179 + $0xe1] sm:$0xff]
        %v505 = vld [vmem:[%s179 + $0xf1] sm:$0xff]
        %v506 = vld [vmem:[%s179 + $0xf9] sm:$0xff]
        %v507 = vld [vmem:[%s179 + $0x109] sm:$0xff]
        %v508 = vld [vmem:[%s179 + $0x111] sm:$0xff]
        %v509 = vld [vmem:[%s179 + $0x121] sm:$0xff]
        %v510 = vld [vmem:[%s179 + $0x129] sm:$0xff]
        %v511 = vld [vmem:[%s179 + $0x139] sm:$0xff]
        %v512 = vld [vmem:[%s179 + $0x141] sm:$0xff]
        %v513 = vld [vmem:[%s179 + $0x151] sm:$0xff]
        %v514 = vld [vmem:[%s179 + $0x159] sm:$0xff]
        %v515 = vld [vmem:[%s179 + $0x169] sm:$0xff]
        %v516 = vld [vmem:[%s179 + $0x171] sm:$0xff]
        %s517 = scalar_lea.vmem %s1, 128
        %v518 = vld [vmem:[%s517] sm:$0xff]
        %v519 = vld [vmem:[%s517 + $0x8] sm:$0xff]
        %v520 = vld [vmem:[%s517 + $0x10] sm:$0xff]
        %v521 = vld [vmem:[%s517 + $0x18] sm:$0xff]
        %v522 = vld [vmem:[%s517 + $0x20] sm:$0xff]
        %v523 = vld [vmem:[%s517 + $0x28] sm:$0xff]
        %v524 = vld [vmem:[%s517 + $0x30] sm:$0xff]
        %v525 = vld [vmem:[%s517 + $0x38] sm:$0xff]
        %v526 = vld [vmem:[%s517 + $0x40] sm:$0xff]
        %v527 = vld [vmem:[%s517 + $0x48] sm:$0xff]
        %v528 = vld [vmem:[%s517 + $0x50] sm:$0xff]
        %v529 = vld [vmem:[%s517 + $0x58] sm:$0xff]
        %v530 = vld [vmem:[%s517 + $0x60] sm:$0xff]
        %v531 = vld [vmem:[%s517 + $0x68] sm:$0xff]
        %v532 = vld [vmem:[%s517 + $0x70] sm:$0xff]
        %v533 = vld [vmem:[%s517 + $0x78] sm:$0xff]
        %534 = vmatprep.subr.mxu0 0.0
        %535 = vmatpush1.msra.mxu0 %v533
        %536 = vmatprep.subr.mxu0 0.0
        %537 = vmatpush1.msra.mxu0 %v532
        %538 = vmatprep.subr.mxu0 0.0
        %539 = vmatpush1.msra.mxu0 %v531
        %540 = vmatprep.subr.mxu0 0.0
        %541 = vmatpush1.msra.mxu0 %v530
        %542 = vmatprep.subr.mxu0 0.0
        %543 = vmatpush1.msra.mxu0 %v529
        %544 = vmatprep.subr.mxu0 0.0
        %545 = vmatpush1.msra.mxu0 %v528
        %546 = vmatprep.subr.mxu0 0.0
        %547 = vmatpush1.msra.mxu0 %v527
        %548 = vmatprep.subr.mxu0 0.0
        %549 = vmatpush1.msra.mxu0 %v526
        %550 = vmatprep.subr.mxu0 0.0
        %551 = vmatpush1.msra.mxu0 %v525
        %552 = vmatprep.subr.mxu0 0.0
        %553 = vmatpush1.msra.mxu0 %v524
        %554 = vmatprep.subr.mxu0 0.0
        %555 = vmatpush1.msra.mxu0 %v523
        %556 = vmatprep.subr.mxu0 0.0
        %557 = vmatpush1.msra.mxu0 %v522
        %558 = vmatprep.subr.mxu0 0.0
        %559 = vmatpush1.msra.mxu0 %v521
        %560 = vmatprep.subr.mxu0 0.0
        %561 = vmatpush1.msra.mxu0 %v520
        %562 = vmatprep.subr.mxu0 0.0
        %563 = vmatpush1.msra.mxu0 %v519
        %564 = vmatprep.subr.mxu0 0.0
        %565 = vmatpush1.msra.mxu0 %v518
        %566 = vmatprep.subr.mxu0 0.0
        %567 = vmatpush2.msra.mxu0 0.0
        %568 = vmatprep.subr.mxu0 0.0
        %569 = vmatpush2.msra.mxu0 0.0
        %570 = vmatprep.subr.mxu0 0.0
        %571 = vmatpush2.msra.mxu0 0.0
        %572 = vmatprep.subr.mxu0 0.0
        %573 = vmatpush2.msra.mxu0 0.0
        %574 = vmatprep.subr.mxu0 0.0
        %575 = vmatpush2.msra.mxu0 0.0
        %576 = vmatprep.subr.mxu0 0.0
        %577 = vmatpush2.msra.mxu0 0.0
        %578 = vmatprep.subr.mxu0 0.0
        %579 = vmatpush2.msra.mxu0 0.0
        %580 = vmatprep.subr.mxu0 0.0
        %581 = vmatpush2.msra.mxu0 0.0
        %582 = vmatprep.subr.mxu0 0.0
        %583 = vmatpush2.msra.mxu0 0.0
        %584 = vmatprep.subr.mxu0 0.0
        %585 = vmatpush2.msra.mxu0 0.0
        %586 = vmatprep.subr.mxu0 0.0
        %587 = vmatpush2.msra.mxu0 0.0
        %588 = vmatprep.subr.mxu0 0.0
        %589 = vmatpush2.msra.mxu0 0.0
        %590 = vmatprep.subr.mxu0 0.0
        %591 = vmatpush2.msra.mxu0 0.0
        %592 = vmatprep.subr.mxu0 0.0
        %593 = vmatpush2.msra.mxu0 0.0
        %594 = vmatprep.subr.mxu0 0.0
        %595 = vmatpush2.msra.mxu0 0.0
        %596 = vmatprep.subr.mxu0 0.0
        %597 = vmatpush2.msra.mxu0 0.0
        %598 = vmatprep.mubr.f32.mxu0 0.0
        %599 = vmatmul.mubr.f32.gmra.mxu0 %v485
        %v600 = vpop.f32.mrf.mxu0
        %v601 = vadd.f32 0.0, %v600
        %v602 = vpop.f32.mrf.mxu0
        %603 = vmatprep.mubr.f32.mxu0 0.0
        %604 = vmatmul.mubr.f32.gmra.mxu0 %v486
        %v605 = vpop.f32.mrf.mxu0
        %v606 = vadd.f32 0.0, %v605
        %v607 = vpop.f32.mrf.mxu0
        %608 = vmatprep.mubr.f32.mxu0 0.0
        %609 = vmatmul.mubr.f32.gmra.mxu0 %v487
        %v610 = vpop.f32.mrf.mxu0
        %v611 = vadd.f32 0.0, %v610
        %v612 = vpop.f32.mrf.mxu0
        %613 = vmatprep.mubr.f32.mxu0 0.0
        %614 = vmatmul.mubr.f32.gmra.mxu0 %v488
        %v615 = vpop.f32.mrf.mxu0
        %v616 = vadd.f32 0.0, %v615
        %v617 = vpop.f32.mrf.mxu0
        %618 = vmatprep.mubr.f32.mxu0 0.0
        %619 = vmatmul.mubr.f32.gmra.mxu0 %v489
        %v620 = vpop.f32.mrf.mxu0
        %v621 = vadd.f32 0.0, %v620
        %v622 = vpop.f32.mrf.mxu0
        %623 = vmatprep.mubr.f32.mxu0 0.0
        %624 = vmatmul.mubr.f32.gmra.mxu0 %v490
        %v625 = vpop.f32.mrf.mxu0
        %v626 = vadd.f32 0.0, %v625
        %v627 = vpop.f32.mrf.mxu0
        %628 = vmatprep.mubr.f32.mxu0 0.0
        %629 = vmatmul.mubr.f32.gmra.mxu0 %v491
        %v630 = vpop.f32.mrf.mxu0
        %v631 = vadd.f32 0.0, %v630
        %v632 = vpop.f32.mrf.mxu0
        %633 = vmatprep.mubr.f32.mxu0 0.0
        %634 = vmatmul.mubr.f32.gmra.mxu0 %v492
        %v635 = vpop.f32.mrf.mxu0
        %v636 = vadd.f32 0.0, %v635
        %v637 = vpop.f32.mrf.mxu0
        %638 = vmatprep.mubr.f32.mxu0 0.0
        %639 = vmatmul.mubr.f32.gmra.mxu0 %v493
        %v640 = vpop.f32.mrf.mxu0
        %v641 = vadd.f32 0.0, %v640
        %v642 = vpop.f32.mrf.mxu0
        %643 = vmatprep.mubr.f32.mxu0 0.0
        %644 = vmatmul.mubr.f32.gmra.mxu0 %v494
        %v645 = vpop.f32.mrf.mxu0
        %v646 = vadd.f32 0.0, %v645
        %v647 = vpop.f32.mrf.mxu0
        %648 = vmatprep.mubr.f32.mxu0 0.0
        %649 = vmatmul.mubr.f32.gmra.mxu0 %v495
        %v650 = vpop.f32.mrf.mxu0
        %v651 = vadd.f32 0.0, %v650
        %v652 = vpop.f32.mrf.mxu0
        %653 = vmatprep.mubr.f32.mxu0 0.0
        %654 = vmatmul.mubr.f32.gmra.mxu0 %v496
        %v655 = vpop.f32.mrf.mxu0
        %v656 = vadd.f32 0.0, %v655
        %v657 = vpop.f32.mrf.mxu0
        %658 = vmatprep.mubr.f32.mxu0 0.0
        %659 = vmatmul.mubr.f32.gmra.mxu0 %v497
        %v660 = vpop.f32.mrf.mxu0
        %v661 = vadd.f32 0.0, %v660
        %v662 = vpop.f32.mrf.mxu0
        %663 = vmatprep.mubr.f32.mxu0 0.0
        %664 = vmatmul.mubr.f32.gmra.mxu0 %v498
        %v665 = vpop.f32.mrf.mxu0
        %v666 = vadd.f32 0.0, %v665
        %v667 = vpop.f32.mrf.mxu0
        %668 = vmatprep.mubr.f32.mxu0 0.0
        %669 = vmatmul.mubr.f32.gmra.mxu0 %v499
        %v670 = vpop.f32.mrf.mxu0
        %v671 = vadd.f32 0.0, %v670
        %v672 = vpop.f32.mrf.mxu0
        %673 = vmatprep.mubr.f32.mxu0 0.0
        %674 = vmatmul.mubr.f32.gmra.mxu0 %v500
        %v675 = vpop.f32.mrf.mxu0
        %v676 = vadd.f32 0.0, %v675
        %v677 = vpop.f32.mrf.mxu0
        %678 = vmatprep.mubr.f32.mxu0 0.0
        %679 = vmatmul.mubr.f32.gmra.mxu0 %v501
        %v680 = vpop.f32.mrf.mxu0
        %v681 = vadd.f32 0.0, %v680
        %v682 = vpop.f32.mrf.mxu0
        %683 = vmatprep.mubr.f32.mxu0 0.0
        %684 = vmatmul.mubr.f32.gmra.mxu0 %v502
        %v685 = vpop.f32.mrf.mxu0
        %v686 = vadd.f32 0.0, %v685
        %v687 = vpop.f32.mrf.mxu0
        %688 = vmatprep.mubr.f32.mxu0 0.0
        %689 = vmatmul.mubr.f32.gmra.mxu0 %v503
        %v690 = vpop.f32.mrf.mxu0
        %v691 = vadd.f32 0.0, %v690
        %v692 = vpop.f32.mrf.mxu0
        %693 = vmatprep.mubr.f32.mxu0 0.0
        %694 = vmatmul.mubr.f32.gmra.mxu0 %v504
        %v695 = vpop.f32.mrf.mxu0
        %v696 = vadd.f32 0.0, %v695
        %v697 = vpop.f32.mrf.mxu0
        %698 = vmatprep.mubr.f32.mxu0 0.0
        %699 = vmatmul.mubr.f32.gmra.mxu0 %v505
        %v700 = vpop.f32.mrf.mxu0
        %v701 = vadd.f32 0.0, %v700
        %v702 = vpop.f32.mrf.mxu0
        %703 = vmatprep.mubr.f32.mxu0 0.0
        %704 = vmatmul.mubr.f32.gmra.mxu0 %v506
        %v705 = vpop.f32.mrf.mxu0
        %v706 = vadd.f32 0.0, %v705
        %v707 = vpop.f32.mrf.mxu0
        %708 = vmatprep.mubr.f32.mxu0 0.0
        %709 = vmatmul.mubr.f32.gmra.mxu0 %v507
        %v710 = vpop.f32.mrf.mxu0
        %v711 = vadd.f32 0.0, %v710
        %v712 = vpop.f32.mrf.mxu0
        %713 = vmatprep.mubr.f32.mxu0 0.0
        %714 = vmatmul.mubr.f32.gmra.mxu0 %v508
        %v715 = vpop.f32.mrf.mxu0
        %v716 = vadd.f32 0.0, %v715
        %v717 = vpop.f32.mrf.mxu0
        %718 = vmatprep.mubr.f32.mxu0 0.0
        %719 = vmatmul.mubr.f32.gmra.mxu0 %v509
        %v720 = vpop.f32.mrf.mxu0
        %v721 = vadd.f32 0.0, %v720
        %v722 = vpop.f32.mrf.mxu0
        %723 = vmatprep.mubr.f32.mxu0 0.0
        %724 = vmatmul.mubr.f32.gmra.mxu0 %v510
        %v725 = vpop.f32.mrf.mxu0
        %v726 = vadd.f32 0.0, %v725
        %v727 = vpop.f32.mrf.mxu0
        %728 = vmatprep.mubr.f32.mxu0 0.0
        %729 = vmatmul.mubr.f32.gmra.mxu0 %v511
        %v730 = vpop.f32.mrf.mxu0
        %v731 = vadd.f32 0.0, %v730
        %v732 = vpop.f32.mrf.mxu0
        %733 = vmatprep.mubr.f32.mxu0 0.0
        %734 = vmatmul.mubr.f32.gmra.mxu0 %v512
        %v735 = vpop.f32.mrf.mxu0
        %v736 = vadd.f32 0.0, %v735
        %v737 = vpop.f32.mrf.mxu0
        %738 = vmatprep.mubr.f32.mxu0 0.0
        %739 = vmatmul.mubr.f32.gmra.mxu0 %v513
        %v740 = vpop.f32.mrf.mxu0
        %v741 = vadd.f32 0.0, %v740
        %v742 = vpop.f32.mrf.mxu0
        %743 = vmatprep.mubr.f32.mxu0 0.0
        %744 = vmatmul.mubr.f32.gmra.mxu0 %v514
        %v745 = vpop.f32.mrf.mxu0
        %v746 = vadd.f32 0.0, %v745
        %v747 = vpop.f32.mrf.mxu0
        %748 = vmatprep.mubr.f32.mxu0 0.0
        %749 = vmatmul.mubr.f32.gmra.mxu0 %v515
        %v750 = vpop.f32.mrf.mxu0
        %v751 = vadd.f32 0.0, %v750
        %v752 = vpop.f32.mrf.mxu0
        %753 = vmatprep.mubr.f32.mxu0 0.0
        %754 = vmatmul.mubr.f32.gmra.mxu0 %v516
        %v755 = vpop.f32.mrf.mxu0
        %v756 = vadd.f32 0.0, %v755
        %v757 = vpop.f32.mrf.mxu0
        %758 = vdwg.mxu0
        %v759 = vld [vmem:[#allocation2] sm:$0xff]
        %v760 = vld [vmem:[#allocation2 + $0x8] sm:$0xff]
        %v761 = vld [vmem:[#allocation2 + $0x10] sm:$0xff]
        %v762 = vld [vmem:[#allocation2 + $0x18] sm:$0xff]
        %v763 = vld [vmem:[#allocation2 + $0x20] sm:$0xff]
        %v764 = vld [vmem:[#allocation2 + $0x28] sm:$0xff]
        %v765 = vld [vmem:[#allocation2 + $0x30] sm:$0xff]
        %v766 = vld [vmem:[#allocation2 + $0x38] sm:$0xff]
        %v767 = vld [vmem:[#allocation2 + $0x40] sm:$0xff]
        %v768 = vld [vmem:[#allocation2 + $0x48] sm:$0xff]
        %v769 = vld [vmem:[#allocation2 + $0x50] sm:$0xff]
        %v770 = vld [vmem:[#allocation2 + $0x58] sm:$0xff]
        %v771 = vld [vmem:[#allocation2 + $0x60] sm:$0xff]
        %v772 = vld [vmem:[#allocation2 + $0x68] sm:$0xff]
        %v773 = vld [vmem:[#allocation2 + $0x70] sm:$0xff]
        %v774 = vld [vmem:[#allocation2 + $0x78] sm:$0xff]
        %v775 = vld [vmem:[#allocation2 + $0x80] sm:$0xff]
        %v776 = vld [vmem:[#allocation2 + $0x88] sm:$0xff]
        %v777 = vld [vmem:[#allocation2 + $0x90] sm:$0xff]
        %v778 = vld [vmem:[#allocation2 + $0x98] sm:$0xff]
        %v779 = vld [vmem:[#allocation2 + $0xa0] sm:$0xff]
        %v780 = vld [vmem:[#allocation2 + $0xa8] sm:$0xff]
        %v781 = vld [vmem:[#allocation2 + $0xb0] sm:$0xff]
        %v782 = vld [vmem:[#allocation2 + $0xb8] sm:$0xff]
        %v783 = vld [vmem:[#allocation2 + $0xc0] sm:$0xff]
        %v784 = vld [vmem:[#allocation2 + $0xc8] sm:$0xff]
        %v785 = vld [vmem:[#allocation2 + $0xd0] sm:$0xff]
        %v786 = vld [vmem:[#allocation2 + $0xd8] sm:$0xff]
        %v787 = vld [vmem:[#allocation2 + $0xe0] sm:$0xff]
        %v788 = vld [vmem:[#allocation2 + $0xe8] sm:$0xff]
        %v789 = vld [vmem:[#allocation2 + $0xf0] sm:$0xff]
        %v790 = vld [vmem:[#allocation2 + $0xf8] sm:$0xff]
        %v791 = vadd.f32 %v759, %v601
        %v792 = vadd.f32 %v760, %v606
        %v793 = vadd.f32 %v761, %v611
        %v794 = vadd.f32 %v762, %v616
        %v795 = vadd.f32 %v763, %v621
        %v796 = vadd.f32 %v764, %v626
        %v797 = vadd.f32 %v765, %v631
        %v798 = vadd.f32 %v766, %v636
        %v799 = vadd.f32 %v767, %v641
        %v800 = vadd.f32 %v768, %v646
        %v801 = vadd.f32 %v769, %v651
        %v802 = vadd.f32 %v770, %v656
        %v803 = vadd.f32 %v771, %v661
        %v804 = vadd.f32 %v772, %v666
        %v805 = vadd.f32 %v773, %v671
        %v806 = vadd.f32 %v774, %v676
        %v807 = vadd.f32 %v775, %v681
        %v808 = vadd.f32 %v776, %v686
        %v809 = vadd.f32 %v777, %v691
        %v810 = vadd.f32 %v778, %v696
        %v811 = vadd.f32 %v779, %v701
        %v812 = vadd.f32 %v780, %v706
        %v813 = vadd.f32 %v781, %v711
        %v814 = vadd.f32 %v782, %v716
        %v815 = vadd.f32 %v783, %v721
        %v816 = vadd.f32 %v784, %v726
        %v817 = vadd.f32 %v785, %v731
        %v818 = vadd.f32 %v786, %v736
        %v819 = vadd.f32 %v787, %v741
        %v820 = vadd.f32 %v788, %v746
        %v821 = vadd.f32 %v789, %v751
        %v822 = vadd.f32 %v790, %v756
        %823 = vst [vmem:[#allocation2] sm:$0xff] %v791
        %824 = vst [vmem:[#allocation2 + $0x8] sm:$0xff] %v792
        %825 = vst [vmem:[#allocation2 + $0x10] sm:$0xff] %v793
        %826 = vst [vmem:[#allocation2 + $0x18] sm:$0xff] %v794
        %827 = vst [vmem:[#allocation2 + $0x20] sm:$0xff] %v795
        %828 = vst [vmem:[#allocation2 + $0x28] sm:$0xff] %v796
        %829 = vst [vmem:[#allocation2 + $0x30] sm:$0xff] %v797
        %830 = vst [vmem:[#allocation2 + $0x38] sm:$0xff] %v798
        %831 = vst [vmem:[#allocation2 + $0x40] sm:$0xff] %v799
        %832 = vst [vmem:[#allocation2 + $0x48] sm:$0xff] %v800
        %833 = vst [vmem:[#allocation2 + $0x50] sm:$0xff] %v801
        %834 = vst [vmem:[#allocation2 + $0x58] sm:$0xff] %v802
        %835 = vst [vmem:[#allocation2 + $0x60] sm:$0xff] %v803
        %836 = vst [vmem:[#allocation2 + $0x68] sm:$0xff] %v804
        %837 = vst [vmem:[#allocation2 + $0x70] sm:$0xff] %v805
        %838 = vst [vmem:[#allocation2 + $0x78] sm:$0xff] %v806
        %839 = vst [vmem:[#allocation2 + $0x80] sm:$0xff] %v807
        %840 = vst [vmem:[#allocation2 + $0x88] sm:$0xff] %v808
        %841 = vst [vmem:[#allocation2 + $0x90] sm:$0xff] %v809
        %842 = vst [vmem:[#allocation2 + $0x98] sm:$0xff] %v810
        %843 = vst [vmem:[#allocation2 + $0xa0] sm:$0xff] %v811
        %844 = vst [vmem:[#allocation2 + $0xa8] sm:$0xff] %v812
        %845 = vst [vmem:[#allocation2 + $0xb0] sm:$0xff] %v813
        %846 = vst [vmem:[#allocation2 + $0xb8] sm:$0xff] %v814
        %847 = vst [vmem:[#allocation2 + $0xc0] sm:$0xff] %v815
        %848 = vst [vmem:[#allocation2 + $0xc8] sm:$0xff] %v816
        %849 = vst [vmem:[#allocation2 + $0xd0] sm:$0xff] %v817
        %850 = vst [vmem:[#allocation2 + $0xd8] sm:$0xff] %v818
        %851 = vst [vmem:[#allocation2 + $0xe0] sm:$0xff] %v819
        %852 = vst [vmem:[#allocation2 + $0xe8] sm:$0xff] %v820
        %853 = vst [vmem:[#allocation2 + $0xf0] sm:$0xff] %v821
        %854 = vst [vmem:[#allocation2 + $0xf8] sm:$0xff] %v822
        %v855 = vld [vmem:[%s179 + $0x2] sm:$0xff]
        %v856 = vld [vmem:[%s179 + $0xa] sm:$0xff]
        %v857 = vld [vmem:[%s179 + $0x1a] sm:$0xff]
        %v858 = vld [vmem:[%s179 + $0x22] sm:$0xff]
        %v859 = vld [vmem:[%s179 + $0x32] sm:$0xff]
        %v860 = vld [vmem:[%s179 + $0x3a] sm:$0xff]
        %v861 = vld [vmem:[%s179 + $0x4a] sm:$0xff]
        %v862 = vld [vmem:[%s179 + $0x52] sm:$0xff]
        %v863 = vld [vmem:[%s179 + $0x62] sm:$0xff]
        %v864 = vld [vmem:[%s179 + $0x6a] sm:$0xff]
        %v865 = vld [vmem:[%s179 + $0x7a] sm:$0xff]
        %v866 = vld [vmem:[%s179 + $0x82] sm:$0xff]
        %v867 = vld [vmem:[%s179 + $0x92] sm:$0xff]
        %v868 = vld [vmem:[%s179 + $0x9a] sm:$0xff]
        %v869 = vld [vmem:[%s179 + $0xaa] sm:$0xff]
        %v870 = vld [vmem:[%s179 + $0xb2] sm:$0xff]
        %v871 = vld [vmem:[%s179 + $0xc2] sm:$0xff]
        %v872 = vld [vmem:[%s179 + $0xca] sm:$0xff]
        %v873 = vld [vmem:[%s179 + $0xda] sm:$0xff]
        %v874 = vld [vmem:[%s179 + $0xe2] sm:$0xff]
        %v875 = vld [vmem:[%s179 + $0xf2] sm:$0xff]
        %v876 = vld [vmem:[%s179 + $0xfa] sm:$0xff]
        %v877 = vld [vmem:[%s179 + $0x10a] sm:$0xff]
        %v878 = vld [vmem:[%s179 + $0x112] sm:$0xff]
        %v879 = vld [vmem:[%s179 + $0x122] sm:$0xff]
        %v880 = vld [vmem:[%s179 + $0x12a] sm:$0xff]
        %v881 = vld [vmem:[%s179 + $0x13a] sm:$0xff]
        %v882 = vld [vmem:[%s179 + $0x142] sm:$0xff]
        %v883 = vld [vmem:[%s179 + $0x152] sm:$0xff]
        %v884 = vld [vmem:[%s179 + $0x15a] sm:$0xff]
        %v885 = vld [vmem:[%s179 + $0x16a] sm:$0xff]
        %v886 = vld [vmem:[%s179 + $0x172] sm:$0xff]
        %s887 = scalar_lea.vmem %s1, 256
        %v888 = vld [vmem:[%s887] sm:$0xff]
        %v889 = vld [vmem:[%s887 + $0x8] sm:$0xff]
        %v890 = vld [vmem:[%s887 + $0x10] sm:$0xff]
        %v891 = vld [vmem:[%s887 + $0x18] sm:$0xff]
        %v892 = vld [vmem:[%s887 + $0x20] sm:$0xff]
        %v893 = vld [vmem:[%s887 + $0x28] sm:$0xff]
        %v894 = vld [vmem:[%s887 + $0x30] sm:$0xff]
        %v895 = vld [vmem:[%s887 + $0x38] sm:$0xff]
        %v896 = vld [vmem:[%s887 + $0x40] sm:$0xff]
        %v897 = vld [vmem:[%s887 + $0x48] sm:$0xff]
        %v898 = vld [vmem:[%s887 + $0x50] sm:$0xff]
        %v899 = vld [vmem:[%s887 + $0x58] sm:$0xff]
        %v900 = vld [vmem:[%s887 + $0x60] sm:$0xff]
        %v901 = vld [vmem:[%s887 + $0x68] sm:$0xff]
        %v902 = vld [vmem:[%s887 + $0x70] sm:$0xff]
        %v903 = vld [vmem:[%s887 + $0x78] sm:$0xff]
        %904 = vmatprep.subr.mxu0 0.0
        %905 = vmatpush1.msra.mxu0 %v903
        %906 = vmatprep.subr.mxu0 0.0
        %907 = vmatpush1.msra.mxu0 %v902
        %908 = vmatprep.subr.mxu0 0.0
        %909 = vmatpush1.msra.mxu0 %v901
        %910 = vmatprep.subr.mxu0 0.0
        %911 = vmatpush1.msra.mxu0 %v900
        %912 = vmatprep.subr.mxu0 0.0
        %913 = vmatpush1.msra.mxu0 %v899
        %914 = vmatprep.subr.mxu0 0.0
        %915 = vmatpush1.msra.mxu0 %v898
        %916 = vmatprep.subr.mxu0 0.0
        %917 = vmatpush1.msra.mxu0 %v897
        %918 = vmatprep.subr.mxu0 0.0
        %919 = vmatpush1.msra.mxu0 %v896
        %920 = vmatprep.subr.mxu0 0.0
        %921 = vmatpush1.msra.mxu0 %v895
        %922 = vmatprep.subr.mxu0 0.0
        %923 = vmatpush1.msra.mxu0 %v894
        %924 = vmatprep.subr.mxu0 0.0
        %925 = vmatpush1.msra.mxu0 %v893
        %926 = vmatprep.subr.mxu0 0.0
        %927 = vmatpush1.msra.mxu0 %v892
        %928 = vmatprep.subr.mxu0 0.0
        %929 = vmatpush1.msra.mxu0 %v891
        %930 = vmatprep.subr.mxu0 0.0
        %931 = vmatpush1.msra.mxu0 %v890
        %932 = vmatprep.subr.mxu0 0.0
        %933 = vmatpush1.msra.mxu0 %v889
        %934 = vmatprep.subr.mxu0 0.0
        %935 = vmatpush1.msra.mxu0 %v888
        %936 = vmatprep.subr.mxu0 0.0
        %937 = vmatpush2.msra.mxu0 0.0
        %938 = vmatprep.subr.mxu0 0.0
        %939 = vmatpush2.msra.mxu0 0.0
        %940 = vmatprep.subr.mxu0 0.0
        %941 = vmatpush2.msra.mxu0 0.0
        %942 = vmatprep.subr.mxu0 0.0
        %943 = vmatpush2.msra.mxu0 0.0
        %944 = vmatprep.subr.mxu0 0.0
        %945 = vmatpush2.msra.mxu0 0.0
        %946 = vmatprep.subr.mxu0 0.0
        %947 = vmatpush2.msra.mxu0 0.0
        %948 = vmatprep.subr.mxu0 0.0
        %949 = vmatpush2.msra.mxu0 0.0
        %950 = vmatprep.subr.mxu0 0.0
        %951 = vmatpush2.msra.mxu0 0.0
        %952 = vmatprep.subr.mxu0 0.0
        %953 = vmatpush2.msra.mxu0 0.0
        %954 = vmatprep.subr.mxu0 0.0
        %955 = vmatpush2.msra.mxu0 0.0
        %956 = vmatprep.subr.mxu0 0.0
        %957 = vmatpush2.msra.mxu0 0.0
        %958 = vmatprep.subr.mxu0 0.0
        %959 = vmatpush2.msra.mxu0 0.0
        %960 = vmatprep.subr.mxu0 0.0
        %961 = vmatpush2.msra.mxu0 0.0
        %962 = vmatprep.subr.mxu0 0.0
        %963 = vmatpush2.msra.mxu0 0.0
        %964 = vmatprep.subr.mxu0 0.0
        %965 = vmatpush2.msra.mxu0 0.0
        %966 = vmatprep.subr.mxu0 0.0
        %967 = vmatpush2.msra.mxu0 0.0
        %968 = vmatprep.mubr.f32.mxu0 0.0
        %969 = vmatmul.mubr.f32.gmra.mxu0 %v855
        %v970 = vpop.f32.mrf.mxu0
        %v971 = vadd.f32 0.0, %v970
        %v972 = vpop.f32.mrf.mxu0
        %973 = vmatprep.mubr.f32.mxu0 0.0
        %974 = vmatmul.mubr.f32.gmra.mxu0 %v856
        %v975 = vpop.f32.mrf.mxu0
        %v976 = vadd.f32 0.0, %v975
        %v977 = vpop.f32.mrf.mxu0
        %978 = vmatprep.mubr.f32.mxu0 0.0
        %979 = vmatmul.mubr.f32.gmra.mxu0 %v857
        %v980 = vpop.f32.mrf.mxu0
        %v981 = vadd.f32 0.0, %v980
        %v982 = vpop.f32.mrf.mxu0
        %983 = vmatprep.mubr.f32.mxu0 0.0
        %984 = vmatmul.mubr.f32.gmra.mxu0 %v858
        %v985 = vpop.f32.mrf.mxu0
        %v986 = vadd.f32 0.0, %v985
        %v987 = vpop.f32.mrf.mxu0
        %988 = vmatprep.mubr.f32.mxu0 0.0
        %989 = vmatmul.mubr.f32.gmra.mxu0 %v859
        %v990 = vpop.f32.mrf.mxu0
        %v991 = vadd.f32 0.0, %v990
        %v992 = vpop.f32.mrf.mxu0
        %993 = vmatprep.mubr.f32.mxu0 0.0
        %994 = vmatmul.mubr.f32.gmra.mxu0 %v860
        %v995 = vpop.f32.mrf.mxu0
        %v996 = vadd.f32 0.0, %v995
        %v997 = vpop.f32.mrf.mxu0
        %998 = vmatprep.mubr.f32.mxu0 0.0
        %999 = vmatmul.mubr.f32.gmra.mxu0 %v861
        %v1000 = vpop.f32.mrf.mxu0
        %v1001 = vadd.f32 0.0, %v1000
        %v1002 = vpop.f32.mrf.mxu0
        %1003 = vmatprep.mubr.f32.mxu0 0.0
        %1004 = vmatmul.mubr.f32.gmra.mxu0 %v862
        %v1005 = vpop.f32.mrf.mxu0
        %v1006 = vadd.f32 0.0, %v1005
        %v1007 = vpop.f32.mrf.mxu0
        %1008 = vmatprep.mubr.f32.mxu0 0.0
        %1009 = vmatmul.mubr.f32.gmra.mxu0 %v863
        %v1010 = vpop.f32.mrf.mxu0
        %v1011 = vadd.f32 0.0, %v1010
        %v1012 = vpop.f32.mrf.mxu0
        %1013 = vmatprep.mubr.f32.mxu0 0.0
        %1014 = vmatmul.mubr.f32.gmra.mxu0 %v864
        %v1015 = vpop.f32.mrf.mxu0
        %v1016 = vadd.f32 0.0, %v1015
        %v1017 = vpop.f32.mrf.mxu0
        %1018 = vmatprep.mubr.f32.mxu0 0.0
        %1019 = vmatmul.mubr.f32.gmra.mxu0 %v865
        %v1020 = vpop.f32.mrf.mxu0
        %v1021 = vadd.f32 0.0, %v1020
        %v1022 = vpop.f32.mrf.mxu0
        %1023 = vmatprep.mubr.f32.mxu0 0.0
        %1024 = vmatmul.mubr.f32.gmra.mxu0 %v866
        %v1025 = vpop.f32.mrf.mxu0
        %v1026 = vadd.f32 0.0, %v1025
        %v1027 = vpop.f32.mrf.mxu0
        %1028 = vmatprep.mubr.f32.mxu0 0.0
        %1029 = vmatmul.mubr.f32.gmra.mxu0 %v867
        %v1030 = vpop.f32.mrf.mxu0
        %v1031 = vadd.f32 0.0, %v1030
        %v1032 = vpop.f32.mrf.mxu0
        %1033 = vmatprep.mubr.f32.mxu0 0.0
        %1034 = vmatmul.mubr.f32.gmra.mxu0 %v868
        %v1035 = vpop.f32.mrf.mxu0
        %v1036 = vadd.f32 0.0, %v1035
        %v1037 = vpop.f32.mrf.mxu0
        %1038 = vmatprep.mubr.f32.mxu0 0.0
        %1039 = vmatmul.mubr.f32.gmra.mxu0 %v869
        %v1040 = vpop.f32.mrf.mxu0
        %v1041 = vadd.f32 0.0, %v1040
        %v1042 = vpop.f32.mrf.mxu0
        %1043 = vmatprep.mubr.f32.mxu0 0.0
        %1044 = vmatmul.mubr.f32.gmra.mxu0 %v870
        %v1045 = vpop.f32.mrf.mxu0
        %v1046 = vadd.f32 0.0, %v1045
        %v1047 = vpop.f32.mrf.mxu0
        %1048 = vmatprep.mubr.f32.mxu0 0.0
        %1049 = vmatmul.mubr.f32.gmra.mxu0 %v871
        %v1050 = vpop.f32.mrf.mxu0
        %v1051 = vadd.f32 0.0, %v1050
        %v1052 = vpop.f32.mrf.mxu0
        %1053 = vmatprep.mubr.f32.mxu0 0.0
        %1054 = vmatmul.mubr.f32.gmra.mxu0 %v872
        %v1055 = vpop.f32.mrf.mxu0
        %v1056 = vadd.f32 0.0, %v1055
        %v1057 = vpop.f32.mrf.mxu0
        %1058 = vmatprep.mubr.f32.mxu0 0.0
        %1059 = vmatmul.mubr.f32.gmra.mxu0 %v873
        %v1060 = vpop.f32.mrf.mxu0
        %v1061 = vadd.f32 0.0, %v1060
        %v1062 = vpop.f32.mrf.mxu0
        %1063 = vmatprep.mubr.f32.mxu0 0.0
        %1064 = vmatmul.mubr.f32.gmra.mxu0 %v874
        %v1065 = vpop.f32.mrf.mxu0
        %v1066 = vadd.f32 0.0, %v1065
        %v1067 = vpop.f32.mrf.mxu0
        %1068 = vmatprep.mubr.f32.mxu0 0.0
        %1069 = vmatmul.mubr.f32.gmra.mxu0 %v875
        %v1070 = vpop.f32.mrf.mxu0
        %v1071 = vadd.f32 0.0, %v1070
        %v1072 = vpop.f32.mrf.mxu0
        %1073 = vmatprep.mubr.f32.mxu0 0.0
        %1074 = vmatmul.mubr.f32.gmra.mxu0 %v876
        %v1075 = vpop.f32.mrf.mxu0
        %v1076 = vadd.f32 0.0, %v1075
        %v1077 = vpop.f32.mrf.mxu0
        %1078 = vmatprep.mubr.f32.mxu0 0.0
        %1079 = vmatmul.mubr.f32.gmra.mxu0 %v877
        %v1080 = vpop.f32.mrf.mxu0
        %v1081 = vadd.f32 0.0, %v1080
        %v1082 = vpop.f32.mrf.mxu0
        %1083 = vmatprep.mubr.f32.mxu0 0.0
        %1084 = vmatmul.mubr.f32.gmra.mxu0 %v878
        %v1085 = vpop.f32.mrf.mxu0
        %v1086 = vadd.f32 0.0, %v1085
        %v1087 = vpop.f32.mrf.mxu0
        %1088 = vmatprep.mubr.f32.mxu0 0.0
        %1089 = vmatmul.mubr.f32.gmra.mxu0 %v879
        %v1090 = vpop.f32.mrf.mxu0
        %v1091 = vadd.f32 0.0, %v1090
        %v1092 = vpop.f32.mrf.mxu0
        %1093 = vmatprep.mubr.f32.mxu0 0.0
        %1094 = vmatmul.mubr.f32.gmra.mxu0 %v880
        %v1095 = vpop.f32.mrf.mxu0
        %v1096 = vadd.f32 0.0, %v1095
        %v1097 = vpop.f32.mrf.mxu0
        %1098 = vmatprep.mubr.f32.mxu0 0.0
        %1099 = vmatmul.mubr.f32.gmra.mxu0 %v881
        %v1100 = vpop.f32.mrf.mxu0
        %v1101 = vadd.f32 0.0, %v1100
        %v1102 = vpop.f32.mrf.mxu0
        %1103 = vmatprep.mubr.f32.mxu0 0.0
        %1104 = vmatmul.mubr.f32.gmra.mxu0 %v882
        %v1105 = vpop.f32.mrf.mxu0
        %v1106 = vadd.f32 0.0, %v1105
        %v1107 = vpop.f32.mrf.mxu0
        %1108 = vmatprep.mubr.f32.mxu0 0.0
        %1109 = vmatmul.mubr.f32.gmra.mxu0 %v883
        %v1110 = vpop.f32.mrf.mxu0
        %v1111 = vadd.f32 0.0, %v1110
        %v1112 = vpop.f32.mrf.mxu0
        %1113 = vmatprep.mubr.f32.mxu0 0.0
        %1114 = vmatmul.mubr.f32.gmra.mxu0 %v884
        %v1115 = vpop.f32.mrf.mxu0
        %v1116 = vadd.f32 0.0, %v1115
        %v1117 = vpop.f32.mrf.mxu0
        %1118 = vmatprep.mubr.f32.mxu0 0.0
        %1119 = vmatmul.mubr.f32.gmra.mxu0 %v885
        %v1120 = vpop.f32.mrf.mxu0
        %v1121 = vadd.f32 0.0, %v1120
        %v1122 = vpop.f32.mrf.mxu0
        %1123 = vmatprep.mubr.f32.mxu0 0.0
        %1124 = vmatmul.mubr.f32.gmra.mxu0 %v886
        %v1125 = vpop.f32.mrf.mxu0
        %v1126 = vadd.f32 0.0, %v1125
        %v1127 = vpop.f32.mrf.mxu0
        %1128 = vdwg.mxu0
        %v1129 = vld [vmem:[#allocation2] sm:$0xff]
        %v1130 = vld [vmem:[#allocation2 + $0x8] sm:$0xff]
        %v1131 = vld [vmem:[#allocation2 + $0x10] sm:$0xff]
        %v1132 = vld [vmem:[#allocation2 + $0x18] sm:$0xff]
        %v1133 = vld [vmem:[#allocation2 + $0x20] sm:$0xff]
        %v1134 = vld [vmem:[#allocation2 + $0x28] sm:$0xff]
        %v1135 = vld [vmem:[#allocation2 + $0x30] sm:$0xff]
        %v1136 = vld [vmem:[#allocation2 + $0x38] sm:$0xff]
        %v1137 = vld [vmem:[#allocation2 + $0x40] sm:$0xff]
        %v1138 = vld [vmem:[#allocation2 + $0x48] sm:$0xff]
        %v1139 = vld [vmem:[#allocation2 + $0x50] sm:$0xff]
        %v1140 = vld [vmem:[#allocation2 + $0x58] sm:$0xff]
        %v1141 = vld [vmem:[#allocation2 + $0x60] sm:$0xff]
        %v1142 = vld [vmem:[#allocation2 + $0x68] sm:$0xff]
        %v1143 = vld [vmem:[#allocation2 + $0x70] sm:$0xff]
        %v1144 = vld [vmem:[#allocation2 + $0x78] sm:$0xff]
        %v1145 = vld [vmem:[#allocation2 + $0x80] sm:$0xff]
        %v1146 = vld [vmem:[#allocation2 + $0x88] sm:$0xff]
        %v1147 = vld [vmem:[#allocation2 + $0x90] sm:$0xff]
        %v1148 = vld [vmem:[#allocation2 + $0x98] sm:$0xff]
        %v1149 = vld [vmem:[#allocation2 + $0xa0] sm:$0xff]
        %v1150 = vld [vmem:[#allocation2 + $0xa8] sm:$0xff]
        %v1151 = vld [vmem:[#allocation2 + $0xb0] sm:$0xff]
        %v1152 = vld [vmem:[#allocation2 + $0xb8] sm:$0xff]
        %v1153 = vld [vmem:[#allocation2 + $0xc0] sm:$0xff]
        %v1154 = vld [vmem:[#allocation2 + $0xc8] sm:$0xff]
        %v1155 = vld [vmem:[#allocation2 + $0xd0] sm:$0xff]
        %v1156 = vld [vmem:[#allocation2 + $0xd8] sm:$0xff]
        %v1157 = vld [vmem:[#allocation2 + $0xe0] sm:$0xff]
        %v1158 = vld [vmem:[#allocation2 + $0xe8] sm:$0xff]
        %v1159 = vld [vmem:[#allocation2 + $0xf0] sm:$0xff]
        %v1160 = vld [vmem:[#allocation2 + $0xf8] sm:$0xff]
        %v1161 = vadd.f32 %v1129, %v971
        %v1162 = vadd.f32 %v1130, %v976
        %v1163 = vadd.f32 %v1131, %v981
        %v1164 = vadd.f32 %v1132, %v986
        %v1165 = vadd.f32 %v1133, %v991
        %v1166 = vadd.f32 %v1134, %v996
        %v1167 = vadd.f32 %v1135, %v1001
        %v1168 = vadd.f32 %v1136, %v1006
        %v1169 = vadd.f32 %v1137, %v1011
        %v1170 = vadd.f32 %v1138, %v1016
        %v1171 = vadd.f32 %v1139, %v1021
        %v1172 = vadd.f32 %v1140, %v1026
        %v1173 = vadd.f32 %v1141, %v1031
        %v1174 = vadd.f32 %v1142, %v1036
        %v1175 = vadd.f32 %v1143, %v1041
        %v1176 = vadd.f32 %v1144, %v1046
        %v1177 = vadd.f32 %v1145, %v1051
        %v1178 = vadd.f32 %v1146, %v1056
        %v1179 = vadd.f32 %v1147, %v1061
        %v1180 = vadd.f32 %v1148, %v1066
        %v1181 = vadd.f32 %v1149, %v1071
        %v1182 = vadd.f32 %v1150, %v1076
        %v1183 = vadd.f32 %v1151, %v1081
        %v1184 = vadd.f32 %v1152, %v1086
        %v1185 = vadd.f32 %v1153, %v1091
        %v1186 = vadd.f32 %v1154, %v1096
        %v1187 = vadd.f32 %v1155, %v1101
        %v1188 = vadd.f32 %v1156, %v1106
        %v1189 = vadd.f32 %v1157, %v1111
        %v1190 = vadd.f32 %v1158, %v1116
        %v1191 = vadd.f32 %v1159, %v1121
        %v1192 = vadd.f32 %v1160, %v1126
        %1193 = vst [vmem:[#allocation2] sm:$0xff] %v1161
        %1194 = vst [vmem:[#allocation2 + $0x8] sm:$0xff] %v1162
        %1195 = vst [vmem:[#allocation2 + $0x10] sm:$0xff] %v1163
        %1196 = vst [vmem:[#allocation2 + $0x18] sm:$0xff] %v1164
        %1197 = vst [vmem:[#allocation2 + $0x20] sm:$0xff] %v1165
        %1198 = vst [vmem:[#allocation2 + $0x28] sm:$0xff] %v1166
        %1199 = vst [vmem:[#allocation2 + $0x30] sm:$0xff] %v1167
        %1200 = vst [vmem:[#allocation2 + $0x38] sm:$0xff] %v1168
        %1201 = vst [vmem:[#allocation2 + $0x40] sm:$0xff] %v1169
        %1202 = vst [vmem:[#allocation2 + $0x48] sm:$0xff] %v1170
        %1203 = vst [vmem:[#allocation2 + $0x50] sm:$0xff] %v1171
        %1204 = vst [vmem:[#allocation2 + $0x58] sm:$0xff] %v1172
        %1205 = vst [vmem:[#allocation2 + $0x60] sm:$0xff] %v1173
        %1206 = vst [vmem:[#allocation2 + $0x68] sm:$0xff] %v1174
        %1207 = vst [vmem:[#allocation2 + $0x70] sm:$0xff] %v1175
        %1208 = vst [vmem:[#allocation2 + $0x78] sm:$0xff] %v1176
        %1209 = vst [vmem:[#allocation2 + $0x80] sm:$0xff] %v1177
        %1210 = vst [vmem:[#allocation2 + $0x88] sm:$0xff] %v1178
        %1211 = vst [vmem:[#allocation2 + $0x90] sm:$0xff] %v1179
        %1212 = vst [vmem:[#allocation2 + $0x98] sm:$0xff] %v1180
        %1213 = vst [vmem:[#allocation2 + $0xa0] sm:$0xff] %v1181
        %1214 = vst [vmem:[#allocation2 + $0xa8] sm:$0xff] %v1182
        %1215 = vst [vmem:[#allocation2 + $0xb0] sm:$0xff] %v1183
        %1216 = vst [vmem:[#allocation2 + $0xb8] sm:$0xff] %v1184
        %1217 = vst [vmem:[#allocation2 + $0xc0] sm:$0xff] %v1185
        %1218 = vst [vmem:[#allocation2 + $0xc8] sm:$0xff] %v1186
        %1219 = vst [vmem:[#allocation2 + $0xd0] sm:$0xff] %v1187
        %1220 = vst [vmem:[#allocation2 + $0xd8] sm:$0xff] %v1188
        %1221 = vst [vmem:[#allocation2 + $0xe0] sm:$0xff] %v1189
        %1222 = vst [vmem:[#allocation2 + $0xe8] sm:$0xff] %v1190
        %1223 = vst [vmem:[#allocation2 + $0xf0] sm:$0xff] %v1191
        %1224 = vst [vmem:[#allocation2 + $0xf8] sm:$0xff] %v1192
        %s1225 = scalar_lea.vmem %s179, 24
        %v1226 = vld [vmem:[%s1225] sm:$0xff]
        %v1227 = vld [vmem:[%s1225 + $0x8] sm:$0xff]
        %v1228 = vld [vmem:[%s1225 + $0x18] sm:$0xff]
        %v1229 = vld [vmem:[%s1225 + $0x20] sm:$0xff]
        %v1230 = vld [vmem:[%s1225 + $0x30] sm:$0xff]
        %v1231 = vld [vmem:[%s1225 + $0x38] sm:$0xff]
        %v1232 = vld [vmem:[%s1225 + $0x48] sm:$0xff]
        %v1233 = vld [vmem:[%s1225 + $0x50] sm:$0xff]
        %v1234 = vld [vmem:[%s1225 + $0x60] sm:$0xff]
        %v1235 = vld [vmem:[%s1225 + $0x68] sm:$0xff]
        %v1236 = vld [vmem:[%s1225 + $0x78] sm:$0xff]
        %v1237 = vld [vmem:[%s1225 + $0x80] sm:$0xff]
        %v1238 = vld [vmem:[%s1225 + $0x90] sm:$0xff]
        %v1239 = vld [vmem:[%s1225 + $0x98] sm:$0xff]
        %v1240 = vld [vmem:[%s1225 + $0xa8] sm:$0xff]
        %v1241 = vld [vmem:[%s1225 + $0xb0] sm:$0xff]
        %v1242 = vld [vmem:[%s1225 + $0xc0] sm:$0xff]
        %v1243 = vld [vmem:[%s1225 + $0xc8] sm:$0xff]
        %v1244 = vld [vmem:[%s1225 + $0xd8] sm:$0xff]
        %v1245 = vld [vmem:[%s1225 + $0xe0] sm:$0xff]
        %v1246 = vld [vmem:[%s1225 + $0xf0] sm:$0xff]
        %v1247 = vld [vmem:[%s1225 + $0xf8] sm:$0xff]
        %v1248 = vld [vmem:[%s1225 + $0x108] sm:$0xff]
        %v1249 = vld [vmem:[%s1225 + $0x110] sm:$0xff]
        %v1250 = vld [vmem:[%s1225 + $0x120] sm:$0xff]
        %v1251 = vld [vmem:[%s1225 + $0x128] sm:$0xff]
        %v1252 = vld [vmem:[%s1225 + $0x138] sm:$0xff]
        %v1253 = vld [vmem:[%s1225 + $0x140] sm:$0xff]
        %v1254 = vld [vmem:[%s1225 + $0x150] sm:$0xff]
        %v1255 = vld [vmem:[%s1225 + $0x158] sm:$0xff]
        %v1256 = vld [vmem:[%s1225 + $0x168] sm:$0xff]
        %v1257 = vld [vmem:[%s1225 + $0x170] sm:$0xff]
        %s1258 = scalar_lea.vmem %s1, 384
        %v1259 = vld [vmem:[%s1258] sm:$0xff]
        %v1260 = vld [vmem:[%s1258 + $0x8] sm:$0xff]
        %v1261 = vld [vmem:[%s1258 + $0x10] sm:$0xff]
        %v1262 = vld [vmem:[%s1258 + $0x18] sm:$0xff]
        %v1263 = vld [vmem:[%s1258 + $0x20] sm:$0xff]
        %v1264 = vld [vmem:[%s1258 + $0x28] sm:$0xff]
        %v1265 = vld [vmem:[%s1258 + $0x30] sm:$0xff]
        %v1266 = vld [vmem:[%s1258 + $0x38] sm:$0xff]
        %v1267 = vld [vmem:[%s1258 + $0x40] sm:$0xff]
        %v1268 = vld [vmem:[%s1258 + $0x48] sm:$0xff]
        %v1269 = vld [vmem:[%s1258 + $0x50] sm:$0xff]
        %v1270 = vld [vmem:[%s1258 + $0x58] sm:$0xff]
        %v1271 = vld [vmem:[%s1258 + $0x60] sm:$0xff]
        %v1272 = vld [vmem:[%s1258 + $0x68] sm:$0xff]
        %v1273 = vld [vmem:[%s1258 + $0x70] sm:$0xff]
        %v1274 = vld [vmem:[%s1258 + $0x78] sm:$0xff]
        %1275 = vmatprep.subr.mxu0 0.0
        %1276 = vmatpush1.msra.mxu0 %v1274
        %1277 = vmatprep.subr.mxu0 0.0
        %1278 = vmatpush1.msra.mxu0 %v1273
        %1279 = vmatprep.subr.mxu0 0.0
        %1280 = vmatpush1.msra.mxu0 %v1272
        %1281 = vmatprep.subr.mxu0 0.0
        %1282 = vmatpush1.msra.mxu0 %v1271
        %1283 = vmatprep.subr.mxu0 0.0
        %1284 = vmatpush1.msra.mxu0 %v1270
        %1285 = vmatprep.subr.mxu0 0.0
        %1286 = vmatpush1.msra.mxu0 %v1269
        %1287 = vmatprep.subr.mxu0 0.0
        %1288 = vmatpush1.msra.mxu0 %v1268
        %1289 = vmatprep.subr.mxu0 0.0
        %1290 = vmatpush1.msra.mxu0 %v1267
        %1291 = vmatprep.subr.mxu0 0.0
        %1292 = vmatpush1.msra.mxu0 %v1266
        %1293 = vmatprep.subr.mxu0 0.0
        %1294 = vmatpush1.msra.mxu0 %v1265
        %1295 = vmatprep.subr.mxu0 0.0
        %1296 = vmatpush1.msra.mxu0 %v1264
        %1297 = vmatprep.subr.mxu0 0.0
        %1298 = vmatpush1.msra.mxu0 %v1263
        %1299 = vmatprep.subr.mxu0 0.0
        %1300 = vmatpush1.msra.mxu0 %v1262
        %1301 = vmatprep.subr.mxu0 0.0
        %1302 = vmatpush1.msra.mxu0 %v1261
        %1303 = vmatprep.subr.mxu0 0.0
        %1304 = vmatpush1.msra.mxu0 %v1260
        %1305 = vmatprep.subr.mxu0 0.0
        %1306 = vmatpush1.msra.mxu0 %v1259
        %1307 = vmatprep.subr.mxu0 0.0
        %1308 = vmatpush2.msra.mxu0 0.0
        %1309 = vmatprep.subr.mxu0 0.0
        %1310 = vmatpush2.msra.mxu0 0.0
        %1311 = vmatprep.subr.mxu0 0.0
        %1312 = vmatpush2.msra.mxu0 0.0
        %1313 = vmatprep.subr.mxu0 0.0
        %1314 = vmatpush2.msra.mxu0 0.0
        %1315 = vmatprep.subr.mxu0 0.0
        %1316 = vmatpush2.msra.mxu0 0.0
        %1317 = vmatprep.subr.mxu0 0.0
        %1318 = vmatpush2.msra.mxu0 0.0
        %1319 = vmatprep.subr.mxu0 0.0
        %1320 = vmatpush2.msra.mxu0 0.0
        %1321 = vmatprep.subr.mxu0 0.0
        %1322 = vmatpush2.msra.mxu0 0.0
        %1323 = vmatprep.subr.mxu0 0.0
        %1324 = vmatpush2.msra.mxu0 0.0
        %1325 = vmatprep.subr.mxu0 0.0
        %1326 = vmatpush2.msra.mxu0 0.0
        %1327 = vmatprep.subr.mxu0 0.0
        %1328 = vmatpush2.msra.mxu0 0.0
        %1329 = vmatprep.subr.mxu0 0.0
        %1330 = vmatpush2.msra.mxu0 0.0
        %1331 = vmatprep.subr.mxu0 0.0
        %1332 = vmatpush2.msra.mxu0 0.0
        %1333 = vmatprep.subr.mxu0 0.0
        %1334 = vmatpush2.msra.mxu0 0.0
        %1335 = vmatprep.subr.mxu0 0.0
        %1336 = vmatpush2.msra.mxu0 0.0
        %1337 = vmatprep.subr.mxu0 0.0
        %1338 = vmatpush2.msra.mxu0 0.0
        %1339 = vmatprep.mubr.f32.mxu0 0.0
        %1340 = vmatmul.mubr.f32.gmra.mxu0 %v1226
        %v1341 = vpop.f32.mrf.mxu0
        %v1342 = vadd.f32 0.0, %v1341
        %v1343 = vpop.f32.mrf.mxu0
        %1344 = vmatprep.mubr.f32.mxu0 0.0
        %1345 = vmatmul.mubr.f32.gmra.mxu0 %v1227
        %v1346 = vpop.f32.mrf.mxu0
        %v1347 = vadd.f32 0.0, %v1346
        %v1348 = vpop.f32.mrf.mxu0
        %1349 = vmatprep.mubr.f32.mxu0 0.0
        %1350 = vmatmul.mubr.f32.gmra.mxu0 %v1228
        %v1351 = vpop.f32.mrf.mxu0
        %v1352 = vadd.f32 0.0, %v1351
        %v1353 = vpop.f32.mrf.mxu0
        %1354 = vmatprep.mubr.f32.mxu0 0.0
        %1355 = vmatmul.mubr.f32.gmra.mxu0 %v1229
        %v1356 = vpop.f32.mrf.mxu0
        %v1357 = vadd.f32 0.0, %v1356
        %v1358 = vpop.f32.mrf.mxu0
        %1359 = vmatprep.mubr.f32.mxu0 0.0
        %1360 = vmatmul.mubr.f32.gmra.mxu0 %v1230
        %v1361 = vpop.f32.mrf.mxu0
        %v1362 = vadd.f32 0.0, %v1361
        %v1363 = vpop.f32.mrf.mxu0
        %1364 = vmatprep.mubr.f32.mxu0 0.0
        %1365 = vmatmul.mubr.f32.gmra.mxu0 %v1231
        %v1366 = vpop.f32.mrf.mxu0
        %v1367 = vadd.f32 0.0, %v1366
        %v1368 = vpop.f32.mrf.mxu0
        %1369 = vmatprep.mubr.f32.mxu0 0.0
        %1370 = vmatmul.mubr.f32.gmra.mxu0 %v1232
        %v1371 = vpop.f32.mrf.mxu0
        %v1372 = vadd.f32 0.0, %v1371
        %v1373 = vpop.f32.mrf.mxu0
        %1374 = vmatprep.mubr.f32.mxu0 0.0
        %1375 = vmatmul.mubr.f32.gmra.mxu0 %v1233
        %v1376 = vpop.f32.mrf.mxu0
        %v1377 = vadd.f32 0.0, %v1376
        %v1378 = vpop.f32.mrf.mxu0
        %1379 = vmatprep.mubr.f32.mxu0 0.0
        %1380 = vmatmul.mubr.f32.gmra.mxu0 %v1234
        %v1381 = vpop.f32.mrf.mxu0
        %v1382 = vadd.f32 0.0, %v1381
        %v1383 = vpop.f32.mrf.mxu0
        %1384 = vmatprep.mubr.f32.mxu0 0.0
        %1385 = vmatmul.mubr.f32.gmra.mxu0 %v1235
        %v1386 = vpop.f32.mrf.mxu0
        %v1387 = vadd.f32 0.0, %v1386
        %v1388 = vpop.f32.mrf.mxu0
        %1389 = vmatprep.mubr.f32.mxu0 0.0
        %1390 = vmatmul.mubr.f32.gmra.mxu0 %v1236
        %v1391 = vpop.f32.mrf.mxu0
        %v1392 = vadd.f32 0.0, %v1391
        %v1393 = vpop.f32.mrf.mxu0
        %1394 = vmatprep.mubr.f32.mxu0 0.0
        %1395 = vmatmul.mubr.f32.gmra.mxu0 %v1237
        %v1396 = vpop.f32.mrf.mxu0
        %v1397 = vadd.f32 0.0, %v1396
        %v1398 = vpop.f32.mrf.mxu0
        %1399 = vmatprep.mubr.f32.mxu0 0.0
        %1400 = vmatmul.mubr.f32.gmra.mxu0 %v1238
        %v1401 = vpop.f32.mrf.mxu0
        %v1402 = vadd.f32 0.0, %v1401
        %v1403 = vpop.f32.mrf.mxu0
        %1404 = vmatprep.mubr.f32.mxu0 0.0
        %1405 = vmatmul.mubr.f32.gmra.mxu0 %v1239
        %v1406 = vpop.f32.mrf.mxu0
        %v1407 = vadd.f32 0.0, %v1406
        %v1408 = vpop.f32.mrf.mxu0
        %1409 = vmatprep.mubr.f32.mxu0 0.0
        %1410 = vmatmul.mubr.f32.gmra.mxu0 %v1240
        %v1411 = vpop.f32.mrf.mxu0
        %v1412 = vadd.f32 0.0, %v1411
        %v1413 = vpop.f32.mrf.mxu0
        %1414 = vmatprep.mubr.f32.mxu0 0.0
        %1415 = vmatmul.mubr.f32.gmra.mxu0 %v1241
        %v1416 = vpop.f32.mrf.mxu0
        %v1417 = vadd.f32 0.0, %v1416
        %v1418 = vpop.f32.mrf.mxu0
        %1419 = vmatprep.mubr.f32.mxu0 0.0
        %1420 = vmatmul.mubr.f32.gmra.mxu0 %v1242
        %v1421 = vpop.f32.mrf.mxu0
        %v1422 = vadd.f32 0.0, %v1421
        %v1423 = vpop.f32.mrf.mxu0
        %1424 = vmatprep.mubr.f32.mxu0 0.0
        %1425 = vmatmul.mubr.f32.gmra.mxu0 %v1243
        %v1426 = vpop.f32.mrf.mxu0
        %v1427 = vadd.f32 0.0, %v1426
        %v1428 = vpop.f32.mrf.mxu0
        %1429 = vmatprep.mubr.f32.mxu0 0.0
        %1430 = vmatmul.mubr.f32.gmra.mxu0 %v1244
        %v1431 = vpop.f32.mrf.mxu0
        %v1432 = vadd.f32 0.0, %v1431
        %v1433 = vpop.f32.mrf.mxu0
        %1434 = vmatprep.mubr.f32.mxu0 0.0
        %1435 = vmatmul.mubr.f32.gmra.mxu0 %v1245
        %v1436 = vpop.f32.mrf.mxu0
        %v1437 = vadd.f32 0.0, %v1436
        %v1438 = vpop.f32.mrf.mxu0
        %1439 = vmatprep.mubr.f32.mxu0 0.0
        %1440 = vmatmul.mubr.f32.gmra.mxu0 %v1246
        %v1441 = vpop.f32.mrf.mxu0
        %v1442 = vadd.f32 0.0, %v1441
        %v1443 = vpop.f32.mrf.mxu0
        %1444 = vmatprep.mubr.f32.mxu0 0.0
        %1445 = vmatmul.mubr.f32.gmra.mxu0 %v1247
        %v1446 = vpop.f32.mrf.mxu0
        %v1447 = vadd.f32 0.0, %v1446
        %v1448 = vpop.f32.mrf.mxu0
        %1449 = vmatprep.mubr.f32.mxu0 0.0
        %1450 = vmatmul.mubr.f32.gmra.mxu0 %v1248
        %v1451 = vpop.f32.mrf.mxu0
        %v1452 = vadd.f32 0.0, %v1451
        %v1453 = vpop.f32.mrf.mxu0
        %1454 = vmatprep.mubr.f32.mxu0 0.0
        %1455 = vmatmul.mubr.f32.gmra.mxu0 %v1249
        %v1456 = vpop.f32.mrf.mxu0
        %v1457 = vadd.f32 0.0, %v1456
        %v1458 = vpop.f32.mrf.mxu0
        %1459 = vmatprep.mubr.f32.mxu0 0.0
        %1460 = vmatmul.mubr.f32.gmra.mxu0 %v1250
        %v1461 = vpop.f32.mrf.mxu0
        %v1462 = vadd.f32 0.0, %v1461
        %v1463 = vpop.f32.mrf.mxu0
        %1464 = vmatprep.mubr.f32.mxu0 0.0
        %1465 = vmatmul.mubr.f32.gmra.mxu0 %v1251
        %v1466 = vpop.f32.mrf.mxu0
        %v1467 = vadd.f32 0.0, %v1466
        %v1468 = vpop.f32.mrf.mxu0
        %1469 = vmatprep.mubr.f32.mxu0 0.0
        %1470 = vmatmul.mubr.f32.gmra.mxu0 %v1252
        %v1471 = vpop.f32.mrf.mxu0
        %v1472 = vadd.f32 0.0, %v1471
        %v1473 = vpop.f32.mrf.mxu0
        %1474 = vmatprep.mubr.f32.mxu0 0.0
        %1475 = vmatmul.mubr.f32.gmra.mxu0 %v1253
        %v1476 = vpop.f32.mrf.mxu0
        %v1477 = vadd.f32 0.0, %v1476
        %v1478 = vpop.f32.mrf.mxu0
        %1479 = vmatprep.mubr.f32.mxu0 0.0
        %1480 = vmatmul.mubr.f32.gmra.mxu0 %v1254
        %v1481 = vpop.f32.mrf.mxu0
        %v1482 = vadd.f32 0.0, %v1481
        %v1483 = vpop.f32.mrf.mxu0
        %1484 = vmatprep.mubr.f32.mxu0 0.0
        %1485 = vmatmul.mubr.f32.gmra.mxu0 %v1255
        %v1486 = vpop.f32.mrf.mxu0
        %v1487 = vadd.f32 0.0, %v1486
        %v1488 = vpop.f32.mrf.mxu0
        %1489 = vmatprep.mubr.f32.mxu0 0.0
        %1490 = vmatmul.mubr.f32.gmra.mxu0 %v1256
        %v1491 = vpop.f32.mrf.mxu0
        %v1492 = vadd.f32 0.0, %v1491
        %v1493 = vpop.f32.mrf.mxu0
        %1494 = vmatprep.mubr.f32.mxu0 0.0
        %1495 = vmatmul.mubr.f32.gmra.mxu0 %v1257
        %v1496 = vpop.f32.mrf.mxu0
        %v1497 = vadd.f32 0.0, %v1496
        %v1498 = vpop.f32.mrf.mxu0
        %1499 = vdwg.mxu0
        %v1500 = vld [vmem:[#allocation2] sm:$0xff]
        %v1501 = vld [vmem:[#allocation2 + $0x8] sm:$0xff]
        %v1502 = vld [vmem:[#allocation2 + $0x10] sm:$0xff]
        %v1503 = vld [vmem:[#allocation2 + $0x18] sm:$0xff]
        %v1504 = vld [vmem:[#allocation2 + $0x20] sm:$0xff]
        %v1505 = vld [vmem:[#allocation2 + $0x28] sm:$0xff]
        %v1506 = vld [vmem:[#allocation2 + $0x30] sm:$0xff]
        %v1507 = vld [vmem:[#allocation2 + $0x38] sm:$0xff]
        %v1508 = vld [vmem:[#allocation2 + $0x40] sm:$0xff]
        %v1509 = vld [vmem:[#allocation2 + $0x48] sm:$0xff]
        %v1510 = vld [vmem:[#allocation2 + $0x50] sm:$0xff]
        %v1511 = vld [vmem:[#allocation2 + $0x58] sm:$0xff]
        %v1512 = vld [vmem:[#allocation2 + $0x60] sm:$0xff]
        %v1513 = vld [vmem:[#allocation2 + $0x68] sm:$0xff]
        %v1514 = vld [vmem:[#allocation2 + $0x70] sm:$0xff]
        %v1515 = vld [vmem:[#allocation2 + $0x78] sm:$0xff]
        %v1516 = vld [vmem:[#allocation2 + $0x80] sm:$0xff]
        %v1517 = vld [vmem:[#allocation2 + $0x88] sm:$0xff]
        %v1518 = vld [vmem:[#allocation2 + $0x90] sm:$0xff]
        %v1519 = vld [vmem:[#allocation2 + $0x98] sm:$0xff]
        %v1520 = vld [vmem:[#allocation2 + $0xa0] sm:$0xff]
        %v1521 = vld [vmem:[#allocation2 + $0xa8] sm:$0xff]
        %v1522 = vld [vmem:[#allocation2 + $0xb0] sm:$0xff]
        %v1523 = vld [vmem:[#allocation2 + $0xb8] sm:$0xff]
        %v1524 = vld [vmem:[#allocation2 + $0xc0] sm:$0xff]
        %v1525 = vld [vmem:[#allocation2 + $0xc8] sm:$0xff]
        %v1526 = vld [vmem:[#allocation2 + $0xd0] sm:$0xff]
        %v1527 = vld [vmem:[#allocation2 + $0xd8] sm:$0xff]
        %v1528 = vld [vmem:[#allocation2 + $0xe0] sm:$0xff]
        %v1529 = vld [vmem:[#allocation2 + $0xe8] sm:$0xff]
        %v1530 = vld [vmem:[#allocation2 + $0xf0] sm:$0xff]
        %v1531 = vld [vmem:[#allocation2 + $0xf8] sm:$0xff]
        %v1532 = vadd.f32 %v1500, %v1342
        %v1533 = vadd.f32 %v1501, %v1347
        %v1534 = vadd.f32 %v1502, %v1352
        %v1535 = vadd.f32 %v1503, %v1357
        %v1536 = vadd.f32 %v1504, %v1362
        %v1537 = vadd.f32 %v1505, %v1367
        %v1538 = vadd.f32 %v1506, %v1372
        %v1539 = vadd.f32 %v1507, %v1377
        %v1540 = vadd.f32 %v1508, %v1382
        %v1541 = vadd.f32 %v1509, %v1387
        %v1542 = vadd.f32 %v1510, %v1392
        %v1543 = vadd.f32 %v1511, %v1397
        %v1544 = vadd.f32 %v1512, %v1402
        %v1545 = vadd.f32 %v1513, %v1407
        %v1546 = vadd.f32 %v1514, %v1412
        %v1547 = vadd.f32 %v1515, %v1417
        %v1548 = vadd.f32 %v1516, %v1422
        %v1549 = vadd.f32 %v1517, %v1427
        %v1550 = vadd.f32 %v1518, %v1432
        %v1551 = vadd.f32 %v1519, %v1437
        %v1552 = vadd.f32 %v1520, %v1442
        %v1553 = vadd.f32 %v1521, %v1447
        %v1554 = vadd.f32 %v1522, %v1452
        %v1555 = vadd.f32 %v1523, %v1457
        %v1556 = vadd.f32 %v1524, %v1462
        %v1557 = vadd.f32 %v1525, %v1467
        %v1558 = vadd.f32 %v1526, %v1472
        %v1559 = vadd.f32 %v1527, %v1477
        %v1560 = vadd.f32 %v1528, %v1482
        %v1561 = vadd.f32 %v1529, %v1487
        %v1562 = vadd.f32 %v1530, %v1492
        %v1563 = vadd.f32 %v1531, %v1497
        %1564 = vst [vmem:[#allocation2] sm:$0xff] %v1532
        %1565 = vst [vmem:[#allocation2 + $0x8] sm:$0xff] %v1533
        %1566 = vst [vmem:[#allocation2 + $0x10] sm:$0xff] %v1534
        %1567 = vst [vmem:[#allocation2 + $0x18] sm:$0xff] %v1535
        %1568 = vst [vmem:[#allocation2 + $0x20] sm:$0xff] %v1536
        %1569 = vst [vmem:[#allocation2 + $0x28] sm:$0xff] %v1537
        %1570 = vst [vmem:[#allocation2 + $0x30] sm:$0xff] %v1538
        %1571 = vst [vmem:[#allocation2 + $0x38] sm:$0xff] %v1539
        %1572 = vst [vmem:[#allocation2 + $0x40] sm:$0xff] %v1540
        %1573 = vst [vmem:[#allocation2 + $0x48] sm:$0xff] %v1541
        %1574 = vst [vmem:[#allocation2 + $0x50] sm:$0xff] %v1542
        %1575 = vst [vmem:[#allocation2 + $0x58] sm:$0xff] %v1543
        %1576 = vst [vmem:[#allocation2 + $0x60] sm:$0xff] %v1544
        %1577 = vst [vmem:[#allocation2 + $0x68] sm:$0xff] %v1545
        %1578 = vst [vmem:[#allocation2 + $0x70] sm:$0xff] %v1546
        %1579 = vst [vmem:[#allocation2 + $0x78] sm:$0xff] %v1547
        %1580 = vst [vmem:[#allocation2 + $0x80] sm:$0xff] %v1548
        %1581 = vst [vmem:[#allocation2 + $0x88] sm:$0xff] %v1549
        %1582 = vst [vmem:[#allocation2 + $0x90] sm:$0xff] %v1550
        %1583 = vst [vmem:[#allocation2 + $0x98] sm:$0xff] %v1551
        %1584 = vst [vmem:[#allocation2 + $0xa0] sm:$0xff] %v1552
        %1585 = vst [vmem:[#allocation2 + $0xa8] sm:$0xff] %v1553
        %1586 = vst [vmem:[#allocation2 + $0xb0] sm:$0xff] %v1554
        %1587 = vst [vmem:[#allocation2 + $0xb8] sm:$0xff] %v1555
        %1588 = vst [vmem:[#allocation2 + $0xc0] sm:$0xff] %v1556
        %1589 = vst [vmem:[#allocation2 + $0xc8] sm:$0xff] %v1557
        %1590 = vst [vmem:[#allocation2 + $0xd0] sm:$0xff] %v1558
        %1591 = vst [vmem:[#allocation2 + $0xd8] sm:$0xff] %v1559
        %1592 = vst [vmem:[#allocation2 + $0xe0] sm:$0xff] %v1560
        %1593 = vst [vmem:[#allocation2 + $0xe8] sm:$0xff] %v1561
        %1594 = vst [vmem:[#allocation2 + $0xf0] sm:$0xff] %v1562
        %1595 = vst [vmem:[#allocation2 + $0xf8] sm:$0xff] %v1563
        %v1596 = vld [vmem:[%s1225 + $0x1] sm:$0xff]
        %v1597 = vld [vmem:[%s1225 + $0x9] sm:$0xff]
        %v1598 = vld [vmem:[%s1225 + $0x19] sm:$0xff]
        %v1599 = vld [vmem:[%s1225 + $0x21] sm:$0xff]
        %v1600 = vld [vmem:[%s1225 + $0x31] sm:$0xff]
        %v1601 = vld [vmem:[%s1225 + $0x39] sm:$0xff]
        %v1602 = vld [vmem:[%s1225 + $0x49] sm:$0xff]
        %v1603 = vld [vmem:[%s1225 + $0x51] sm:$0xff]
        %v1604 = vld [vmem:[%s1225 + $0x61] sm:$0xff]
        %v1605 = vld [vmem:[%s1225 + $0x69] sm:$0xff]
        %v1606 = vld [vmem:[%s1225 + $0x79] sm:$0xff]
        %v1607 = vld [vmem:[%s1225 + $0x81] sm:$0xff]
        %v1608 = vld [vmem:[%s1225 + $0x91] sm:$0xff]
        %v1609 = vld [vmem:[%s1225 + $0x99] sm:$0xff]
        %v1610 = vld [vmem:[%s1225 + $0xa9] sm:$0xff]
        %v1611 = vld [vmem:[%s1225 + $0xb1] sm:$0xff]
        %v1612 = vld [vmem:[%s1225 + $0xc1] sm:$0xff]
        %v1613 = vld [vmem:[%s1225 + $0xc9] sm:$0xff]
        %v1614 = vld [vmem:[%s1225 + $0xd9] sm:$0xff]
        %v1615 = vld [vmem:[%s1225 + $0xe1] sm:$0xff]
        %v1616 = vld [vmem:[%s1225 + $0xf1] sm:$0xff]
        %v1617 = vld [vmem:[%s1225 + $0xf9] sm:$0xff]
        %v1618 = vld [vmem:[%s1225 + $0x109] sm:$0xff]
        %v1619 = vld [vmem:[%s1225 + $0x111] sm:$0xff]
        %v1620 = vld [vmem:[%s1225 + $0x121] sm:$0xff]
        %v1621 = vld [vmem:[%s1225 + $0x129] sm:$0xff]
        %v1622 = vld [vmem:[%s1225 + $0x139] sm:$0xff]
        %v1623 = vld [vmem:[%s1225 + $0x141] sm:$0xff]
        %v1624 = vld [vmem:[%s1225 + $0x151] sm:$0xff]
        %v1625 = vld [vmem:[%s1225 + $0x159] sm:$0xff]
        %v1626 = vld [vmem:[%s1225 + $0x169] sm:$0xff]
        %v1627 = vld [vmem:[%s1225 + $0x171] sm:$0xff]
        %s1628 = scalar_lea.vmem %s1, 512
        %v1629 = vld [vmem:[%s1628] sm:$0xff]
        %v1630 = vld [vmem:[%s1628 + $0x8] sm:$0xff]
        %v1631 = vld [vmem:[%s1628 + $0x10] sm:$0xff]
        %v1632 = vld [vmem:[%s1628 + $0x18] sm:$0xff]
        %v1633 = vld [vmem:[%s1628 + $0x20] sm:$0xff]
        %v1634 = vld [vmem:[%s1628 + $0x28] sm:$0xff]
        %v1635 = vld [vmem:[%s1628 + $0x30] sm:$0xff]
        %v1636 = vld [vmem:[%s1628 + $0x38] sm:$0xff]
        %v1637 = vld [vmem:[%s1628 + $0x40] sm:$0xff]
        %v1638 = vld [vmem:[%s1628 + $0x48] sm:$0xff]
        %v1639 = vld [vmem:[%s1628 + $0x50] sm:$0xff]
        %v1640 = vld [vmem:[%s1628 + $0x58] sm:$0xff]
        %v1641 = vld [vmem:[%s1628 + $0x60] sm:$0xff]
        %v1642 = vld [vmem:[%s1628 + $0x68] sm:$0xff]
        %v1643 = vld [vmem:[%s1628 + $0x70] sm:$0xff]
        %v1644 = vld [vmem:[%s1628 + $0x78] sm:$0xff]
        %1645 = vmatprep.subr.mxu0 0.0
        %1646 = vmatpush1.msra.mxu0 %v1644
        %1647 = vmatprep.subr.mxu0 0.0
        %1648 = vmatpush1.msra.mxu0 %v1643
        %1649 = vmatprep.subr.mxu0 0.0
        %1650 = vmatpush1.msra.mxu0 %v1642
        %1651 = vmatprep.subr.mxu0 0.0
        %1652 = vmatpush1.msra.mxu0 %v1641
        %1653 = vmatprep.subr.mxu0 0.0
        %1654 = vmatpush1.msra.mxu0 %v1640
        %1655 = vmatprep.subr.mxu0 0.0
        %1656 = vmatpush1.msra.mxu0 %v1639
        %1657 = vmatprep.subr.mxu0 0.0
        %1658 = vmatpush1.msra.mxu0 %v1638
        %1659 = vmatprep.subr.mxu0 0.0
        %1660 = vmatpush1.msra.mxu0 %v1637
        %1661 = vmatprep.subr.mxu0 0.0
        %1662 = vmatpush1.msra.mxu0 %v1636
        %1663 = vmatprep.subr.mxu0 0.0
        %1664 = vmatpush1.msra.mxu0 %v1635
        %1665 = vmatprep.subr.mxu0 0.0
        %1666 = vmatpush1.msra.mxu0 %v1634
        %1667 = vmatprep.subr.mxu0 0.0
        %1668 = vmatpush1.msra.mxu0 %v1633
        %1669 = vmatprep.subr.mxu0 0.0
        %1670 = vmatpush1.msra.mxu0 %v1632
        %1671 = vmatprep.subr.mxu0 0.0
        %1672 = vmatpush1.msra.mxu0 %v1631
        %1673 = vmatprep.subr.mxu0 0.0
        %1674 = vmatpush1.msra.mxu0 %v1630
        %1675 = vmatprep.subr.mxu0 0.0
        %1676 = vmatpush1.msra.mxu0 %v1629
        %1677 = vmatprep.subr.mxu0 0.0
        %1678 = vmatpush2.msra.mxu0 0.0
        %1679 = vmatprep.subr.mxu0 0.0
        %1680 = vmatpush2.msra.mxu0 0.0
        %1681 = vmatprep.subr.mxu0 0.0
        %1682 = vmatpush2.msra.mxu0 0.0
        %1683 = vmatprep.subr.mxu0 0.0
        %1684 = vmatpush2.msra.mxu0 0.0
        %1685 = vmatprep.subr.mxu0 0.0
        %1686 = vmatpush2.msra.mxu0 0.0
        %1687 = vmatprep.subr.mxu0 0.0
        %1688 = vmatpush2.msra.mxu0 0.0
        %1689 = vmatprep.subr.mxu0 0.0
        %1690 = vmatpush2.msra.mxu0 0.0
        %1691 = vmatprep.subr.mxu0 0.0
        %1692 = vmatpush2.msra.mxu0 0.0
        %1693 = vmatprep.subr.mxu0 0.0
        %1694 = vmatpush2.msra.mxu0 0.0
        %1695 = vmatprep.subr.mxu0 0.0
        %1696 = vmatpush2.msra.mxu0 0.0
        %1697 = vmatprep.subr.mxu0 0.0
        %1698 = vmatpush2.msra.mxu0 0.0
        %1699 = vmatprep.subr.mxu0 0.0
        %1700 = vmatpush2.msra.mxu0 0.0
        %1701 = vmatprep.subr.mxu0 0.0
        %1702 = vmatpush2.msra.mxu0 0.0
        %1703 = vmatprep.subr.mxu0 0.0
        %1704 = vmatpush2.msra.mxu0 0.0
        %1705 = vmatprep.subr.mxu0 0.0
        %1706 = vmatpush2.msra.mxu0 0.0
        %1707 = vmatprep.subr.mxu0 0.0
        %1708 = vmatpush2.msra.mxu0 0.0
        %1709 = vmatprep.mubr.f32.mxu0 0.0
        %1710 = vmatmul.mubr.f32.gmra.mxu0 %v1596
        %v1711 = vpop.f32.mrf.mxu0
        %v1712 = vadd.f32 0.0, %v1711
        %v1713 = vpop.f32.mrf.mxu0
        %1714 = vmatprep.mubr.f32.mxu0 0.0
        %1715 = vmatmul.mubr.f32.gmra.mxu0 %v1597
        %v1716 = vpop.f32.mrf.mxu0
        %v1717 = vadd.f32 0.0, %v1716
        %v1718 = vpop.f32.mrf.mxu0
        %1719 = vmatprep.mubr.f32.mxu0 0.0
        %1720 = vmatmul.mubr.f32.gmra.mxu0 %v1598
        %v1721 = vpop.f32.mrf.mxu0
        %v1722 = vadd.f32 0.0, %v1721
        %v1723 = vpop.f32.mrf.mxu0
        %1724 = vmatprep.mubr.f32.mxu0 0.0
        %1725 = vmatmul.mubr.f32.gmra.mxu0 %v1599
        %v1726 = vpop.f32.mrf.mxu0
        %v1727 = vadd.f32 0.0, %v1726
        %v1728 = vpop.f32.mrf.mxu0
        %1729 = vmatprep.mubr.f32.mxu0 0.0
        %1730 = vmatmul.mubr.f32.gmra.mxu0 %v1600
        %v1731 = vpop.f32.mrf.mxu0
        %v1732 = vadd.f32 0.0, %v1731
        %v1733 = vpop.f32.mrf.mxu0
        %1734 = vmatprep.mubr.f32.mxu0 0.0
        %1735 = vmatmul.mubr.f32.gmra.mxu0 %v1601
        %v1736 = vpop.f32.mrf.mxu0
        %v1737 = vadd.f32 0.0, %v1736
        %v1738 = vpop.f32.mrf.mxu0
        %1739 = vmatprep.mubr.f32.mxu0 0.0
        %1740 = vmatmul.mubr.f32.gmra.mxu0 %v1602
        %v1741 = vpop.f32.mrf.mxu0
        %v1742 = vadd.f32 0.0, %v1741
        %v1743 = vpop.f32.mrf.mxu0
        %1744 = vmatprep.mubr.f32.mxu0 0.0
        %1745 = vmatmul.mubr.f32.gmra.mxu0 %v1603
        %v1746 = vpop.f32.mrf.mxu0
        %v1747 = vadd.f32 0.0, %v1746
        %v1748 = vpop.f32.mrf.mxu0
        %1749 = vmatprep.mubr.f32.mxu0 0.0
        %1750 = vmatmul.mubr.f32.gmra.mxu0 %v1604
        %v1751 = vpop.f32.mrf.mxu0
        %v1752 = vadd.f32 0.0, %v1751
        %v1753 = vpop.f32.mrf.mxu0
        %1754 = vmatprep.mubr.f32.mxu0 0.0
        %1755 = vmatmul.mubr.f32.gmra.mxu0 %v1605
        %v1756 = vpop.f32.mrf.mxu0
        %v1757 = vadd.f32 0.0, %v1756
        %v1758 = vpop.f32.mrf.mxu0
        %1759 = vmatprep.mubr.f32.mxu0 0.0
        %1760 = vmatmul.mubr.f32.gmra.mxu0 %v1606
        %v1761 = vpop.f32.mrf.mxu0
        %v1762 = vadd.f32 0.0, %v1761
        %v1763 = vpop.f32.mrf.mxu0
        %1764 = vmatprep.mubr.f32.mxu0 0.0
        %1765 = vmatmul.mubr.f32.gmra.mxu0 %v1607
        %v1766 = vpop.f32.mrf.mxu0
        %v1767 = vadd.f32 0.0, %v1766
        %v1768 = vpop.f32.mrf.mxu0
        %1769 = vmatprep.mubr.f32.mxu0 0.0
        %1770 = vmatmul.mubr.f32.gmra.mxu0 %v1608
        %v1771 = vpop.f32.mrf.mxu0
        %v1772 = vadd.f32 0.0, %v1771
        %v1773 = vpop.f32.mrf.mxu0
        %1774 = vmatprep.mubr.f32.mxu0 0.0
        %1775 = vmatmul.mubr.f32.gmra.mxu0 %v1609
        %v1776 = vpop.f32.mrf.mxu0
        %v1777 = vadd.f32 0.0, %v1776
        %v1778 = vpop.f32.mrf.mxu0
        %1779 = vmatprep.mubr.f32.mxu0 0.0
        %1780 = vmatmul.mubr.f32.gmra.mxu0 %v1610
        %v1781 = vpop.f32.mrf.mxu0
        %v1782 = vadd.f32 0.0, %v1781
        %v1783 = vpop.f32.mrf.mxu0
        %1784 = vmatprep.mubr.f32.mxu0 0.0
        %1785 = vmatmul.mubr.f32.gmra.mxu0 %v1611
        %v1786 = vpop.f32.mrf.mxu0
        %v1787 = vadd.f32 0.0, %v1786
        %v1788 = vpop.f32.mrf.mxu0
        %1789 = vmatprep.mubr.f32.mxu0 0.0
        %1790 = vmatmul.mubr.f32.gmra.mxu0 %v1612
        %v1791 = vpop.f32.mrf.mxu0
        %v1792 = vadd.f32 0.0, %v1791
        %v1793 = vpop.f32.mrf.mxu0
        %1794 = vmatprep.mubr.f32.mxu0 0.0
        %1795 = vmatmul.mubr.f32.gmra.mxu0 %v1613
        %v1796 = vpop.f32.mrf.mxu0
        %v1797 = vadd.f32 0.0, %v1796
        %v1798 = vpop.f32.mrf.mxu0
        %1799 = vmatprep.mubr.f32.mxu0 0.0
        %1800 = vmatmul.mubr.f32.gmra.mxu0 %v1614
        %v1801 = vpop.f32.mrf.mxu0
        %v1802 = vadd.f32 0.0, %v1801
        %v1803 = vpop.f32.mrf.mxu0
        %1804 = vmatprep.mubr.f32.mxu0 0.0
        %1805 = vmatmul.mubr.f32.gmra.mxu0 %v1615
        %v1806 = vpop.f32.mrf.mxu0
        %v1807 = vadd.f32 0.0, %v1806
        %v1808 = vpop.f32.mrf.mxu0
        %1809 = vmatprep.mubr.f32.mxu0 0.0
        %1810 = vmatmul.mubr.f32.gmra.mxu0 %v1616
        %v1811 = vpop.f32.mrf.mxu0
        %v1812 = vadd.f32 0.0, %v1811
        %v1813 = vpop.f32.mrf.mxu0
        %1814 = vmatprep.mubr.f32.mxu0 0.0
        %1815 = vmatmul.mubr.f32.gmra.mxu0 %v1617
        %v1816 = vpop.f32.mrf.mxu0
        %v1817 = vadd.f32 0.0, %v1816
        %v1818 = vpop.f32.mrf.mxu0
        %1819 = vmatprep.mubr.f32.mxu0 0.0
        %1820 = vmatmul.mubr.f32.gmra.mxu0 %v1618
        %v1821 = vpop.f32.mrf.mxu0
        %v1822 = vadd.f32 0.0, %v1821
        %v1823 = vpop.f32.mrf.mxu0
        %1824 = vmatprep.mubr.f32.mxu0 0.0
        %1825 = vmatmul.mubr.f32.gmra.mxu0 %v1619
        %v1826 = vpop.f32.mrf.mxu0
        %v1827 = vadd.f32 0.0, %v1826
        %v1828 = vpop.f32.mrf.mxu0
        %1829 = vmatprep.mubr.f32.mxu0 0.0
        %1830 = vmatmul.mubr.f32.gmra.mxu0 %v1620
        %v1831 = vpop.f32.mrf.mxu0
        %v1832 = vadd.f32 0.0, %v1831
        %v1833 = vpop.f32.mrf.mxu0
        %1834 = vmatprep.mubr.f32.mxu0 0.0
        %1835 = vmatmul.mubr.f32.gmra.mxu0 %v1621
        %v1836 = vpop.f32.mrf.mxu0
        %v1837 = vadd.f32 0.0, %v1836
        %v1838 = vpop.f32.mrf.mxu0
        %1839 = vmatprep.mubr.f32.mxu0 0.0
        %1840 = vmatmul.mubr.f32.gmra.mxu0 %v1622
        %v1841 = vpop.f32.mrf.mxu0
        %v1842 = vadd.f32 0.0, %v1841
        %v1843 = vpop.f32.mrf.mxu0
        %1844 = vmatprep.mubr.f32.mxu0 0.0
        %1845 = vmatmul.mubr.f32.gmra.mxu0 %v1623
        %v1846 = vpop.f32.mrf.mxu0
        %v1847 = vadd.f32 0.0, %v1846
        %v1848 = vpop.f32.mrf.mxu0
        %1849 = vmatprep.mubr.f32.mxu0 0.0
        %1850 = vmatmul.mubr.f32.gmra.mxu0 %v1624
        %v1851 = vpop.f32.mrf.mxu0
        %v1852 = vadd.f32 0.0, %v1851
        %v1853 = vpop.f32.mrf.mxu0
        %1854 = vmatprep.mubr.f32.mxu0 0.0
        %1855 = vmatmul.mubr.f32.gmra.mxu0 %v1625
        %v1856 = vpop.f32.mrf.mxu0
        %v1857 = vadd.f32 0.0, %v1856
        %v1858 = vpop.f32.mrf.mxu0
        %1859 = vmatprep.mubr.f32.mxu0 0.0
        %1860 = vmatmul.mubr.f32.gmra.mxu0 %v1626
        %v1861 = vpop.f32.mrf.mxu0
        %v1862 = vadd.f32 0.0, %v1861
        %v1863 = vpop.f32.mrf.mxu0
        %1864 = vmatprep.mubr.f32.mxu0 0.0
        %1865 = vmatmul.mubr.f32.gmra.mxu0 %v1627
        %v1866 = vpop.f32.mrf.mxu0
        %v1867 = vadd.f32 0.0, %v1866
        %v1868 = vpop.f32.mrf.mxu0
        %1869 = vdwg.mxu0
        %v1870 = vld [vmem:[#allocation2] sm:$0xff]
        %v1871 = vld [vmem:[#allocation2 + $0x8] sm:$0xff]
        %v1872 = vld [vmem:[#allocation2 + $0x10] sm:$0xff]
        %v1873 = vld [vmem:[#allocation2 + $0x18] sm:$0xff]
        %v1874 = vld [vmem:[#allocation2 + $0x20] sm:$0xff]
        %v1875 = vld [vmem:[#allocation2 + $0x28] sm:$0xff]
        %v1876 = vld [vmem:[#allocation2 + $0x30] sm:$0xff]
        %v1877 = vld [vmem:[#allocation2 + $0x38] sm:$0xff]
        %v1878 = vld [vmem:[#allocation2 + $0x40] sm:$0xff]
        %v1879 = vld [vmem:[#allocation2 + $0x48] sm:$0xff]
        %v1880 = vld [vmem:[#allocation2 + $0x50] sm:$0xff]
        %v1881 = vld [vmem:[#allocation2 + $0x58] sm:$0xff]
        %v1882 = vld [vmem:[#allocation2 + $0x60] sm:$0xff]
        %v1883 = vld [vmem:[#allocation2 + $0x68] sm:$0xff]
        %v1884 = vld [vmem:[#allocation2 + $0x70] sm:$0xff]
        %v1885 = vld [vmem:[#allocation2 + $0x78] sm:$0xff]
        %v1886 = vld [vmem:[#allocation2 + $0x80] sm:$0xff]
        %v1887 = vld [vmem:[#allocation2 + $0x88] sm:$0xff]
        %v1888 = vld [vmem:[#allocation2 + $0x90] sm:$0xff]
        %v1889 = vld [vmem:[#allocation2 + $0x98] sm:$0xff]
        %v1890 = vld [vmem:[#allocation2 + $0xa0] sm:$0xff]
        %v1891 = vld [vmem:[#allocation2 + $0xa8] sm:$0xff]
        %v1892 = vld [vmem:[#allocation2 + $0xb0] sm:$0xff]
        %v1893 = vld [vmem:[#allocation2 + $0xb8] sm:$0xff]
        %v1894 = vld [vmem:[#allocation2 + $0xc0] sm:$0xff]
        %v1895 = vld [vmem:[#allocation2 + $0xc8] sm:$0xff]
        %v1896 = vld [vmem:[#allocation2 + $0xd0] sm:$0xff]
        %v1897 = vld [vmem:[#allocation2 + $0xd8] sm:$0xff]
        %v1898 = vld [vmem:[#allocation2 + $0xe0] sm:$0xff]
        %v1899 = vld [vmem:[#allocation2 + $0xe8] sm:$0xff]
        %v1900 = vld [vmem:[#allocation2 + $0xf0] sm:$0xff]
        %v1901 = vld [vmem:[#allocation2 + $0xf8] sm:$0xff]
        %v1902 = vadd.f32 %v1870, %v1712
        %v1903 = vadd.f32 %v1871, %v1717
        %v1904 = vadd.f32 %v1872, %v1722
        %v1905 = vadd.f32 %v1873, %v1727
        %v1906 = vadd.f32 %v1874, %v1732
        %v1907 = vadd.f32 %v1875, %v1737
        %v1908 = vadd.f32 %v1876, %v1742
        %v1909 = vadd.f32 %v1877, %v1747
        %v1910 = vadd.f32 %v1878, %v1752
        %v1911 = vadd.f32 %v1879, %v1757
        %v1912 = vadd.f32 %v1880, %v1762
        %v1913 = vadd.f32 %v1881, %v1767
        %v1914 = vadd.f32 %v1882, %v1772
        %v1915 = vadd.f32 %v1883, %v1777
        %v1916 = vadd.f32 %v1884, %v1782
        %v1917 = vadd.f32 %v1885, %v1787
        %v1918 = vadd.f32 %v1886, %v1792
        %v1919 = vadd.f32 %v1887, %v1797
        %v1920 = vadd.f32 %v1888, %v1802
        %v1921 = vadd.f32 %v1889, %v1807
        %v1922 = vadd.f32 %v1890, %v1812
        %v1923 = vadd.f32 %v1891, %v1817
        %v1924 = vadd.f32 %v1892, %v1822
        %v1925 = vadd.f32 %v1893, %v1827
        %v1926 = vadd.f32 %v1894, %v1832
        %v1927 = vadd.f32 %v1895, %v1837
        %v1928 = vadd.f32 %v1896, %v1842
        %v1929 = vadd.f32 %v1897, %v1847
        %v1930 = vadd.f32 %v1898, %v1852
        %v1931 = vadd.f32 %v1899, %v1857
        %v1932 = vadd.f32 %v1900, %v1862
        %v1933 = vadd.f32 %v1901, %v1867
        %1934 = vst [vmem:[#allocation2] sm:$0xff] %v1902
        %1935 = vst [vmem:[#allocation2 + $0x8] sm:$0xff] %v1903
        %1936 = vst [vmem:[#allocation2 + $0x10] sm:$0xff] %v1904
        %1937 = vst [vmem:[#allocation2 + $0x18] sm:$0xff] %v1905
        %1938 = vst [vmem:[#allocation2 + $0x20] sm:$0xff] %v1906
        %1939 = vst [vmem:[#allocation2 + $0x28] sm:$0xff] %v1907
        %1940 = vst [vmem:[#allocation2 + $0x30] sm:$0xff] %v1908
        %1941 = vst [vmem:[#allocation2 + $0x38] sm:$0xff] %v1909
        %1942 = vst [vmem:[#allocation2 + $0x40] sm:$0xff] %v1910
        %1943 = vst [vmem:[#allocation2 + $0x48] sm:$0xff] %v1911
        %1944 = vst [vmem:[#allocation2 + $0x50] sm:$0xff] %v1912
        %1945 = vst [vmem:[#allocation2 + $0x58] sm:$0xff] %v1913
        %1946 = vst [vmem:[#allocation2 + $0x60] sm:$0xff] %v1914
        %1947 = vst [vmem:[#allocation2 + $0x68] sm:$0xff] %v1915
        %1948 = vst [vmem:[#allocation2 + $0x70] sm:$0xff] %v1916
        %1949 = vst [vmem:[#allocation2 + $0x78] sm:$0xff] %v1917
        %1950 = vst [vmem:[#allocation2 + $0x80] sm:$0xff] %v1918
        %1951 = vst [vmem:[#allocation2 + $0x88] sm:$0xff] %v1919
        %1952 = vst [vmem:[#allocation2 + $0x90] sm:$0xff] %v1920
        %1953 = vst [vmem:[#allocation2 + $0x98] sm:$0xff] %v1921
        %1954 = vst [vmem:[#allocation2 + $0xa0] sm:$0xff] %v1922
        %1955 = vst [vmem:[#allocation2 + $0xa8] sm:$0xff] %v1923
        %1956 = vst [vmem:[#allocation2 + $0xb0] sm:$0xff] %v1924
        %1957 = vst [vmem:[#allocation2 + $0xb8] sm:$0xff] %v1925
        %1958 = vst [vmem:[#allocation2 + $0xc0] sm:$0xff] %v1926
        %1959 = vst [vmem:[#allocation2 + $0xc8] sm:$0xff] %v1927
        %1960 = vst [vmem:[#allocation2 + $0xd0] sm:$0xff] %v1928
        %1961 = vst [vmem:[#allocation2 + $0xd8] sm:$0xff] %v1929
        %1962 = vst [vmem:[#allocation2 + $0xe0] sm:$0xff] %v1930
        %1963 = vst [vmem:[#allocation2 + $0xe8] sm:$0xff] %v1931
        %1964 = vst [vmem:[#allocation2 + $0xf0] sm:$0xff] %v1932
        %1965 = vst [vmem:[#allocation2 + $0xf8] sm:$0xff] %v1933
        %v1966 = vld [vmem:[%s1225 + $0x2] sm:$0xff]
        %v1967 = vld [vmem:[%s1225 + $0xa] sm:$0xff]
        %v1968 = vld [vmem:[%s1225 + $0x1a] sm:$0xff]
        %v1969 = vld [vmem:[%s1225 + $0x22] sm:$0xff]
        %v1970 = vld [vmem:[%s1225 + $0x32] sm:$0xff]
        %v1971 = vld [vmem:[%s1225 + $0x3a] sm:$0xff]
        %v1972 = vld [vmem:[%s1225 + $0x4a] sm:$0xff]
        %v1973 = vld [vmem:[%s1225 + $0x52] sm:$0xff]
        %v1974 = vld [vmem:[%s1225 + $0x62] sm:$0xff]
        %v1975 = vld [vmem:[%s1225 + $0x6a] sm:$0xff]
        %v1976 = vld [vmem:[%s1225 + $0x7a] sm:$0xff]
        %v1977 = vld [vmem:[%s1225 + $0x82] sm:$0xff]
        %v1978 = vld [vmem:[%s1225 + $0x92] sm:$0xff]
        %v1979 = vld [vmem:[%s1225 + $0x9a] sm:$0xff]
        %v1980 = vld [vmem:[%s1225 + $0xaa] sm:$0xff]
        %v1981 = vld [vmem:[%s1225 + $0xb2] sm:$0xff]
        %v1982 = vld [vmem:[%s1225 + $0xc2] sm:$0xff]
        %v1983 = vld [vmem:[%s1225 + $0xca] sm:$0xff]
        %v1984 = vld [vmem:[%s1225 + $0xda] sm:$0xff]
        %v1985 = vld [vmem:[%s1225 + $0xe2] sm:$0xff]
        %v1986 = vld [vmem:[%s1225 + $0xf2] sm:$0xff]
        %v1987 = vld [vmem:[%s1225 + $0xfa] sm:$0xff]
        %v1988 = vld [vmem:[%s1225 + $0x10a] sm:$0xff]
        %v1989 = vld [vmem:[%s1225 + $0x112] sm:$0xff]
        %v1990 = vld [vmem:[%s1225 + $0x122] sm:$0xff]
        %v1991 = vld [vmem:[%s1225 + $0x12a] sm:$0xff]
        %v1992 = vld [vmem:[%s1225 + $0x13a] sm:$0xff]
        %v1993 = vld [vmem:[%s1225 + $0x142] sm:$0xff]
        %v1994 = vld [vmem:[%s1225 + $0x152] sm:$0xff]
        %v1995 = vld [vmem:[%s1225 + $0x15a] sm:$0xff]
        %v1996 = vld [vmem:[%s1225 + $0x16a] sm:$0xff]
        %v1997 = vld [vmem:[%s1225 + $0x172] sm:$0xff]
        %s1998 = scalar_lea.vmem %s1, 640
        %v1999 = vld [vmem:[%s1998] sm:$0xff]
        %v2000 = vld [vmem:[%s1998 + $0x8] sm:$0xff]
        %v2001 = vld [vmem:[%s1998 + $0x10] sm:$0xff]
        %v2002 = vld [vmem:[%s1998 + $0x18] sm:$0xff]
        %v2003 = vld [vmem:[%s1998 + $0x20] sm:$0xff]
        %v2004 = vld [vmem:[%s1998 + $0x28] sm:$0xff]
        %v2005 = vld [vmem:[%s1998 + $0x30] sm:$0xff]
        %v2006 = vld [vmem:[%s1998 + $0x38] sm:$0xff]
        %v2007 = vld [vmem:[%s1998 + $0x40] sm:$0xff]
        %v2008 = vld [vmem:[%s1998 + $0x48] sm:$0xff]
        %v2009 = vld [vmem:[%s1998 + $0x50] sm:$0xff]
        %v2010 = vld [vmem:[%s1998 + $0x58] sm:$0xff]
        %v2011 = vld [vmem:[%s1998 + $0x60] sm:$0xff]
        %v2012 = vld [vmem:[%s1998 + $0x68] sm:$0xff]
        %v2013 = vld [vmem:[%s1998 + $0x70] sm:$0xff]
        %v2014 = vld [vmem:[%s1998 + $0x78] sm:$0xff]
        %2015 = vmatprep.subr.mxu0 0.0
        %2016 = vmatpush1.msra.mxu0 %v2014
        %2017 = vmatprep.subr.mxu0 0.0
        %2018 = vmatpush1.msra.mxu0 %v2013
        %2019 = vmatprep.subr.mxu0 0.0
        %2020 = vmatpush1.msra.mxu0 %v2012
        %2021 = vmatprep.subr.mxu0 0.0
        %2022 = vmatpush1.msra.mxu0 %v2011
        %2023 = vmatprep.subr.mxu0 0.0
        %2024 = vmatpush1.msra.mxu0 %v2010
        %2025 = vmatprep.subr.mxu0 0.0
        %2026 = vmatpush1.msra.mxu0 %v2009
        %2027 = vmatprep.subr.mxu0 0.0
        %2028 = vmatpush1.msra.mxu0 %v2008
        %2029 = vmatprep.subr.mxu0 0.0
        %2030 = vmatpush1.msra.mxu0 %v2007
        %2031 = vmatprep.subr.mxu0 0.0
        %2032 = vmatpush1.msra.mxu0 %v2006
        %2033 = vmatprep.subr.mxu0 0.0
        %2034 = vmatpush1.msra.mxu0 %v2005
        %2035 = vmatprep.subr.mxu0 0.0
        %2036 = vmatpush1.msra.mxu0 %v2004
        %2037 = vmatprep.subr.mxu0 0.0
        %2038 = vmatpush1.msra.mxu0 %v2003
        %2039 = vmatprep.subr.mxu0 0.0
        %2040 = vmatpush1.msra.mxu0 %v2002
        %2041 = vmatprep.subr.mxu0 0.0
        %2042 = vmatpush1.msra.mxu0 %v2001
        %2043 = vmatprep.subr.mxu0 0.0
        %2044 = vmatpush1.msra.mxu0 %v2000
        %2045 = vmatprep.subr.mxu0 0.0
        %2046 = vmatpush1.msra.mxu0 %v1999
        %2047 = vmatprep.subr.mxu0 0.0
        %2048 = vmatpush2.msra.mxu0 0.0
        %2049 = vmatprep.subr.mxu0 0.0
        %2050 = vmatpush2.msra.mxu0 0.0
        %2051 = vmatprep.subr.mxu0 0.0
        %2052 = vmatpush2.msra.mxu0 0.0
        %2053 = vmatprep.subr.mxu0 0.0
        %2054 = vmatpush2.msra.mxu0 0.0
        %2055 = vmatprep.subr.mxu0 0.0
        %2056 = vmatpush2.msra.mxu0 0.0
        %2057 = vmatprep.subr.mxu0 0.0
        %2058 = vmatpush2.msra.mxu0 0.0
        %2059 = vmatprep.subr.mxu0 0.0
        %2060 = vmatpush2.msra.mxu0 0.0
        %2061 = vmatprep.subr.mxu0 0.0
        %2062 = vmatpush2.msra.mxu0 0.0
        %2063 = vmatprep.subr.mxu0 0.0
        %2064 = vmatpush2.msra.mxu0 0.0
        %2065 = vmatprep.subr.mxu0 0.0
        %2066 = vmatpush2.msra.mxu0 0.0
        %2067 = vmatprep.subr.mxu0 0.0
        %2068 = vmatpush2.msra.mxu0 0.0
        %2069 = vmatprep.subr.mxu0 0.0
        %2070 = vmatpush2.msra.mxu0 0.0
        %2071 = vmatprep.subr.mxu0 0.0
        %2072 = vmatpush2.msra.mxu0 0.0
        %2073 = vmatprep.subr.mxu0 0.0
        %2074 = vmatpush2.msra.mxu0 0.0
        %2075 = vmatprep.subr.mxu0 0.0
        %2076 = vmatpush2.msra.mxu0 0.0
        %2077 = vmatprep.subr.mxu0 0.0
        %2078 = vmatpush2.msra.mxu0 0.0
        %2079 = vmatprep.mubr.f32.mxu0 0.0
        %2080 = vmatmul.mubr.f32.gmra.mxu0 %v1966
        %v2081 = vpop.f32.mrf.mxu0
        %v2082 = vadd.f32 0.0, %v2081
        %v2083 = vpop.f32.mrf.mxu0
        %2084 = vmatprep.mubr.f32.mxu0 0.0
        %2085 = vmatmul.mubr.f32.gmra.mxu0 %v1967
        %v2086 = vpop.f32.mrf.mxu0
        %v2087 = vadd.f32 0.0, %v2086
        %v2088 = vpop.f32.mrf.mxu0
        %2089 = vmatprep.mubr.f32.mxu0 0.0
        %2090 = vmatmul.mubr.f32.gmra.mxu0 %v1968
        %v2091 = vpop.f32.mrf.mxu0
        %v2092 = vadd.f32 0.0, %v2091
        %v2093 = vpop.f32.mrf.mxu0
        %2094 = vmatprep.mubr.f32.mxu0 0.0
        %2095 = vmatmul.mubr.f32.gmra.mxu0 %v1969
        %v2096 = vpop.f32.mrf.mxu0
        %v2097 = vadd.f32 0.0, %v2096
        %v2098 = vpop.f32.mrf.mxu0
        %2099 = vmatprep.mubr.f32.mxu0 0.0
        %2100 = vmatmul.mubr.f32.gmra.mxu0 %v1970
        %v2101 = vpop.f32.mrf.mxu0
        %v2102 = vadd.f32 0.0, %v2101
        %v2103 = vpop.f32.mrf.mxu0
        %2104 = vmatprep.mubr.f32.mxu0 0.0
        %2105 = vmatmul.mubr.f32.gmra.mxu0 %v1971
        %v2106 = vpop.f32.mrf.mxu0
        %v2107 = vadd.f32 0.0, %v2106
        %v2108 = vpop.f32.mrf.mxu0
        %2109 = vmatprep.mubr.f32.mxu0 0.0
        %2110 = vmatmul.mubr.f32.gmra.mxu0 %v1972
        %v2111 = vpop.f32.mrf.mxu0
        %v2112 = vadd.f32 0.0, %v2111
        %v2113 = vpop.f32.mrf.mxu0
        %2114 = vmatprep.mubr.f32.mxu0 0.0
        %2115 = vmatmul.mubr.f32.gmra.mxu0 %v1973
        %v2116 = vpop.f32.mrf.mxu0
        %v2117 = vadd.f32 0.0, %v2116
        %v2118 = vpop.f32.mrf.mxu0
        %2119 = vmatprep.mubr.f32.mxu0 0.0
        %2120 = vmatmul.mubr.f32.gmra.mxu0 %v1974
        %v2121 = vpop.f32.mrf.mxu0
        %v2122 = vadd.f32 0.0, %v2121
        %v2123 = vpop.f32.mrf.mxu0
        %2124 = vmatprep.mubr.f32.mxu0 0.0
        %2125 = vmatmul.mubr.f32.gmra.mxu0 %v1975
        %v2126 = vpop.f32.mrf.mxu0
        %v2127 = vadd.f32 0.0, %v2126
        %v2128 = vpop.f32.mrf.mxu0
        %2129 = vmatprep.mubr.f32.mxu0 0.0
        %2130 = vmatmul.mubr.f32.gmra.mxu0 %v1976
        %v2131 = vpop.f32.mrf.mxu0
        %v2132 = vadd.f32 0.0, %v2131
        %v2133 = vpop.f32.mrf.mxu0
        %2134 = vmatprep.mubr.f32.mxu0 0.0
        %2135 = vmatmul.mubr.f32.gmra.mxu0 %v1977
        %v2136 = vpop.f32.mrf.mxu0
        %v2137 = vadd.f32 0.0, %v2136
        %v2138 = vpop.f32.mrf.mxu0
        %2139 = vmatprep.mubr.f32.mxu0 0.0
        %2140 = vmatmul.mubr.f32.gmra.mxu0 %v1978
        %v2141 = vpop.f32.mrf.mxu0
        %v2142 = vadd.f32 0.0, %v2141
        %v2143 = vpop.f32.mrf.mxu0
        %2144 = vmatprep.mubr.f32.mxu0 0.0
        %2145 = vmatmul.mubr.f32.gmra.mxu0 %v1979
        %v2146 = vpop.f32.mrf.mxu0
        %v2147 = vadd.f32 0.0, %v2146
        %v2148 = vpop.f32.mrf.mxu0
        %2149 = vmatprep.mubr.f32.mxu0 0.0
        %2150 = vmatmul.mubr.f32.gmra.mxu0 %v1980
        %v2151 = vpop.f32.mrf.mxu0
        %v2152 = vadd.f32 0.0, %v2151
        %v2153 = vpop.f32.mrf.mxu0
        %2154 = vmatprep.mubr.f32.mxu0 0.0
        %2155 = vmatmul.mubr.f32.gmra.mxu0 %v1981
        %v2156 = vpop.f32.mrf.mxu0
        %v2157 = vadd.f32 0.0, %v2156
        %v2158 = vpop.f32.mrf.mxu0
        %2159 = vmatprep.mubr.f32.mxu0 0.0
        %2160 = vmatmul.mubr.f32.gmra.mxu0 %v1982
        %v2161 = vpop.f32.mrf.mxu0
        %v2162 = vadd.f32 0.0, %v2161
        %v2163 = vpop.f32.mrf.mxu0
        %2164 = vmatprep.mubr.f32.mxu0 0.0
        %2165 = vmatmul.mubr.f32.gmra.mxu0 %v1983
        %v2166 = vpop.f32.mrf.mxu0
        %v2167 = vadd.f32 0.0, %v2166
        %v2168 = vpop.f32.mrf.mxu0
        %2169 = vmatprep.mubr.f32.mxu0 0.0
        %2170 = vmatmul.mubr.f32.gmra.mxu0 %v1984
        %v2171 = vpop.f32.mrf.mxu0
        %v2172 = vadd.f32 0.0, %v2171
        %v2173 = vpop.f32.mrf.mxu0
        %2174 = vmatprep.mubr.f32.mxu0 0.0
        %2175 = vmatmul.mubr.f32.gmra.mxu0 %v1985
        %v2176 = vpop.f32.mrf.mxu0
        %v2177 = vadd.f32 0.0, %v2176
        %v2178 = vpop.f32.mrf.mxu0
        %2179 = vmatprep.mubr.f32.mxu0 0.0
        %2180 = vmatmul.mubr.f32.gmra.mxu0 %v1986
        %v2181 = vpop.f32.mrf.mxu0
        %v2182 = vadd.f32 0.0, %v2181
        %v2183 = vpop.f32.mrf.mxu0
        %2184 = vmatprep.mubr.f32.mxu0 0.0
        %2185 = vmatmul.mubr.f32.gmra.mxu0 %v1987
        %v2186 = vpop.f32.mrf.mxu0
        %v2187 = vadd.f32 0.0, %v2186
        %v2188 = vpop.f32.mrf.mxu0
        %2189 = vmatprep.mubr.f32.mxu0 0.0
        %2190 = vmatmul.mubr.f32.gmra.mxu0 %v1988
        %v2191 = vpop.f32.mrf.mxu0
        %v2192 = vadd.f32 0.0, %v2191
        %v2193 = vpop.f32.mrf.mxu0
        %2194 = vmatprep.mubr.f32.mxu0 0.0
        %2195 = vmatmul.mubr.f32.gmra.mxu0 %v1989
        %v2196 = vpop.f32.mrf.mxu0
        %v2197 = vadd.f32 0.0, %v2196
        %v2198 = vpop.f32.mrf.mxu0
        %2199 = vmatprep.mubr.f32.mxu0 0.0
        %2200 = vmatmul.mubr.f32.gmra.mxu0 %v1990
        %v2201 = vpop.f32.mrf.mxu0
        %v2202 = vadd.f32 0.0, %v2201
        %v2203 = vpop.f32.mrf.mxu0
        %2204 = vmatprep.mubr.f32.mxu0 0.0
        %2205 = vmatmul.mubr.f32.gmra.mxu0 %v1991
        %v2206 = vpop.f32.mrf.mxu0
        %v2207 = vadd.f32 0.0, %v2206
        %v2208 = vpop.f32.mrf.mxu0
        %2209 = vmatprep.mubr.f32.mxu0 0.0
        %2210 = vmatmul.mubr.f32.gmra.mxu0 %v1992
        %v2211 = vpop.f32.mrf.mxu0
        %v2212 = vadd.f32 0.0, %v2211
        %v2213 = vpop.f32.mrf.mxu0
        %2214 = vmatprep.mubr.f32.mxu0 0.0
        %2215 = vmatmul.mubr.f32.gmra.mxu0 %v1993
        %v2216 = vpop.f32.mrf.mxu0
        %v2217 = vadd.f32 0.0, %v2216
        %v2218 = vpop.f32.mrf.mxu0
        %2219 = vmatprep.mubr.f32.mxu0 0.0
        %2220 = vmatmul.mubr.f32.gmra.mxu0 %v1994
        %v2221 = vpop.f32.mrf.mxu0
        %v2222 = vadd.f32 0.0, %v2221
        %v2223 = vpop.f32.mrf.mxu0
        %2224 = vmatprep.mubr.f32.mxu0 0.0
        %2225 = vmatmul.mubr.f32.gmra.mxu0 %v1995
        %v2226 = vpop.f32.mrf.mxu0
        %v2227 = vadd.f32 0.0, %v2226
        %v2228 = vpop.f32.mrf.mxu0
        %2229 = vmatprep.mubr.f32.mxu0 0.0
        %2230 = vmatmul.mubr.f32.gmra.mxu0 %v1996
        %v2231 = vpop.f32.mrf.mxu0
        %v2232 = vadd.f32 0.0, %v2231
        %v2233 = vpop.f32.mrf.mxu0
        %2234 = vmatprep.mubr.f32.mxu0 0.0
        %2235 = vmatmul.mubr.f32.gmra.mxu0 %v1997
        %v2236 = vpop.f32.mrf.mxu0
        %v2237 = vadd.f32 0.0, %v2236
        %v2238 = vpop.f32.mrf.mxu0
        %2239 = vdwg.mxu0
        %v2240 = vld [vmem:[#allocation2] sm:$0xff]
        %v2241 = vld [vmem:[#allocation2 + $0x8] sm:$0xff]
        %v2242 = vld [vmem:[#allocation2 + $0x10] sm:$0xff]
        %v2243 = vld [vmem:[#allocation2 + $0x18] sm:$0xff]
        %v2244 = vld [vmem:[#allocation2 + $0x20] sm:$0xff]
        %v2245 = vld [vmem:[#allocation2 + $0x28] sm:$0xff]
        %v2246 = vld [vmem:[#allocation2 + $0x30] sm:$0xff]
        %v2247 = vld [vmem:[#allocation2 + $0x38] sm:$0xff]
        %v2248 = vld [vmem:[#allocation2 + $0x40] sm:$0xff]
        %v2249 = vld [vmem:[#allocation2 + $0x48] sm:$0xff]
        %v2250 = vld [vmem:[#allocation2 + $0x50] sm:$0xff]
        %v2251 = vld [vmem:[#allocation2 + $0x58] sm:$0xff]
        %v2252 = vld [vmem:[#allocation2 + $0x60] sm:$0xff]
        %v2253 = vld [vmem:[#allocation2 + $0x68] sm:$0xff]
        %v2254 = vld [vmem:[#allocation2 + $0x70] sm:$0xff]
        %v2255 = vld [vmem:[#allocation2 + $0x78] sm:$0xff]
        %v2256 = vld [vmem:[#allocation2 + $0x80] sm:$0xff]
        %v2257 = vld [vmem:[#allocation2 + $0x88] sm:$0xff]
        %v2258 = vld [vmem:[#allocation2 + $0x90] sm:$0xff]
        %v2259 = vld [vmem:[#allocation2 + $0x98] sm:$0xff]
        %v2260 = vld [vmem:[#allocation2 + $0xa0] sm:$0xff]
        %v2261 = vld [vmem:[#allocation2 + $0xa8] sm:$0xff]
        %v2262 = vld [vmem:[#allocation2 + $0xb0] sm:$0xff]
        %v2263 = vld [vmem:[#allocation2 + $0xb8] sm:$0xff]
        %v2264 = vld [vmem:[#allocation2 + $0xc0] sm:$0xff]
        %v2265 = vld [vmem:[#allocation2 + $0xc8] sm:$0xff]
        %v2266 = vld [vmem:[#allocation2 + $0xd0] sm:$0xff]
        %v2267 = vld [vmem:[#allocation2 + $0xd8] sm:$0xff]
        %v2268 = vld [vmem:[#allocation2 + $0xe0] sm:$0xff]
        %v2269 = vld [vmem:[#allocation2 + $0xe8] sm:$0xff]
        %v2270 = vld [vmem:[#allocation2 + $0xf0] sm:$0xff]
        %v2271 = vld [vmem:[#allocation2 + $0xf8] sm:$0xff]
        %v2272 = vadd.f32 %v2240, %v2082
        %v2273 = vadd.f32 %v2241, %v2087
        %v2274 = vadd.f32 %v2242, %v2092
        %v2275 = vadd.f32 %v2243, %v2097
        %v2276 = vadd.f32 %v2244, %v2102
        %v2277 = vadd.f32 %v2245, %v2107
        %v2278 = vadd.f32 %v2246, %v2112
        %v2279 = vadd.f32 %v2247, %v2117
        %v2280 = vadd.f32 %v2248, %v2122
        %v2281 = vadd.f32 %v2249, %v2127
        %v2282 = vadd.f32 %v2250, %v2132
        %v2283 = vadd.f32 %v2251, %v2137
        %v2284 = vadd.f32 %v2252, %v2142
        %v2285 = vadd.f32 %v2253, %v2147
        %v2286 = vadd.f32 %v2254, %v2152
        %v2287 = vadd.f32 %v2255, %v2157
        %v2288 = vadd.f32 %v2256, %v2162
        %v2289 = vadd.f32 %v2257, %v2167
        %v2290 = vadd.f32 %v2258, %v2172
        %v2291 = vadd.f32 %v2259, %v2177
        %v2292 = vadd.f32 %v2260, %v2182
        %v2293 = vadd.f32 %v2261, %v2187
        %v2294 = vadd.f32 %v2262, %v2192
        %v2295 = vadd.f32 %v2263, %v2197
        %v2296 = vadd.f32 %v2264, %v2202
        %v2297 = vadd.f32 %v2265, %v2207
        %v2298 = vadd.f32 %v2266, %v2212
        %v2299 = vadd.f32 %v2267, %v2217
        %v2300 = vadd.f32 %v2268, %v2222
        %v2301 = vadd.f32 %v2269, %v2227
        %v2302 = vadd.f32 %v2270, %v2232
        %v2303 = vadd.f32 %v2271, %v2237
        %2304 = vst [vmem:[#allocation2] sm:$0xff] %v2272
        %2305 = vst [vmem:[#allocation2 + $0x8] sm:$0xff] %v2273
        %2306 = vst [vmem:[#allocation2 + $0x10] sm:$0xff] %v2274
        %2307 = vst [vmem:[#allocation2 + $0x18] sm:$0xff] %v2275
        %2308 = vst [vmem:[#allocation2 + $0x20] sm:$0xff] %v2276
        %2309 = vst [vmem:[#allocation2 + $0x28] sm:$0xff] %v2277
        %2310 = vst [vmem:[#allocation2 + $0x30] sm:$0xff] %v2278
        %2311 = vst [vmem:[#allocation2 + $0x38] sm:$0xff] %v2279
        %2312 = vst [vmem:[#allocation2 + $0x40] sm:$0xff] %v2280
        %2313 = vst [vmem:[#allocation2 + $0x48] sm:$0xff] %v2281
        %2314 = vst [vmem:[#allocation2 + $0x50] sm:$0xff] %v2282
        %2315 = vst [vmem:[#allocation2 + $0x58] sm:$0xff] %v2283
        %2316 = vst [vmem:[#allocation2 + $0x60] sm:$0xff] %v2284
        %2317 = vst [vmem:[#allocation2 + $0x68] sm:$0xff] %v2285
        %2318 = vst [vmem:[#allocation2 + $0x70] sm:$0xff] %v2286
        %2319 = vst [vmem:[#allocation2 + $0x78] sm:$0xff] %v2287
        %2320 = vst [vmem:[#allocation2 + $0x80] sm:$0xff] %v2288
        %2321 = vst [vmem:[#allocation2 + $0x88] sm:$0xff] %v2289
        %2322 = vst [vmem:[#allocation2 + $0x90] sm:$0xff] %v2290
        %2323 = vst [vmem:[#allocation2 + $0x98] sm:$0xff] %v2291
        %2324 = vst [vmem:[#allocation2 + $0xa0] sm:$0xff] %v2292
        %2325 = vst [vmem:[#allocation2 + $0xa8] sm:$0xff] %v2293
        %2326 = vst [vmem:[#allocation2 + $0xb0] sm:$0xff] %v2294
        %2327 = vst [vmem:[#allocation2 + $0xb8] sm:$0xff] %v2295
        %2328 = vst [vmem:[#allocation2 + $0xc0] sm:$0xff] %v2296
        %2329 = vst [vmem:[#allocation2 + $0xc8] sm:$0xff] %v2297
        %2330 = vst [vmem:[#allocation2 + $0xd0] sm:$0xff] %v2298
        %2331 = vst [vmem:[#allocation2 + $0xd8] sm:$0xff] %v2299
        %2332 = vst [vmem:[#allocation2 + $0xe0] sm:$0xff] %v2300
        %2333 = vst [vmem:[#allocation2 + $0xe8] sm:$0xff] %v2301
        %2334 = vst [vmem:[#allocation2 + $0xf0] sm:$0xff] %v2302
        %2335 = vst [vmem:[#allocation2 + $0xf8] sm:$0xff] %v2303
        %s2336 = scalar_lea.vmem %s179, 48
        %v2337 = vld [vmem:[%s2336] sm:$0xff]
        %v2338 = vld [vmem:[%s2336 + $0x8] sm:$0xff]
        %v2339 = vld [vmem:[%s2336 + $0x18] sm:$0xff]
        %v2340 = vld [vmem:[%s2336 + $0x20] sm:$0xff]
        %v2341 = vld [vmem:[%s2336 + $0x30] sm:$0xff]
        %v2342 = vld [vmem:[%s2336 + $0x38] sm:$0xff]
        %v2343 = vld [vmem:[%s2336 + $0x48] sm:$0xff]
        %v2344 = vld [vmem:[%s2336 + $0x50] sm:$0xff]
        %v2345 = vld [vmem:[%s2336 + $0x60] sm:$0xff]
        %v2346 = vld [vmem:[%s2336 + $0x68] sm:$0xff]
        %v2347 = vld [vmem:[%s2336 + $0x78] sm:$0xff]
        %v2348 = vld [vmem:[%s2336 + $0x80] sm:$0xff]
        %v2349 = vld [vmem:[%s2336 + $0x90] sm:$0xff]
        %v2350 = vld [vmem:[%s2336 + $0x98] sm:$0xff]
        %v2351 = vld [vmem:[%s2336 + $0xa8] sm:$0xff]
        %v2352 = vld [vmem:[%s2336 + $0xb0] sm:$0xff]
        %v2353 = vld [vmem:[%s2336 + $0xc0] sm:$0xff]
        %v2354 = vld [vmem:[%s2336 + $0xc8] sm:$0xff]
        %v2355 = vld [vmem:[%s2336 + $0xd8] sm:$0xff]
        %v2356 = vld [vmem:[%s2336 + $0xe0] sm:$0xff]
        %v2357 = vld [vmem:[%s2336 + $0xf0] sm:$0xff]
        %v2358 = vld [vmem:[%s2336 + $0xf8] sm:$0xff]
        %v2359 = vld [vmem:[%s2336 + $0x108] sm:$0xff]
        %v2360 = vld [vmem:[%s2336 + $0x110] sm:$0xff]
        %v2361 = vld [vmem:[%s2336 + $0x120] sm:$0xff]
        %v2362 = vld [vmem:[%s2336 + $0x128] sm:$0xff]
        %v2363 = vld [vmem:[%s2336 + $0x138] sm:$0xff]
        %v2364 = vld [vmem:[%s2336 + $0x140] sm:$0xff]
        %v2365 = vld [vmem:[%s2336 + $0x150] sm:$0xff]
        %v2366 = vld [vmem:[%s2336 + $0x158] sm:$0xff]
        %v2367 = vld [vmem:[%s2336 + $0x168] sm:$0xff]
        %v2368 = vld [vmem:[%s2336 + $0x170] sm:$0xff]
        %s2369 = scalar_lea.vmem %s1, 768
        %v2370 = vld [vmem:[%s2369] sm:$0xff]
        %v2371 = vld [vmem:[%s2369 + $0x8] sm:$0xff]
        %v2372 = vld [vmem:[%s2369 + $0x10] sm:$0xff]
        %v2373 = vld [vmem:[%s2369 + $0x18] sm:$0xff]
        %v2374 = vld [vmem:[%s2369 + $0x20] sm:$0xff]
        %v2375 = vld [vmem:[%s2369 + $0x28] sm:$0xff]
        %v2376 = vld [vmem:[%s2369 + $0x30] sm:$0xff]
        %v2377 = vld [vmem:[%s2369 + $0x38] sm:$0xff]
        %v2378 = vld [vmem:[%s2369 + $0x40] sm:$0xff]
        %v2379 = vld [vmem:[%s2369 + $0x48] sm:$0xff]
        %v2380 = vld [vmem:[%s2369 + $0x50] sm:$0xff]
        %v2381 = vld [vmem:[%s2369 + $0x58] sm:$0xff]
        %v2382 = vld [vmem:[%s2369 + $0x60] sm:$0xff]
        %v2383 = vld [vmem:[%s2369 + $0x68] sm:$0xff]
        %v2384 = vld [vmem:[%s2369 + $0x70] sm:$0xff]
        %v2385 = vld [vmem:[%s2369 + $0x78] sm:$0xff]
        %2386 = vmatprep.subr.mxu0 0.0
        %2387 = vmatpush1.msra.mxu0 %v2385
        %2388 = vmatprep.subr.mxu0 0.0
        %2389 = vmatpush1.msra.mxu0 %v2384
        %2390 = vmatprep.subr.mxu0 0.0
        %2391 = vmatpush1.msra.mxu0 %v2383
        %2392 = vmatprep.subr.mxu0 0.0
        %2393 = vmatpush1.msra.mxu0 %v2382
        %2394 = vmatprep.subr.mxu0 0.0
        %2395 = vmatpush1.msra.mxu0 %v2381
        %2396 = vmatprep.subr.mxu0 0.0
        %2397 = vmatpush1.msra.mxu0 %v2380
        %2398 = vmatprep.subr.mxu0 0.0
        %2399 = vmatpush1.msra.mxu0 %v2379
        %2400 = vmatprep.subr.mxu0 0.0
        %2401 = vmatpush1.msra.mxu0 %v2378
        %2402 = vmatprep.subr.mxu0 0.0
        %2403 = vmatpush1.msra.mxu0 %v2377
        %2404 = vmatprep.subr.mxu0 0.0
        %2405 = vmatpush1.msra.mxu0 %v2376
        %2406 = vmatprep.subr.mxu0 0.0
        %2407 = vmatpush1.msra.mxu0 %v2375
        %2408 = vmatprep.subr.mxu0 0.0
        %2409 = vmatpush1.msra.mxu0 %v2374
        %2410 = vmatprep.subr.mxu0 0.0
        %2411 = vmatpush1.msra.mxu0 %v2373
        %2412 = vmatprep.subr.mxu0 0.0
        %2413 = vmatpush1.msra.mxu0 %v2372
        %2414 = vmatprep.subr.mxu0 0.0
        %2415 = vmatpush1.msra.mxu0 %v2371
        %2416 = vmatprep.subr.mxu0 0.0
        %2417 = vmatpush1.msra.mxu0 %v2370
        %2418 = vmatprep.subr.mxu0 0.0
        %2419 = vmatpush2.msra.mxu0 0.0
        %2420 = vmatprep.subr.mxu0 0.0
        %2421 = vmatpush2.msra.mxu0 0.0
        %2422 = vmatprep.subr.mxu0 0.0
        %2423 = vmatpush2.msra.mxu0 0.0
        %2424 = vmatprep.subr.mxu0 0.0
        %2425 = vmatpush2.msra.mxu0 0.0
        %2426 = vmatprep.subr.mxu0 0.0
        %2427 = vmatpush2.msra.mxu0 0.0
        %2428 = vmatprep.subr.mxu0 0.0
        %2429 = vmatpush2.msra.mxu0 0.0
        %2430 = vmatprep.subr.mxu0 0.0
        %2431 = vmatpush2.msra.mxu0 0.0
        %2432 = vmatprep.subr.mxu0 0.0
        %2433 = vmatpush2.msra.mxu0 0.0
        %2434 = vmatprep.subr.mxu0 0.0
        %2435 = vmatpush2.msra.mxu0 0.0
        %2436 = vmatprep.subr.mxu0 0.0
        %2437 = vmatpush2.msra.mxu0 0.0
        %2438 = vmatprep.subr.mxu0 0.0
        %2439 = vmatpush2.msra.mxu0 0.0
        %2440 = vmatprep.subr.mxu0 0.0
        %2441 = vmatpush2.msra.mxu0 0.0
        %2442 = vmatprep.subr.mxu0 0.0
        %2443 = vmatpush2.msra.mxu0 0.0
        %2444 = vmatprep.subr.mxu0 0.0
        %2445 = vmatpush2.msra.mxu0 0.0
        %2446 = vmatprep.subr.mxu0 0.0
        %2447 = vmatpush2.msra.mxu0 0.0
        %2448 = vmatprep.subr.mxu0 0.0
        %2449 = vmatpush2.msra.mxu0 0.0
        %2450 = vmatprep.mubr.f32.mxu0 0.0
        %2451 = vmatmul.mubr.f32.gmra.mxu0 %v2337
        %v2452 = vpop.f32.mrf.mxu0
        %v2453 = vadd.f32 0.0, %v2452
        %v2454 = vpop.f32.mrf.mxu0
        %2455 = vmatprep.mubr.f32.mxu0 0.0
        %2456 = vmatmul.mubr.f32.gmra.mxu0 %v2338
        %v2457 = vpop.f32.mrf.mxu0
        %v2458 = vadd.f32 0.0, %v2457
        %v2459 = vpop.f32.mrf.mxu0
        %2460 = vmatprep.mubr.f32.mxu0 0.0
        %2461 = vmatmul.mubr.f32.gmra.mxu0 %v2339
        %v2462 = vpop.f32.mrf.mxu0
        %v2463 = vadd.f32 0.0, %v2462
        %v2464 = vpop.f32.mrf.mxu0
        %2465 = vmatprep.mubr.f32.mxu0 0.0
        %2466 = vmatmul.mubr.f32.gmra.mxu0 %v2340
        %v2467 = vpop.f32.mrf.mxu0
        %v2468 = vadd.f32 0.0, %v2467
        %v2469 = vpop.f32.mrf.mxu0
        %2470 = vmatprep.mubr.f32.mxu0 0.0
        %2471 = vmatmul.mubr.f32.gmra.mxu0 %v2341
        %v2472 = vpop.f32.mrf.mxu0
        %v2473 = vadd.f32 0.0, %v2472
        %v2474 = vpop.f32.mrf.mxu0
        %2475 = vmatprep.mubr.f32.mxu0 0.0
        %2476 = vmatmul.mubr.f32.gmra.mxu0 %v2342
        %v2477 = vpop.f32.mrf.mxu0
        %v2478 = vadd.f32 0.0, %v2477
        %v2479 = vpop.f32.mrf.mxu0
        %2480 = vmatprep.mubr.f32.mxu0 0.0
        %2481 = vmatmul.mubr.f32.gmra.mxu0 %v2343
        %v2482 = vpop.f32.mrf.mxu0
        %v2483 = vadd.f32 0.0, %v2482
        %v2484 = vpop.f32.mrf.mxu0
        %2485 = vmatprep.mubr.f32.mxu0 0.0
        %2486 = vmatmul.mubr.f32.gmra.mxu0 %v2344
        %v2487 = vpop.f32.mrf.mxu0
        %v2488 = vadd.f32 0.0, %v2487
        %v2489 = vpop.f32.mrf.mxu0
        %2490 = vmatprep.mubr.f32.mxu0 0.0
        %2491 = vmatmul.mubr.f32.gmra.mxu0 %v2345
        %v2492 = vpop.f32.mrf.mxu0
        %v2493 = vadd.f32 0.0, %v2492
        %v2494 = vpop.f32.mrf.mxu0
        %2495 = vmatprep.mubr.f32.mxu0 0.0
        %2496 = vmatmul.mubr.f32.gmra.mxu0 %v2346
        %v2497 = vpop.f32.mrf.mxu0
        %v2498 = vadd.f32 0.0, %v2497
        %v2499 = vpop.f32.mrf.mxu0
        %2500 = vmatprep.mubr.f32.mxu0 0.0
        %2501 = vmatmul.mubr.f32.gmra.mxu0 %v2347
        %v2502 = vpop.f32.mrf.mxu0
        %v2503 = vadd.f32 0.0, %v2502
        %v2504 = vpop.f32.mrf.mxu0
        %2505 = vmatprep.mubr.f32.mxu0 0.0
        %2506 = vmatmul.mubr.f32.gmra.mxu0 %v2348
        %v2507 = vpop.f32.mrf.mxu0
        %v2508 = vadd.f32 0.0, %v2507
        %v2509 = vpop.f32.mrf.mxu0
        %2510 = vmatprep.mubr.f32.mxu0 0.0
        %2511 = vmatmul.mubr.f32.gmra.mxu0 %v2349
        %v2512 = vpop.f32.mrf.mxu0
        %v2513 = vadd.f32 0.0, %v2512
        %v2514 = vpop.f32.mrf.mxu0
        %2515 = vmatprep.mubr.f32.mxu0 0.0
        %2516 = vmatmul.mubr.f32.gmra.mxu0 %v2350
        %v2517 = vpop.f32.mrf.mxu0
        %v2518 = vadd.f32 0.0, %v2517
        %v2519 = vpop.f32.mrf.mxu0
        %2520 = vmatprep.mubr.f32.mxu0 0.0
        %2521 = vmatmul.mubr.f32.gmra.mxu0 %v2351
        %v2522 = vpop.f32.mrf.mxu0
        %v2523 = vadd.f32 0.0, %v2522
        %v2524 = vpop.f32.mrf.mxu0
        %2525 = vmatprep.mubr.f32.mxu0 0.0
        %2526 = vmatmul.mubr.f32.gmra.mxu0 %v2352
        %v2527 = vpop.f32.mrf.mxu0
        %v2528 = vadd.f32 0.0, %v2527
        %v2529 = vpop.f32.mrf.mxu0
        %2530 = vmatprep.mubr.f32.mxu0 0.0
        %2531 = vmatmul.mubr.f32.gmra.mxu0 %v2353
        %v2532 = vpop.f32.mrf.mxu0
        %v2533 = vadd.f32 0.0, %v2532
        %v2534 = vpop.f32.mrf.mxu0
        %2535 = vmatprep.mubr.f32.mxu0 0.0
        %2536 = vmatmul.mubr.f32.gmra.mxu0 %v2354
        %v2537 = vpop.f32.mrf.mxu0
        %v2538 = vadd.f32 0.0, %v2537
        %v2539 = vpop.f32.mrf.mxu0
        %2540 = vmatprep.mubr.f32.mxu0 0.0
        %2541 = vmatmul.mubr.f32.gmra.mxu0 %v2355
        %v2542 = vpop.f32.mrf.mxu0
        %v2543 = vadd.f32 0.0, %v2542
        %v2544 = vpop.f32.mrf.mxu0
        %2545 = vmatprep.mubr.f32.mxu0 0.0
        %2546 = vmatmul.mubr.f32.gmra.mxu0 %v2356
        %v2547 = vpop.f32.mrf.mxu0
        %v2548 = vadd.f32 0.0, %v2547
        %v2549 = vpop.f32.mrf.mxu0
        %2550 = vmatprep.mubr.f32.mxu0 0.0
        %2551 = vmatmul.mubr.f32.gmra.mxu0 %v2357
        %v2552 = vpop.f32.mrf.mxu0
        %v2553 = vadd.f32 0.0, %v2552
        %v2554 = vpop.f32.mrf.mxu0
        %2555 = vmatprep.mubr.f32.mxu0 0.0
        %2556 = vmatmul.mubr.f32.gmra.mxu0 %v2358
        %v2557 = vpop.f32.mrf.mxu0
        %v2558 = vadd.f32 0.0, %v2557
        %v2559 = vpop.f32.mrf.mxu0
        %2560 = vmatprep.mubr.f32.mxu0 0.0
        %2561 = vmatmul.mubr.f32.gmra.mxu0 %v2359
        %v2562 = vpop.f32.mrf.mxu0
        %v2563 = vadd.f32 0.0, %v2562
        %v2564 = vpop.f32.mrf.mxu0
        %2565 = vmatprep.mubr.f32.mxu0 0.0
        %2566 = vmatmul.mubr.f32.gmra.mxu0 %v2360
        %v2567 = vpop.f32.mrf.mxu0
        %v2568 = vadd.f32 0.0, %v2567
        %v2569 = vpop.f32.mrf.mxu0
        %2570 = vmatprep.mubr.f32.mxu0 0.0
        %2571 = vmatmul.mubr.f32.gmra.mxu0 %v2361
        %v2572 = vpop.f32.mrf.mxu0
        %v2573 = vadd.f32 0.0, %v2572
        %v2574 = vpop.f32.mrf.mxu0
        %2575 = vmatprep.mubr.f32.mxu0 0.0
        %2576 = vmatmul.mubr.f32.gmra.mxu0 %v2362
        %v2577 = vpop.f32.mrf.mxu0
        %v2578 = vadd.f32 0.0, %v2577
        %v2579 = vpop.f32.mrf.mxu0
        %2580 = vmatprep.mubr.f32.mxu0 0.0
        %2581 = vmatmul.mubr.f32.gmra.mxu0 %v2363
        %v2582 = vpop.f32.mrf.mxu0
        %v2583 = vadd.f32 0.0, %v2582
        %v2584 = vpop.f32.mrf.mxu0
        %2585 = vmatprep.mubr.f32.mxu0 0.0
        %2586 = vmatmul.mubr.f32.gmra.mxu0 %v2364
        %v2587 = vpop.f32.mrf.mxu0
        %v2588 = vadd.f32 0.0, %v2587
        %v2589 = vpop.f32.mrf.mxu0
        %2590 = vmatprep.mubr.f32.mxu0 0.0
        %2591 = vmatmul.mubr.f32.gmra.mxu0 %v2365
        %v2592 = vpop.f32.mrf.mxu0
        %v2593 = vadd.f32 0.0, %v2592
        %v2594 = vpop.f32.mrf.mxu0
        %2595 = vmatprep.mubr.f32.mxu0 0.0
        %2596 = vmatmul.mubr.f32.gmra.mxu0 %v2366
        %v2597 = vpop.f32.mrf.mxu0
        %v2598 = vadd.f32 0.0, %v2597
        %v2599 = vpop.f32.mrf.mxu0
        %2600 = vmatprep.mubr.f32.mxu0 0.0
        %2601 = vmatmul.mubr.f32.gmra.mxu0 %v2367
        %v2602 = vpop.f32.mrf.mxu0
        %v2603 = vadd.f32 0.0, %v2602
        %v2604 = vpop.f32.mrf.mxu0
        %2605 = vmatprep.mubr.f32.mxu0 0.0
        %2606 = vmatmul.mubr.f32.gmra.mxu0 %v2368
        %v2607 = vpop.f32.mrf.mxu0
        %v2608 = vadd.f32 0.0, %v2607
        %v2609 = vpop.f32.mrf.mxu0
        %2610 = vdwg.mxu0
        %v2611 = vld [vmem:[#allocation2] sm:$0xff]
        %v2612 = vld [vmem:[#allocation2 + $0x8] sm:$0xff]
        %v2613 = vld [vmem:[#allocation2 + $0x10] sm:$0xff]
        %v2614 = vld [vmem:[#allocation2 + $0x18] sm:$0xff]
        %v2615 = vld [vmem:[#allocation2 + $0x20] sm:$0xff]
        %v2616 = vld [vmem:[#allocation2 + $0x28] sm:$0xff]
        %v2617 = vld [vmem:[#allocation2 + $0x30] sm:$0xff]
        %v2618 = vld [vmem:[#allocation2 + $0x38] sm:$0xff]
        %v2619 = vld [vmem:[#allocation2 + $0x40] sm:$0xff]
        %v2620 = vld [vmem:[#allocation2 + $0x48] sm:$0xff]
        %v2621 = vld [vmem:[#allocation2 + $0x50] sm:$0xff]
        %v2622 = vld [vmem:[#allocation2 + $0x58] sm:$0xff]
        %v2623 = vld [vmem:[#allocation2 + $0x60] sm:$0xff]
        %v2624 = vld [vmem:[#allocation2 + $0x68] sm:$0xff]
        %v2625 = vld [vmem:[#allocation2 + $0x70] sm:$0xff]
        %v2626 = vld [vmem:[#allocation2 + $0x78] sm:$0xff]
        %v2627 = vld [vmem:[#allocation2 + $0x80] sm:$0xff]
        %v2628 = vld [vmem:[#allocation2 + $0x88] sm:$0xff]
        %v2629 = vld [vmem:[#allocation2 + $0x90] sm:$0xff]
        %v2630 = vld [vmem:[#allocation2 + $0x98] sm:$0xff]
        %v2631 = vld [vmem:[#allocation2 + $0xa0] sm:$0xff]
        %v2632 = vld [vmem:[#allocation2 + $0xa8] sm:$0xff]
        %v2633 = vld [vmem:[#allocation2 + $0xb0] sm:$0xff]
        %v2634 = vld [vmem:[#allocation2 + $0xb8] sm:$0xff]
        %v2635 = vld [vmem:[#allocation2 + $0xc0] sm:$0xff]
        %v2636 = vld [vmem:[#allocation2 + $0xc8] sm:$0xff]
        %v2637 = vld [vmem:[#allocation2 + $0xd0] sm:$0xff]
        %v2638 = vld [vmem:[#allocation2 + $0xd8] sm:$0xff]
        %v2639 = vld [vmem:[#allocation2 + $0xe0] sm:$0xff]
        %v2640 = vld [vmem:[#allocation2 + $0xe8] sm:$0xff]
        %v2641 = vld [vmem:[#allocation2 + $0xf0] sm:$0xff]
        %v2642 = vld [vmem:[#allocation2 + $0xf8] sm:$0xff]
        %v2643 = vadd.f32 %v2611, %v2453
        %v2644 = vadd.f32 %v2612, %v2458
        %v2645 = vadd.f32 %v2613, %v2463
        %v2646 = vadd.f32 %v2614, %v2468
        %v2647 = vadd.f32 %v2615, %v2473
        %v2648 = vadd.f32 %v2616, %v2478
        %v2649 = vadd.f32 %v2617, %v2483
        %v2650 = vadd.f32 %v2618, %v2488
        %v2651 = vadd.f32 %v2619, %v2493
        %v2652 = vadd.f32 %v2620, %v2498
        %v2653 = vadd.f32 %v2621, %v2503
        %v2654 = vadd.f32 %v2622, %v2508
        %v2655 = vadd.f32 %v2623, %v2513
        %v2656 = vadd.f32 %v2624, %v2518
        %v2657 = vadd.f32 %v2625, %v2523
        %v2658 = vadd.f32 %v2626, %v2528
        %v2659 = vadd.f32 %v2627, %v2533
        %v2660 = vadd.f32 %v2628, %v2538
        %v2661 = vadd.f32 %v2629, %v2543
        %v2662 = vadd.f32 %v2630, %v2548
        %v2663 = vadd.f32 %v2631, %v2553
        %v2664 = vadd.f32 %v2632, %v2558
        %v2665 = vadd.f32 %v2633, %v2563
        %v2666 = vadd.f32 %v2634, %v2568
        %v2667 = vadd.f32 %v2635, %v2573
        %v2668 = vadd.f32 %v2636, %v2578
        %v2669 = vadd.f32 %v2637, %v2583
        %v2670 = vadd.f32 %v2638, %v2588
        %v2671 = vadd.f32 %v2639, %v2593
        %v2672 = vadd.f32 %v2640, %v2598
        %v2673 = vadd.f32 %v2641, %v2603
        %v2674 = vadd.f32 %v2642, %v2608
        %2675 = vst [vmem:[#allocation2] sm:$0xff] %v2643
        %2676 = vst [vmem:[#allocation2 + $0x8] sm:$0xff] %v2644
        %2677 = vst [vmem:[#allocation2 + $0x10] sm:$0xff] %v2645
        %2678 = vst [vmem:[#allocation2 + $0x18] sm:$0xff] %v2646
        %2679 = vst [vmem:[#allocation2 + $0x20] sm:$0xff] %v2647
        %2680 = vst [vmem:[#allocation2 + $0x28] sm:$0xff] %v2648
        %2681 = vst [vmem:[#allocation2 + $0x30] sm:$0xff] %v2649
        %2682 = vst [vmem:[#allocation2 + $0x38] sm:$0xff] %v2650
        %2683 = vst [vmem:[#allocation2 + $0x40] sm:$0xff] %v2651
        %2684 = vst [vmem:[#allocation2 + $0x48] sm:$0xff] %v2652
        %2685 = vst [vmem:[#allocation2 + $0x50] sm:$0xff] %v2653
        %2686 = vst [vmem:[#allocation2 + $0x58] sm:$0xff] %v2654
        %2687 = vst [vmem:[#allocation2 + $0x60] sm:$0xff] %v2655
        %2688 = vst [vmem:[#allocation2 + $0x68] sm:$0xff] %v2656
        %2689 = vst [vmem:[#allocation2 + $0x70] sm:$0xff] %v2657
        %2690 = vst [vmem:[#allocation2 + $0x78] sm:$0xff] %v2658
        %2691 = vst [vmem:[#allocation2 + $0x80] sm:$0xff] %v2659
        %2692 = vst [vmem:[#allocation2 + $0x88] sm:$0xff] %v2660
        %2693 = vst [vmem:[#allocation2 + $0x90] sm:$0xff] %v2661
        %2694 = vst [vmem:[#allocation2 + $0x98] sm:$0xff] %v2662
        %2695 = vst [vmem:[#allocation2 + $0xa0] sm:$0xff] %v2663
        %2696 = vst [vmem:[#allocation2 + $0xa8] sm:$0xff] %v2664
        %2697 = vst [vmem:[#allocation2 + $0xb0] sm:$0xff] %v2665
        %2698 = vst [vmem:[#allocation2 + $0xb8] sm:$0xff] %v2666
        %2699 = vst [vmem:[#allocation2 + $0xc0] sm:$0xff] %v2667
        %2700 = vst [vmem:[#allocation2 + $0xc8] sm:$0xff] %v2668
        %2701 = vst [vmem:[#allocation2 + $0xd0] sm:$0xff] %v2669
        %2702 = vst [vmem:[#allocation2 + $0xd8] sm:$0xff] %v2670
        %2703 = vst [vmem:[#allocation2 + $0xe0] sm:$0xff] %v2671
        %2704 = vst [vmem:[#allocation2 + $0xe8] sm:$0xff] %v2672
        %2705 = vst [vmem:[#allocation2 + $0xf0] sm:$0xff] %v2673
        %2706 = vst [vmem:[#allocation2 + $0xf8] sm:$0xff] %v2674
        %v2707 = vld [vmem:[%s2336 + $0x1] sm:$0xff]
        %v2708 = vld [vmem:[%s2336 + $0x9] sm:$0xff]
        %v2709 = vld [vmem:[%s2336 + $0x19] sm:$0xff]
        %v2710 = vld [vmem:[%s2336 + $0x21] sm:$0xff]
        %v2711 = vld [vmem:[%s2336 + $0x31] sm:$0xff]
        %v2712 = vld [vmem:[%s2336 + $0x39] sm:$0xff]
        %v2713 = vld [vmem:[%s2336 + $0x49] sm:$0xff]
        %v2714 = vld [vmem:[%s2336 + $0x51] sm:$0xff]
        %v2715 = vld [vmem:[%s2336 + $0x61] sm:$0xff]
        %v2716 = vld [vmem:[%s2336 + $0x69] sm:$0xff]
        %v2717 = vld [vmem:[%s2336 + $0x79] sm:$0xff]
        %v2718 = vld [vmem:[%s2336 + $0x81] sm:$0xff]
        %v2719 = vld [vmem:[%s2336 + $0x91] sm:$0xff]
        %v2720 = vld [vmem:[%s2336 + $0x99] sm:$0xff]
        %v2721 = vld [vmem:[%s2336 + $0xa9] sm:$0xff]
        %v2722 = vld [vmem:[%s2336 + $0xb1] sm:$0xff]
        %v2723 = vld [vmem:[%s2336 + $0xc1] sm:$0xff]
        %v2724 = vld [vmem:[%s2336 + $0xc9] sm:$0xff]
        %v2725 = vld [vmem:[%s2336 + $0xd9] sm:$0xff]
        %v2726 = vld [vmem:[%s2336 + $0xe1] sm:$0xff]
        %v2727 = vld [vmem:[%s2336 + $0xf1] sm:$0xff]
        %v2728 = vld [vmem:[%s2336 + $0xf9] sm:$0xff]
        %v2729 = vld [vmem:[%s2336 + $0x109] sm:$0xff]
        %v2730 = vld [vmem:[%s2336 + $0x111] sm:$0xff]
        %v2731 = vld [vmem:[%s2336 + $0x121] sm:$0xff]
        %v2732 = vld [vmem:[%s2336 + $0x129] sm:$0xff]
        %v2733 = vld [vmem:[%s2336 + $0x139] sm:$0xff]
        %v2734 = vld [vmem:[%s2336 + $0x141] sm:$0xff]
        %v2735 = vld [vmem:[%s2336 + $0x151] sm:$0xff]
        %v2736 = vld [vmem:[%s2336 + $0x159] sm:$0xff]
        %v2737 = vld [vmem:[%s2336 + $0x169] sm:$0xff]
        %v2738 = vld [vmem:[%s2336 + $0x171] sm:$0xff]
        %s2739 = scalar_lea.vmem %s1, 896
        %v2740 = vld [vmem:[%s2739] sm:$0xff]
        %v2741 = vld [vmem:[%s2739 + $0x8] sm:$0xff]
        %v2742 = vld [vmem:[%s2739 + $0x10] sm:$0xff]
        %v2743 = vld [vmem:[%s2739 + $0x18] sm:$0xff]
        %v2744 = vld [vmem:[%s2739 + $0x20] sm:$0xff]
        %v2745 = vld [vmem:[%s2739 + $0x28] sm:$0xff]
        %v2746 = vld [vmem:[%s2739 + $0x30] sm:$0xff]
        %v2747 = vld [vmem:[%s2739 + $0x38] sm:$0xff]
        %v2748 = vld [vmem:[%s2739 + $0x40] sm:$0xff]
        %v2749 = vld [vmem:[%s2739 + $0x48] sm:$0xff]
        %v2750 = vld [vmem:[%s2739 + $0x50] sm:$0xff]
        %v2751 = vld [vmem:[%s2739 + $0x58] sm:$0xff]
        %v2752 = vld [vmem:[%s2739 + $0x60] sm:$0xff]
        %v2753 = vld [vmem:[%s2739 + $0x68] sm:$0xff]
        %v2754 = vld [vmem:[%s2739 + $0x70] sm:$0xff]
        %v2755 = vld [vmem:[%s2739 + $0x78] sm:$0xff]
        %2756 = vmatprep.subr.mxu0 0.0
        %2757 = vmatpush1.msra.mxu0 %v2755
        %2758 = vmatprep.subr.mxu0 0.0
        %2759 = vmatpush1.msra.mxu0 %v2754
        %2760 = vmatprep.subr.mxu0 0.0
        %2761 = vmatpush1.msra.mxu0 %v2753
        %2762 = vmatprep.subr.mxu0 0.0
        %2763 = vmatpush1.msra.mxu0 %v2752
        %2764 = vmatprep.subr.mxu0 0.0
        %2765 = vmatpush1.msra.mxu0 %v2751
        %2766 = vmatprep.subr.mxu0 0.0
        %2767 = vmatpush1.msra.mxu0 %v2750
        %2768 = vmatprep.subr.mxu0 0.0
        %2769 = vmatpush1.msra.mxu0 %v2749
        %2770 = vmatprep.subr.mxu0 0.0
        %2771 = vmatpush1.msra.mxu0 %v2748
        %2772 = vmatprep.subr.mxu0 0.0
        %2773 = vmatpush1.msra.mxu0 %v2747
        %2774 = vmatprep.subr.mxu0 0.0
        %2775 = vmatpush1.msra.mxu0 %v2746
        %2776 = vmatprep.subr.mxu0 0.0
        %2777 = vmatpush1.msra.mxu0 %v2745
        %2778 = vmatprep.subr.mxu0 0.0
        %2779 = vmatpush1.msra.mxu0 %v2744
        %2780 = vmatprep.subr.mxu0 0.0
        %2781 = vmatpush1.msra.mxu0 %v2743
        %2782 = vmatprep.subr.mxu0 0.0
        %2783 = vmatpush1.msra.mxu0 %v2742
        %2784 = vmatprep.subr.mxu0 0.0
        %2785 = vmatpush1.msra.mxu0 %v2741
        %2786 = vmatprep.subr.mxu0 0.0
        %2787 = vmatpush1.msra.mxu0 %v2740
        %2788 = vmatprep.subr.mxu0 0.0
        %2789 = vmatpush2.msra.mxu0 0.0
        %2790 = vmatprep.subr.mxu0 0.0
        %2791 = vmatpush2.msra.mxu0 0.0
        %2792 = vmatprep.subr.mxu0 0.0
        %2793 = vmatpush2.msra.mxu0 0.0
        %2794 = vmatprep.subr.mxu0 0.0
        %2795 = vmatpush2.msra.mxu0 0.0
        %2796 = vmatprep.subr.mxu0 0.0
        %2797 = vmatpush2.msra.mxu0 0.0
        %2798 = vmatprep.subr.mxu0 0.0
        %2799 = vmatpush2.msra.mxu0 0.0
        %2800 = vmatprep.subr.mxu0 0.0
        %2801 = vmatpush2.msra.mxu0 0.0
        %2802 = vmatprep.subr.mxu0 0.0
        %2803 = vmatpush2.msra.mxu0 0.0
        %2804 = vmatprep.subr.mxu0 0.0
        %2805 = vmatpush2.msra.mxu0 0.0
        %2806 = vmatprep.subr.mxu0 0.0
        %2807 = vmatpush2.msra.mxu0 0.0
        %2808 = vmatprep.subr.mxu0 0.0
        %2809 = vmatpush2.msra.mxu0 0.0
        %2810 = vmatprep.subr.mxu0 0.0
        %2811 = vmatpush2.msra.mxu0 0.0
        %2812 = vmatprep.subr.mxu0 0.0
        %2813 = vmatpush2.msra.mxu0 0.0
        %2814 = vmatprep.subr.mxu0 0.0
        %2815 = vmatpush2.msra.mxu0 0.0
        %2816 = vmatprep.subr.mxu0 0.0
        %2817 = vmatpush2.msra.mxu0 0.0
        %2818 = vmatprep.subr.mxu0 0.0
        %2819 = vmatpush2.msra.mxu0 0.0
        %2820 = vmatprep.mubr.f32.mxu0 0.0
        %2821 = vmatmul.mubr.f32.gmra.mxu0 %v2707
        %v2822 = vpop.f32.mrf.mxu0
        %v2823 = vadd.f32 0.0, %v2822
        %v2824 = vpop.f32.mrf.mxu0
        %2825 = vmatprep.mubr.f32.mxu0 0.0
        %2826 = vmatmul.mubr.f32.gmra.mxu0 %v2708
        %v2827 = vpop.f32.mrf.mxu0
        %v2828 = vadd.f32 0.0, %v2827
        %v2829 = vpop.f32.mrf.mxu0
        %2830 = vmatprep.mubr.f32.mxu0 0.0
        %2831 = vmatmul.mubr.f32.gmra.mxu0 %v2709
        %v2832 = vpop.f32.mrf.mxu0
        %v2833 = vadd.f32 0.0, %v2832
        %v2834 = vpop.f32.mrf.mxu0
        %2835 = vmatprep.mubr.f32.mxu0 0.0
        %2836 = vmatmul.mubr.f32.gmra.mxu0 %v2710
        %v2837 = vpop.f32.mrf.mxu0
        %v2838 = vadd.f32 0.0, %v2837
        %v2839 = vpop.f32.mrf.mxu0
        %2840 = vmatprep.mubr.f32.mxu0 0.0
        %2841 = vmatmul.mubr.f32.gmra.mxu0 %v2711
        %v2842 = vpop.f32.mrf.mxu0
        %v2843 = vadd.f32 0.0, %v2842
        %v2844 = vpop.f32.mrf.mxu0
        %2845 = vmatprep.mubr.f32.mxu0 0.0
        %2846 = vmatmul.mubr.f32.gmra.mxu0 %v2712
        %v2847 = vpop.f32.mrf.mxu0
        %v2848 = vadd.f32 0.0, %v2847
        %v2849 = vpop.f32.mrf.mxu0
        %2850 = vmatprep.mubr.f32.mxu0 0.0
        %2851 = vmatmul.mubr.f32.gmra.mxu0 %v2713
        %v2852 = vpop.f32.mrf.mxu0
        %v2853 = vadd.f32 0.0, %v2852
        %v2854 = vpop.f32.mrf.mxu0
        %2855 = vmatprep.mubr.f32.mxu0 0.0
        %2856 = vmatmul.mubr.f32.gmra.mxu0 %v2714
        %v2857 = vpop.f32.mrf.mxu0
        %v2858 = vadd.f32 0.0, %v2857
        %v2859 = vpop.f32.mrf.mxu0
        %2860 = vmatprep.mubr.f32.mxu0 0.0
        %2861 = vmatmul.mubr.f32.gmra.mxu0 %v2715
        %v2862 = vpop.f32.mrf.mxu0
        %v2863 = vadd.f32 0.0, %v2862
        %v2864 = vpop.f32.mrf.mxu0
        %2865 = vmatprep.mubr.f32.mxu0 0.0
        %2866 = vmatmul.mubr.f32.gmra.mxu0 %v2716
        %v2867 = vpop.f32.mrf.mxu0
        %v2868 = vadd.f32 0.0, %v2867
        %v2869 = vpop.f32.mrf.mxu0
        %2870 = vmatprep.mubr.f32.mxu0 0.0
        %2871 = vmatmul.mubr.f32.gmra.mxu0 %v2717
        %v2872 = vpop.f32.mrf.mxu0
        %v2873 = vadd.f32 0.0, %v2872
        %v2874 = vpop.f32.mrf.mxu0
        %2875 = vmatprep.mubr.f32.mxu0 0.0
        %2876 = vmatmul.mubr.f32.gmra.mxu0 %v2718
        %v2877 = vpop.f32.mrf.mxu0
        %v2878 = vadd.f32 0.0, %v2877
        %v2879 = vpop.f32.mrf.mxu0
        %2880 = vmatprep.mubr.f32.mxu0 0.0
        %2881 = vmatmul.mubr.f32.gmra.mxu0 %v2719
        %v2882 = vpop.f32.mrf.mxu0
        %v2883 = vadd.f32 0.0, %v2882
        %v2884 = vpop.f32.mrf.mxu0
        %2885 = vmatprep.mubr.f32.mxu0 0.0
        %2886 = vmatmul.mubr.f32.gmra.mxu0 %v2720
        %v2887 = vpop.f32.mrf.mxu0
        %v2888 = vadd.f32 0.0, %v2887
        %v2889 = vpop.f32.mrf.mxu0
        %2890 = vmatprep.mubr.f32.mxu0 0.0
        %2891 = vmatmul.mubr.f32.gmra.mxu0 %v2721
        %v2892 = vpop.f32.mrf.mxu0
        %v2893 = vadd.f32 0.0, %v2892
        %v2894 = vpop.f32.mrf.mxu0
        %2895 = vmatprep.mubr.f32.mxu0 0.0
        %2896 = vmatmul.mubr.f32.gmra.mxu0 %v2722
        %v2897 = vpop.f32.mrf.mxu0
        %v2898 = vadd.f32 0.0, %v2897
        %v2899 = vpop.f32.mrf.mxu0
        %2900 = vmatprep.mubr.f32.mxu0 0.0
        %2901 = vmatmul.mubr.f32.gmra.mxu0 %v2723
        %v2902 = vpop.f32.mrf.mxu0
        %v2903 = vadd.f32 0.0, %v2902
        %v2904 = vpop.f32.mrf.mxu0
        %2905 = vmatprep.mubr.f32.mxu0 0.0
        %2906 = vmatmul.mubr.f32.gmra.mxu0 %v2724
        %v2907 = vpop.f32.mrf.mxu0
        %v2908 = vadd.f32 0.0, %v2907
        %v2909 = vpop.f32.mrf.mxu0
        %2910 = vmatprep.mubr.f32.mxu0 0.0
        %2911 = vmatmul.mubr.f32.gmra.mxu0 %v2725
        %v2912 = vpop.f32.mrf.mxu0
        %v2913 = vadd.f32 0.0, %v2912
        %v2914 = vpop.f32.mrf.mxu0
        %2915 = vmatprep.mubr.f32.mxu0 0.0
        %2916 = vmatmul.mubr.f32.gmra.mxu0 %v2726
        %v2917 = vpop.f32.mrf.mxu0
        %v2918 = vadd.f32 0.0, %v2917
        %v2919 = vpop.f32.mrf.mxu0
        %2920 = vmatprep.mubr.f32.mxu0 0.0
        %2921 = vmatmul.mubr.f32.gmra.mxu0 %v2727
        %v2922 = vpop.f32.mrf.mxu0
        %v2923 = vadd.f32 0.0, %v2922
        %v2924 = vpop.f32.mrf.mxu0
        %2925 = vmatprep.mubr.f32.mxu0 0.0
        %2926 = vmatmul.mubr.f32.gmra.mxu0 %v2728
        %v2927 = vpop.f32.mrf.mxu0
        %v2928 = vadd.f32 0.0, %v2927
        %v2929 = vpop.f32.mrf.mxu0
        %2930 = vmatprep.mubr.f32.mxu0 0.0
        %2931 = vmatmul.mubr.f32.gmra.mxu0 %v2729
        %v2932 = vpop.f32.mrf.mxu0
        %v2933 = vadd.f32 0.0, %v2932
        %v2934 = vpop.f32.mrf.mxu0
        %2935 = vmatprep.mubr.f32.mxu0 0.0
        %2936 = vmatmul.mubr.f32.gmra.mxu0 %v2730
        %v2937 = vpop.f32.mrf.mxu0
        %v2938 = vadd.f32 0.0, %v2937
        %v2939 = vpop.f32.mrf.mxu0
        %2940 = vmatprep.mubr.f32.mxu0 0.0
        %2941 = vmatmul.mubr.f32.gmra.mxu0 %v2731
        %v2942 = vpop.f32.mrf.mxu0
        %v2943 = vadd.f32 0.0, %v2942
        %v2944 = vpop.f32.mrf.mxu0
        %2945 = vmatprep.mubr.f32.mxu0 0.0
        %2946 = vmatmul.mubr.f32.gmra.mxu0 %v2732
        %v2947 = vpop.f32.mrf.mxu0
        %v2948 = vadd.f32 0.0, %v2947
        %v2949 = vpop.f32.mrf.mxu0
        %2950 = vmatprep.mubr.f32.mxu0 0.0
        %2951 = vmatmul.mubr.f32.gmra.mxu0 %v2733
        %v2952 = vpop.f32.mrf.mxu0
        %v2953 = vadd.f32 0.0, %v2952
        %v2954 = vpop.f32.mrf.mxu0
        %2955 = vmatprep.mubr.f32.mxu0 0.0
        %2956 = vmatmul.mubr.f32.gmra.mxu0 %v2734
        %v2957 = vpop.f32.mrf.mxu0
        %v2958 = vadd.f32 0.0, %v2957
        %v2959 = vpop.f32.mrf.mxu0
        %2960 = vmatprep.mubr.f32.mxu0 0.0
        %2961 = vmatmul.mubr.f32.gmra.mxu0 %v2735
        %v2962 = vpop.f32.mrf.mxu0
        %v2963 = vadd.f32 0.0, %v2962
        %v2964 = vpop.f32.mrf.mxu0
        %2965 = vmatprep.mubr.f32.mxu0 0.0
        %2966 = vmatmul.mubr.f32.gmra.mxu0 %v2736
        %v2967 = vpop.f32.mrf.mxu0
        %v2968 = vadd.f32 0.0, %v2967
        %v2969 = vpop.f32.mrf.mxu0
        %2970 = vmatprep.mubr.f32.mxu0 0.0
        %2971 = vmatmul.mubr.f32.gmra.mxu0 %v2737
        %v2972 = vpop.f32.mrf.mxu0
        %v2973 = vadd.f32 0.0, %v2972
        %v2974 = vpop.f32.mrf.mxu0
        %2975 = vmatprep.mubr.f32.mxu0 0.0
        %2976 = vmatmul.mubr.f32.gmra.mxu0 %v2738
        %v2977 = vpop.f32.mrf.mxu0
        %v2978 = vadd.f32 0.0, %v2977
        %v2979 = vpop.f32.mrf.mxu0
        %2980 = vdwg.mxu0
        %v2981 = vld [vmem:[#allocation2] sm:$0xff]
        %v2982 = vld [vmem:[#allocation2 + $0x8] sm:$0xff]
        %v2983 = vld [vmem:[#allocation2 + $0x10] sm:$0xff]
        %v2984 = vld [vmem:[#allocation2 + $0x18] sm:$0xff]
        %v2985 = vld [vmem:[#allocation2 + $0x20] sm:$0xff]
        %v2986 = vld [vmem:[#allocation2 + $0x28] sm:$0xff]
        %v2987 = vld [vmem:[#allocation2 + $0x30] sm:$0xff]
        %v2988 = vld [vmem:[#allocation2 + $0x38] sm:$0xff]
        %v2989 = vld [vmem:[#allocation2 + $0x40] sm:$0xff]
        %v2990 = vld [vmem:[#allocation2 + $0x48] sm:$0xff]
        %v2991 = vld [vmem:[#allocation2 + $0x50] sm:$0xff]
        %v2992 = vld [vmem:[#allocation2 + $0x58] sm:$0xff]
        %v2993 = vld [vmem:[#allocation2 + $0x60] sm:$0xff]
        %v2994 = vld [vmem:[#allocation2 + $0x68] sm:$0xff]
        %v2995 = vld [vmem:[#allocation2 + $0x70] sm:$0xff]
        %v2996 = vld [vmem:[#allocation2 + $0x78] sm:$0xff]
        %v2997 = vld [vmem:[#allocation2 + $0x80] sm:$0xff]
        %v2998 = vld [vmem:[#allocation2 + $0x88] sm:$0xff]
        %v2999 = vld [vmem:[#allocation2 + $0x90] sm:$0xff]
        %v3000 = vld [vmem:[#allocation2 + $0x98] sm:$0xff]
        %v3001 = vld [vmem:[#allocation2 + $0xa0] sm:$0xff]
        %v3002 = vld [vmem:[#allocation2 + $0xa8] sm:$0xff]
        %v3003 = vld [vmem:[#allocation2 + $0xb0] sm:$0xff]
        %v3004 = vld [vmem:[#allocation2 + $0xb8] sm:$0xff]
        %v3005 = vld [vmem:[#allocation2 + $0xc0] sm:$0xff]
        %v3006 = vld [vmem:[#allocation2 + $0xc8] sm:$0xff]
        %v3007 = vld [vmem:[#allocation2 + $0xd0] sm:$0xff]
        %v3008 = vld [vmem:[#allocation2 + $0xd8] sm:$0xff]
        %v3009 = vld [vmem:[#allocation2 + $0xe0] sm:$0xff]
        %v3010 = vld [vmem:[#allocation2 + $0xe8] sm:$0xff]
        %v3011 = vld [vmem:[#allocation2 + $0xf0] sm:$0xff]
        %v3012 = vld [vmem:[#allocation2 + $0xf8] sm:$0xff]
        %v3013 = vadd.f32 %v2981, %v2823
        %v3014 = vadd.f32 %v2982, %v2828
        %v3015 = vadd.f32 %v2983, %v2833
        %v3016 = vadd.f32 %v2984, %v2838
        %v3017 = vadd.f32 %v2985, %v2843
        %v3018 = vadd.f32 %v2986, %v2848
        %v3019 = vadd.f32 %v2987, %v2853
        %v3020 = vadd.f32 %v2988, %v2858
        %v3021 = vadd.f32 %v2989, %v2863
        %v3022 = vadd.f32 %v2990, %v2868
        %v3023 = vadd.f32 %v2991, %v2873
        %v3024 = vadd.f32 %v2992, %v2878
        %v3025 = vadd.f32 %v2993, %v2883
        %v3026 = vadd.f32 %v2994, %v2888
        %v3027 = vadd.f32 %v2995, %v2893
        %v3028 = vadd.f32 %v2996, %v2898
        %v3029 = vadd.f32 %v2997, %v2903
        %v3030 = vadd.f32 %v2998, %v2908
        %v3031 = vadd.f32 %v2999, %v2913
        %v3032 = vadd.f32 %v3000, %v2918
        %v3033 = vadd.f32 %v3001, %v2923
        %v3034 = vadd.f32 %v3002, %v2928
        %v3035 = vadd.f32 %v3003, %v2933
        %v3036 = vadd.f32 %v3004, %v2938
        %v3037 = vadd.f32 %v3005, %v2943
        %v3038 = vadd.f32 %v3006, %v2948
        %v3039 = vadd.f32 %v3007, %v2953
        %v3040 = vadd.f32 %v3008, %v2958
        %v3041 = vadd.f32 %v3009, %v2963
        %v3042 = vadd.f32 %v3010, %v2968
        %v3043 = vadd.f32 %v3011, %v2973
        %v3044 = vadd.f32 %v3012, %v2978
        %3045 = vst [vmem:[#allocation2] sm:$0xff] %v3013
        %3046 = vst [vmem:[#allocation2 + $0x8] sm:$0xff] %v3014
        %3047 = vst [vmem:[#allocation2 + $0x10] sm:$0xff] %v3015
        %3048 = vst [vmem:[#allocation2 + $0x18] sm:$0xff] %v3016
        %3049 = vst [vmem:[#allocation2 + $0x20] sm:$0xff] %v3017
        %3050 = vst [vmem:[#allocation2 + $0x28] sm:$0xff] %v3018
        %3051 = vst [vmem:[#allocation2 + $0x30] sm:$0xff] %v3019
        %3052 = vst [vmem:[#allocation2 + $0x38] sm:$0xff] %v3020
        %3053 = vst [vmem:[#allocation2 + $0x40] sm:$0xff] %v3021
        %3054 = vst [vmem:[#allocation2 + $0x48] sm:$0xff] %v3022
        %3055 = vst [vmem:[#allocation2 + $0x50] sm:$0xff] %v3023
        %3056 = vst [vmem:[#allocation2 + $0x58] sm:$0xff] %v3024
        %3057 = vst [vmem:[#allocation2 + $0x60] sm:$0xff] %v3025
        %3058 = vst [vmem:[#allocation2 + $0x68] sm:$0xff] %v3026
        %3059 = vst [vmem:[#allocation2 + $0x70] sm:$0xff] %v3027
        %3060 = vst [vmem:[#allocation2 + $0x78] sm:$0xff] %v3028
        %3061 = vst [vmem:[#allocation2 + $0x80] sm:$0xff] %v3029
        %3062 = vst [vmem:[#allocation2 + $0x88] sm:$0xff] %v3030
        %3063 = vst [vmem:[#allocation2 + $0x90] sm:$0xff] %v3031
        %3064 = vst [vmem:[#allocation2 + $0x98] sm:$0xff] %v3032
        %3065 = vst [vmem:[#allocation2 + $0xa0] sm:$0xff] %v3033
        %3066 = vst [vmem:[#allocation2 + $0xa8] sm:$0xff] %v3034
        %3067 = vst [vmem:[#allocation2 + $0xb0] sm:$0xff] %v3035
        %3068 = vst [vmem:[#allocation2 + $0xb8] sm:$0xff] %v3036
        %3069 = vst [vmem:[#allocation2 + $0xc0] sm:$0xff] %v3037
        %3070 = vst [vmem:[#allocation2 + $0xc8] sm:$0xff] %v3038
        %3071 = vst [vmem:[#allocation2 + $0xd0] sm:$0xff] %v3039
        %3072 = vst [vmem:[#allocation2 + $0xd8] sm:$0xff] %v3040
        %3073 = vst [vmem:[#allocation2 + $0xe0] sm:$0xff] %v3041
        %3074 = vst [vmem:[#allocation2 + $0xe8] sm:$0xff] %v3042
        %3075 = vst [vmem:[#allocation2 + $0xf0] sm:$0xff] %v3043
        %3076 = vst [vmem:[#allocation2 + $0xf8] sm:$0xff] %v3044
        %v3077 = vld [vmem:[%s2336 + $0x2] sm:$0xff]
        %v3078 = vld [vmem:[%s2336 + $0xa] sm:$0xff]
        %v3079 = vld [vmem:[%s2336 + $0x1a] sm:$0xff]
        %v3080 = vld [vmem:[%s2336 + $0x22] sm:$0xff]
        %v3081 = vld [vmem:[%s2336 + $0x32] sm:$0xff]
        %v3082 = vld [vmem:[%s2336 + $0x3a] sm:$0xff]
        %v3083 = vld [vmem:[%s2336 + $0x4a] sm:$0xff]
        %v3084 = vld [vmem:[%s2336 + $0x52] sm:$0xff]
        %v3085 = vld [vmem:[%s2336 + $0x62] sm:$0xff]
        %v3086 = vld [vmem:[%s2336 + $0x6a] sm:$0xff]
        %v3087 = vld [vmem:[%s2336 + $0x7a] sm:$0xff]
        %v3088 = vld [vmem:[%s2336 + $0x82] sm:$0xff]
        %v3089 = vld [vmem:[%s2336 + $0x92] sm:$0xff]
        %v3090 = vld [vmem:[%s2336 + $0x9a] sm:$0xff]
        %v3091 = vld [vmem:[%s2336 + $0xaa] sm:$0xff]
        %v3092 = vld [vmem:[%s2336 + $0xb2] sm:$0xff]
        %v3093 = vld [vmem:[%s2336 + $0xc2] sm:$0xff]
        %v3094 = vld [vmem:[%s2336 + $0xca] sm:$0xff]
        %v3095 = vld [vmem:[%s2336 + $0xda] sm:$0xff]
        %v3096 = vld [vmem:[%s2336 + $0xe2] sm:$0xff]
        %v3097 = vld [vmem:[%s2336 + $0xf2] sm:$0xff]
        %v3098 = vld [vmem:[%s2336 + $0xfa] sm:$0xff]
        %v3099 = vld [vmem:[%s2336 + $0x10a] sm:$0xff]
        %v3100 = vld [vmem:[%s2336 + $0x112] sm:$0xff]
        %v3101 = vld [vmem:[%s2336 + $0x122] sm:$0xff]
        %v3102 = vld [vmem:[%s2336 + $0x12a] sm:$0xff]
        %v3103 = vld [vmem:[%s2336 + $0x13a] sm:$0xff]
        %v3104 = vld [vmem:[%s2336 + $0x142] sm:$0xff]
        %v3105 = vld [vmem:[%s2336 + $0x152] sm:$0xff]
        %v3106 = vld [vmem:[%s2336 + $0x15a] sm:$0xff]
        %v3107 = vld [vmem:[%s2336 + $0x16a] sm:$0xff]
        %v3108 = vld [vmem:[%s2336 + $0x172] sm:$0xff]
        %s3109 = scalar_lea.vmem %s1, 1024
        %v3110 = vld [vmem:[%s3109] sm:$0xff]
        %v3111 = vld [vmem:[%s3109 + $0x8] sm:$0xff]
        %v3112 = vld [vmem:[%s3109 + $0x10] sm:$0xff]
        %v3113 = vld [vmem:[%s3109 + $0x18] sm:$0xff]
        %v3114 = vld [vmem:[%s3109 + $0x20] sm:$0xff]
        %v3115 = vld [vmem:[%s3109 + $0x28] sm:$0xff]
        %v3116 = vld [vmem:[%s3109 + $0x30] sm:$0xff]
        %v3117 = vld [vmem:[%s3109 + $0x38] sm:$0xff]
        %v3118 = vld [vmem:[%s3109 + $0x40] sm:$0xff]
        %v3119 = vld [vmem:[%s3109 + $0x48] sm:$0xff]
        %v3120 = vld [vmem:[%s3109 + $0x50] sm:$0xff]
        %v3121 = vld [vmem:[%s3109 + $0x58] sm:$0xff]
        %v3122 = vld [vmem:[%s3109 + $0x60] sm:$0xff]
        %v3123 = vld [vmem:[%s3109 + $0x68] sm:$0xff]
        %v3124 = vld [vmem:[%s3109 + $0x70] sm:$0xff]
        %v3125 = vld [vmem:[%s3109 + $0x78] sm:$0xff]
        %3126 = vmatprep.subr.mxu0 0.0
        %3127 = vmatpush1.msra.mxu0 %v3125
        %3128 = vmatprep.subr.mxu0 0.0
        %3129 = vmatpush1.msra.mxu0 %v3124
        %3130 = vmatprep.subr.mxu0 0.0
        %3131 = vmatpush1.msra.mxu0 %v3123
        %3132 = vmatprep.subr.mxu0 0.0
        %3133 = vmatpush1.msra.mxu0 %v3122
        %3134 = vmatprep.subr.mxu0 0.0
        %3135 = vmatpush1.msra.mxu0 %v3121
        %3136 = vmatprep.subr.mxu0 0.0
        %3137 = vmatpush1.msra.mxu0 %v3120
        %3138 = vmatprep.subr.mxu0 0.0
        %3139 = vmatpush1.msra.mxu0 %v3119
        %3140 = vmatprep.subr.mxu0 0.0
        %3141 = vmatpush1.msra.mxu0 %v3118
        %3142 = vmatprep.subr.mxu0 0.0
        %3143 = vmatpush1.msra.mxu0 %v3117
        %3144 = vmatprep.subr.mxu0 0.0
        %3145 = vmatpush1.msra.mxu0 %v3116
        %3146 = vmatprep.subr.mxu0 0.0
        %3147 = vmatpush1.msra.mxu0 %v3115
        %3148 = vmatprep.subr.mxu0 0.0
        %3149 = vmatpush1.msra.mxu0 %v3114
        %3150 = vmatprep.subr.mxu0 0.0
        %3151 = vmatpush1.msra.mxu0 %v3113
        %3152 = vmatprep.subr.mxu0 0.0
        %3153 = vmatpush1.msra.mxu0 %v3112
        %3154 = vmatprep.subr.mxu0 0.0
        %3155 = vmatpush1.msra.mxu0 %v3111
        %3156 = vmatprep.subr.mxu0 0.0
        %3157 = vmatpush1.msra.mxu0 %v3110
        %3158 = vmatprep.subr.mxu0 0.0
        %3159 = vmatpush2.msra.mxu0 0.0
        %3160 = vmatprep.subr.mxu0 0.0
        %3161 = vmatpush2.msra.mxu0 0.0
        %3162 = vmatprep.subr.mxu0 0.0
        %3163 = vmatpush2.msra.mxu0 0.0
        %3164 = vmatprep.subr.mxu0 0.0
        %3165 = vmatpush2.msra.mxu0 0.0
        %3166 = vmatprep.subr.mxu0 0.0
        %3167 = vmatpush2.msra.mxu0 0.0
        %3168 = vmatprep.subr.mxu0 0.0
        %3169 = vmatpush2.msra.mxu0 0.0
        %3170 = vmatprep.subr.mxu0 0.0
        %3171 = vmatpush2.msra.mxu0 0.0
        %3172 = vmatprep.subr.mxu0 0.0
        %3173 = vmatpush2.msra.mxu0 0.0
        %3174 = vmatprep.subr.mxu0 0.0
        %3175 = vmatpush2.msra.mxu0 0.0
        %3176 = vmatprep.subr.mxu0 0.0
        %3177 = vmatpush2.msra.mxu0 0.0
        %3178 = vmatprep.subr.mxu0 0.0
        %3179 = vmatpush2.msra.mxu0 0.0
        %3180 = vmatprep.subr.mxu0 0.0
        %3181 = vmatpush2.msra.mxu0 0.0
        %3182 = vmatprep.subr.mxu0 0.0
        %3183 = vmatpush2.msra.mxu0 0.0
        %3184 = vmatprep.subr.mxu0 0.0
        %3185 = vmatpush2.msra.mxu0 0.0
        %3186 = vmatprep.subr.mxu0 0.0
        %3187 = vmatpush2.msra.mxu0 0.0
        %3188 = vmatprep.subr.mxu0 0.0
        %3189 = vmatpush2.msra.mxu0 0.0
        %3190 = vmatprep.mubr.f32.mxu0 0.0
        %3191 = vmatmul.mubr.f32.gmra.mxu0 %v3077
        %v3192 = vpop.f32.mrf.mxu0
        %v3193 = vadd.f32 0.0, %v3192
        %v3194 = vpop.f32.mrf.mxu0
        %3195 = vmatprep.mubr.f32.mxu0 0.0
        %3196 = vmatmul.mubr.f32.gmra.mxu0 %v3078
        %v3197 = vpop.f32.mrf.mxu0
        %v3198 = vadd.f32 0.0, %v3197
        %v3199 = vpop.f32.mrf.mxu0
        %3200 = vmatprep.mubr.f32.mxu0 0.0
        %3201 = vmatmul.mubr.f32.gmra.mxu0 %v3079
        %v3202 = vpop.f32.mrf.mxu0
        %v3203 = vadd.f32 0.0, %v3202
        %v3204 = vpop.f32.mrf.mxu0
        %3205 = vmatprep.mubr.f32.mxu0 0.0
        %3206 = vmatmul.mubr.f32.gmra.mxu0 %v3080
        %v3207 = vpop.f32.mrf.mxu0
        %v3208 = vadd.f32 0.0, %v3207
        %v3209 = vpop.f32.mrf.mxu0
        %3210 = vmatprep.mubr.f32.mxu0 0.0
        %3211 = vmatmul.mubr.f32.gmra.mxu0 %v3081
        %v3212 = vpop.f32.mrf.mxu0
        %v3213 = vadd.f32 0.0, %v3212
        %v3214 = vpop.f32.mrf.mxu0
        %3215 = vmatprep.mubr.f32.mxu0 0.0
        %3216 = vmatmul.mubr.f32.gmra.mxu0 %v3082
        %v3217 = vpop.f32.mrf.mxu0
        %v3218 = vadd.f32 0.0, %v3217
        %v3219 = vpop.f32.mrf.mxu0
        %3220 = vmatprep.mubr.f32.mxu0 0.0
        %3221 = vmatmul.mubr.f32.gmra.mxu0 %v3083
        %v3222 = vpop.f32.mrf.mxu0
        %v3223 = vadd.f32 0.0, %v3222
        %v3224 = vpop.f32.mrf.mxu0
        %3225 = vmatprep.mubr.f32.mxu0 0.0
        %3226 = vmatmul.mubr.f32.gmra.mxu0 %v3084
        %v3227 = vpop.f32.mrf.mxu0
        %v3228 = vadd.f32 0.0, %v3227
        %v3229 = vpop.f32.mrf.mxu0
        %3230 = vmatprep.mubr.f32.mxu0 0.0
        %3231 = vmatmul.mubr.f32.gmra.mxu0 %v3085
        %v3232 = vpop.f32.mrf.mxu0
        %v3233 = vadd.f32 0.0, %v3232
        %v3234 = vpop.f32.mrf.mxu0
        %3235 = vmatprep.mubr.f32.mxu0 0.0
        %3236 = vmatmul.mubr.f32.gmra.mxu0 %v3086
        %v3237 = vpop.f32.mrf.mxu0
        %v3238 = vadd.f32 0.0, %v3237
        %v3239 = vpop.f32.mrf.mxu0
        %3240 = vmatprep.mubr.f32.mxu0 0.0
        %3241 = vmatmul.mubr.f32.gmra.mxu0 %v3087
        %v3242 = vpop.f32.mrf.mxu0
        %v3243 = vadd.f32 0.0, %v3242
        %v3244 = vpop.f32.mrf.mxu0
        %3245 = vmatprep.mubr.f32.mxu0 0.0
        %3246 = vmatmul.mubr.f32.gmra.mxu0 %v3088
        %v3247 = vpop.f32.mrf.mxu0
        %v3248 = vadd.f32 0.0, %v3247
        %v3249 = vpop.f32.mrf.mxu0
        %3250 = vmatprep.mubr.f32.mxu0 0.0
        %3251 = vmatmul.mubr.f32.gmra.mxu0 %v3089
        %v3252 = vpop.f32.mrf.mxu0
        %v3253 = vadd.f32 0.0, %v3252
        %v3254 = vpop.f32.mrf.mxu0
        %3255 = vmatprep.mubr.f32.mxu0 0.0
        %3256 = vmatmul.mubr.f32.gmra.mxu0 %v3090
        %v3257 = vpop.f32.mrf.mxu0
        %v3258 = vadd.f32 0.0, %v3257
        %v3259 = vpop.f32.mrf.mxu0
        %3260 = vmatprep.mubr.f32.mxu0 0.0
        %3261 = vmatmul.mubr.f32.gmra.mxu0 %v3091
        %v3262 = vpop.f32.mrf.mxu0
        %v3263 = vadd.f32 0.0, %v3262
        %v3264 = vpop.f32.mrf.mxu0
        %3265 = vmatprep.mubr.f32.mxu0 0.0
        %3266 = vmatmul.mubr.f32.gmra.mxu0 %v3092
        %v3267 = vpop.f32.mrf.mxu0
        %v3268 = vadd.f32 0.0, %v3267
        %v3269 = vpop.f32.mrf.mxu0
        %3270 = vmatprep.mubr.f32.mxu0 0.0
        %3271 = vmatmul.mubr.f32.gmra.mxu0 %v3093
        %v3272 = vpop.f32.mrf.mxu0
        %v3273 = vadd.f32 0.0, %v3272
        %v3274 = vpop.f32.mrf.mxu0
        %3275 = vmatprep.mubr.f32.mxu0 0.0
        %3276 = vmatmul.mubr.f32.gmra.mxu0 %v3094
        %v3277 = vpop.f32.mrf.mxu0
        %v3278 = vadd.f32 0.0, %v3277
        %v3279 = vpop.f32.mrf.mxu0
        %3280 = vmatprep.mubr.f32.mxu0 0.0
        %3281 = vmatmul.mubr.f32.gmra.mxu0 %v3095
        %v3282 = vpop.f32.mrf.mxu0
        %v3283 = vadd.f32 0.0, %v3282
        %v3284 = vpop.f32.mrf.mxu0
        %3285 = vmatprep.mubr.f32.mxu0 0.0
        %3286 = vmatmul.mubr.f32.gmra.mxu0 %v3096
        %v3287 = vpop.f32.mrf.mxu0
        %v3288 = vadd.f32 0.0, %v3287
        %v3289 = vpop.f32.mrf.mxu0
        %3290 = vmatprep.mubr.f32.mxu0 0.0
        %3291 = vmatmul.mubr.f32.gmra.mxu0 %v3097
        %v3292 = vpop.f32.mrf.mxu0
        %v3293 = vadd.f32 0.0, %v3292
        %v3294 = vpop.f32.mrf.mxu0
        %3295 = vmatprep.mubr.f32.mxu0 0.0
        %3296 = vmatmul.mubr.f32.gmra.mxu0 %v3098
        %v3297 = vpop.f32.mrf.mxu0
        %v3298 = vadd.f32 0.0, %v3297
        %v3299 = vpop.f32.mrf.mxu0
        %3300 = vmatprep.mubr.f32.mxu0 0.0
        %3301 = vmatmul.mubr.f32.gmra.mxu0 %v3099
        %v3302 = vpop.f32.mrf.mxu0
        %v3303 = vadd.f32 0.0, %v3302
        %v3304 = vpop.f32.mrf.mxu0
        %3305 = vmatprep.mubr.f32.mxu0 0.0
        %3306 = vmatmul.mubr.f32.gmra.mxu0 %v3100
        %v3307 = vpop.f32.mrf.mxu0
        %v3308 = vadd.f32 0.0, %v3307
        %v3309 = vpop.f32.mrf.mxu0
        %3310 = vmatprep.mubr.f32.mxu0 0.0
        %3311 = vmatmul.mubr.f32.gmra.mxu0 %v3101
        %v3312 = vpop.f32.mrf.mxu0
        %v3313 = vadd.f32 0.0, %v3312
        %v3314 = vpop.f32.mrf.mxu0
        %3315 = vmatprep.mubr.f32.mxu0 0.0
        %3316 = vmatmul.mubr.f32.gmra.mxu0 %v3102
        %v3317 = vpop.f32.mrf.mxu0
        %v3318 = vadd.f32 0.0, %v3317
        %v3319 = vpop.f32.mrf.mxu0
        %3320 = vmatprep.mubr.f32.mxu0 0.0
        %3321 = vmatmul.mubr.f32.gmra.mxu0 %v3103
        %v3322 = vpop.f32.mrf.mxu0
        %v3323 = vadd.f32 0.0, %v3322
        %v3324 = vpop.f32.mrf.mxu0
        %3325 = vmatprep.mubr.f32.mxu0 0.0
        %3326 = vmatmul.mubr.f32.gmra.mxu0 %v3104
        %v3327 = vpop.f32.mrf.mxu0
        %v3328 = vadd.f32 0.0, %v3327
        %v3329 = vpop.f32.mrf.mxu0
        %3330 = vmatprep.mubr.f32.mxu0 0.0
        %3331 = vmatmul.mubr.f32.gmra.mxu0 %v3105
        %v3332 = vpop.f32.mrf.mxu0
        %v3333 = vadd.f32 0.0, %v3332
        %v3334 = vpop.f32.mrf.mxu0
        %3335 = vmatprep.mubr.f32.mxu0 0.0
        %3336 = vmatmul.mubr.f32.gmra.mxu0 %v3106
        %v3337 = vpop.f32.mrf.mxu0
        %v3338 = vadd.f32 0.0, %v3337
        %v3339 = vpop.f32.mrf.mxu0
        %3340 = vmatprep.mubr.f32.mxu0 0.0
        %3341 = vmatmul.mubr.f32.gmra.mxu0 %v3107
        %v3342 = vpop.f32.mrf.mxu0
        %v3343 = vadd.f32 0.0, %v3342
        %v3344 = vpop.f32.mrf.mxu0
        %3345 = vmatprep.mubr.f32.mxu0 0.0
        %3346 = vmatmul.mubr.f32.gmra.mxu0 %v3108
        %v3347 = vpop.f32.mrf.mxu0
        %v3348 = vadd.f32 0.0, %v3347
        %v3349 = vpop.f32.mrf.mxu0
        %3350 = vdwg.mxu0
        %v3351 = vld [vmem:[#allocation2] sm:$0xff]
        %v3352 = vld [vmem:[#allocation2 + $0x8] sm:$0xff]
        %v3353 = vld [vmem:[#allocation2 + $0x10] sm:$0xff]
        %v3354 = vld [vmem:[#allocation2 + $0x18] sm:$0xff]
        %v3355 = vld [vmem:[#allocation2 + $0x20] sm:$0xff]
        %v3356 = vld [vmem:[#allocation2 + $0x28] sm:$0xff]
        %v3357 = vld [vmem:[#allocation2 + $0x30] sm:$0xff]
        %v3358 = vld [vmem:[#allocation2 + $0x38] sm:$0xff]
        %v3359 = vld [vmem:[#allocation2 + $0x40] sm:$0xff]
        %v3360 = vld [vmem:[#allocation2 + $0x48] sm:$0xff]
        %v3361 = vld [vmem:[#allocation2 + $0x50] sm:$0xff]
        %v3362 = vld [vmem:[#allocation2 + $0x58] sm:$0xff]
        %v3363 = vld [vmem:[#allocation2 + $0x60] sm:$0xff]
        %v3364 = vld [vmem:[#allocation2 + $0x68] sm:$0xff]
        %v3365 = vld [vmem:[#allocation2 + $0x70] sm:$0xff]
        %v3366 = vld [vmem:[#allocation2 + $0x78] sm:$0xff]
        %v3367 = vld [vmem:[#allocation2 + $0x80] sm:$0xff]
        %v3368 = vld [vmem:[#allocation2 + $0x88] sm:$0xff]
        %v3369 = vld [vmem:[#allocation2 + $0x90] sm:$0xff]
        %v3370 = vld [vmem:[#allocation2 + $0x98] sm:$0xff]
        %v3371 = vld [vmem:[#allocation2 + $0xa0] sm:$0xff]
        %v3372 = vld [vmem:[#allocation2 + $0xa8] sm:$0xff]
        %v3373 = vld [vmem:[#allocation2 + $0xb0] sm:$0xff]
        %v3374 = vld [vmem:[#allocation2 + $0xb8] sm:$0xff]
        %v3375 = vld [vmem:[#allocation2 + $0xc0] sm:$0xff]
        %v3376 = vld [vmem:[#allocation2 + $0xc8] sm:$0xff]
        %v3377 = vld [vmem:[#allocation2 + $0xd0] sm:$0xff]
        %v3378 = vld [vmem:[#allocation2 + $0xd8] sm:$0xff]
        %v3379 = vld [vmem:[#allocation2 + $0xe0] sm:$0xff]
        %v3380 = vld [vmem:[#allocation2 + $0xe8] sm:$0xff]
        %v3381 = vld [vmem:[#allocation2 + $0xf0] sm:$0xff]
        %v3382 = vld [vmem:[#allocation2 + $0xf8] sm:$0xff]
        %v3383 = vadd.f32 %v3351, %v3193
        %v3384 = vadd.f32 %v3352, %v3198
        %v3385 = vadd.f32 %v3353, %v3203
        %v3386 = vadd.f32 %v3354, %v3208
        %v3387 = vadd.f32 %v3355, %v3213
        %v3388 = vadd.f32 %v3356, %v3218
        %v3389 = vadd.f32 %v3357, %v3223
        %v3390 = vadd.f32 %v3358, %v3228
        %v3391 = vadd.f32 %v3359, %v3233
        %v3392 = vadd.f32 %v3360, %v3238
        %v3393 = vadd.f32 %v3361, %v3243
        %v3394 = vadd.f32 %v3362, %v3248
        %v3395 = vadd.f32 %v3363, %v3253
        %v3396 = vadd.f32 %v3364, %v3258
        %v3397 = vadd.f32 %v3365, %v3263
        %v3398 = vadd.f32 %v3366, %v3268
        %v3399 = vadd.f32 %v3367, %v3273
        %v3400 = vadd.f32 %v3368, %v3278
        %v3401 = vadd.f32 %v3369, %v3283
        %v3402 = vadd.f32 %v3370, %v3288
        %v3403 = vadd.f32 %v3371, %v3293
        %v3404 = vadd.f32 %v3372, %v3298
        %v3405 = vadd.f32 %v3373, %v3303
        %v3406 = vadd.f32 %v3374, %v3308
        %v3407 = vadd.f32 %v3375, %v3313
        %v3408 = vadd.f32 %v3376, %v3318
        %v3409 = vadd.f32 %v3377, %v3323
        %v3410 = vadd.f32 %v3378, %v3328
        %v3411 = vadd.f32 %v3379, %v3333
        %v3412 = vadd.f32 %v3380, %v3338
        %v3413 = vadd.f32 %v3381, %v3343
        %v3414 = vadd.f32 %v3382, %v3348
        %3415 = vst [vmem:[#allocation2] sm:$0xff] %v3383
        %3416 = vst [vmem:[#allocation2 + $0x8] sm:$0xff] %v3384
        %3417 = vst [vmem:[#allocation2 + $0x10] sm:$0xff] %v3385
        %3418 = vst [vmem:[#allocation2 + $0x18] sm:$0xff] %v3386
        %3419 = vst [vmem:[#allocation2 + $0x20] sm:$0xff] %v3387
        %3420 = vst [vmem:[#allocation2 + $0x28] sm:$0xff] %v3388
        %3421 = vst [vmem:[#allocation2 + $0x30] sm:$0xff] %v3389
        %3422 = vst [vmem:[#allocation2 + $0x38] sm:$0xff] %v3390
        %3423 = vst [vmem:[#allocation2 + $0x40] sm:$0xff] %v3391
        %3424 = vst [vmem:[#allocation2 + $0x48] sm:$0xff] %v3392
        %3425 = vst [vmem:[#allocation2 + $0x50] sm:$0xff] %v3393
        %3426 = vst [vmem:[#allocation2 + $0x58] sm:$0xff] %v3394
        %3427 = vst [vmem:[#allocation2 + $0x60] sm:$0xff] %v3395
        %3428 = vst [vmem:[#allocation2 + $0x68] sm:$0xff] %v3396
        %3429 = vst [vmem:[#allocation2 + $0x70] sm:$0xff] %v3397
        %3430 = vst [vmem:[#allocation2 + $0x78] sm:$0xff] %v3398
        %3431 = vst [vmem:[#allocation2 + $0x80] sm:$0xff] %v3399
        %3432 = vst [vmem:[#allocation2 + $0x88] sm:$0xff] %v3400
        %3433 = vst [vmem:[#allocation2 + $0x90] sm:$0xff] %v3401
        %3434 = vst [vmem:[#allocation2 + $0x98] sm:$0xff] %v3402
        %3435 = vst [vmem:[#allocation2 + $0xa0] sm:$0xff] %v3403
        %3436 = vst [vmem:[#allocation2 + $0xa8] sm:$0xff] %v3404
        %3437 = vst [vmem:[#allocation2 + $0xb0] sm:$0xff] %v3405
        %3438 = vst [vmem:[#allocation2 + $0xb8] sm:$0xff] %v3406
        %3439 = vst [vmem:[#allocation2 + $0xc0] sm:$0xff] %v3407
        %3440 = vst [vmem:[#allocation2 + $0xc8] sm:$0xff] %v3408
        %3441 = vst [vmem:[#allocation2 + $0xd0] sm:$0xff] %v3409
        %3442 = vst [vmem:[#allocation2 + $0xd8] sm:$0xff] %v3410
        %3443 = vst [vmem:[#allocation2 + $0xe0] sm:$0xff] %v3411
        %3444 = vst [vmem:[#allocation2 + $0xe8] sm:$0xff] %v3412
        %3445 = vst [vmem:[#allocation2 + $0xf0] sm:$0xff] %v3413
        %3446 = vst [vmem:[#allocation2 + $0xf8] sm:$0xff] %v3414
        %v3447 = vld [vmem:[#allocation2] sm:$0xff]
        %v3448 = vld [vmem:[#allocation2 + $0x8] sm:$0xff]
        %v3449 = vld [vmem:[#allocation2 + $0x10] sm:$0xff]
        %v3450 = vld [vmem:[#allocation2 + $0x18] sm:$0xff]
        %v3451 = vld [vmem:[#allocation2 + $0x20] sm:$0xff]
        %v3452 = vld [vmem:[#allocation2 + $0x28] sm:$0xff]
        %v3453 = vld [vmem:[#allocation2 + $0x30] sm:$0xff]
        %v3454 = vld [vmem:[#allocation2 + $0x38] sm:$0xff]
        %v3455 = vld [vmem:[#allocation2 + $0x40] sm:$0xff]
        %v3456 = vld [vmem:[#allocation2 + $0x48] sm:$0xff]
        %v3457 = vld [vmem:[#allocation2 + $0x50] sm:$0xff]
        %v3458 = vld [vmem:[#allocation2 + $0x58] sm:$0xff]
        %v3459 = vld [vmem:[#allocation2 + $0x60] sm:$0xff]
        %v3460 = vld [vmem:[#allocation2 + $0x68] sm:$0xff]
        %v3461 = vld [vmem:[#allocation2 + $0x70] sm:$0xff]
        %v3462 = vld [vmem:[#allocation2 + $0x78] sm:$0xff]
        %v3463 = vld [vmem:[#allocation2 + $0x80] sm:$0xff]
        %v3464 = vld [vmem:[#allocation2 + $0x88] sm:$0xff]
        %v3465 = vld [vmem:[#allocation2 + $0x90] sm:$0xff]
        %v3466 = vld [vmem:[#allocation2 + $0x98] sm:$0xff]
        %v3467 = vld [vmem:[#allocation2 + $0xa0] sm:$0xff]
        %v3468 = vld [vmem:[#allocation2 + $0xa8] sm:$0xff]
        %v3469 = vld [vmem:[#allocation2 + $0xb0] sm:$0xff]
        %v3470 = vld [vmem:[#allocation2 + $0xb8] sm:$0xff]
        %v3471 = vld [vmem:[#allocation2 + $0xc0] sm:$0xff]
        %v3472 = vld [vmem:[#allocation2 + $0xc8] sm:$0xff]
        %v3473 = vld [vmem:[#allocation2 + $0xd0] sm:$0xff]
        %v3474 = vld [vmem:[#allocation2 + $0xd8] sm:$0xff]
        %v3475 = vld [vmem:[#allocation2 + $0xe0] sm:$0xff]
        %v3476 = vld [vmem:[#allocation2 + $0xe8] sm:$0xff]
        %v3477 = vld [vmem:[#allocation2 + $0xf0] sm:$0xff]
        %v3478 = vld [vmem:[#allocation2 + $0xf8] sm:$0xff]
        %3479 = vst [vmem:[%s167] sm:$0xff] %v3447
        %3480 = vst [vmem:[%s167 + $0x8] sm:$0xff] %v3448
        %3481 = vst [vmem:[%s167 + $0x10] sm:$0xff] %v3449
        %3482 = vst [vmem:[%s167 + $0x18] sm:$0xff] %v3450
        %3483 = vst [vmem:[%s167 + $0x20] sm:$0xff] %v3451
        %3484 = vst [vmem:[%s167 + $0x28] sm:$0xff] %v3452
        %3485 = vst [vmem:[%s167 + $0x30] sm:$0xff] %v3453
        %3486 = vst [vmem:[%s167 + $0x38] sm:$0xff] %v3454
        %3487 = vst [vmem:[%s167 + $0x40] sm:$0xff] %v3455
        %3488 = vst [vmem:[%s167 + $0x48] sm:$0xff] %v3456
        %3489 = vst [vmem:[%s167 + $0x50] sm:$0xff] %v3457
        %3490 = vst [vmem:[%s167 + $0x58] sm:$0xff] %v3458
        %3491 = vst [vmem:[%s167 + $0x60] sm:$0xff] %v3459
        %3492 = vst [vmem:[%s167 + $0x68] sm:$0xff] %v3460
        %3493 = vst [vmem:[%s167 + $0x70] sm:$0xff] %v3461
        %3494 = vst [vmem:[%s167 + $0x78] sm:$0xff] %v3462
        %3495 = vst [vmem:[%s167 + $0x80] sm:$0xff] %v3463
        %3496 = vst [vmem:[%s167 + $0x88] sm:$0xff] %v3464
        %3497 = vst [vmem:[%s167 + $0x90] sm:$0xff] %v3465
        %3498 = vst [vmem:[%s167 + $0x98] sm:$0xff] %v3466
        %3499 = vst [vmem:[%s167 + $0xa0] sm:$0xff] %v3467
        %3500 = vst [vmem:[%s167 + $0xa8] sm:$0xff] %v3468
        %3501 = vst [vmem:[%s167 + $0xb0] sm:$0xff] %v3469
        %3502 = vst [vmem:[%s167 + $0xb8] sm:$0xff] %v3470
        %3503 = vst [vmem:[%s167 + $0xc0] sm:$0xff] %v3471
        %3504 = vst [vmem:[%s167 + $0xc8] sm:$0xff] %v3472
        %3505 = vst [vmem:[%s167 + $0xd0] sm:$0xff] %v3473
        %3506 = vst [vmem:[%s167 + $0xd8] sm:$0xff] %v3474
        %3507 = vst [vmem:[%s167 + $0xe0] sm:$0xff] %v3475
        %3508 = vst [vmem:[%s167 + $0xe8] sm:$0xff] %v3476
        %3509 = vst [vmem:[%s167 + $0xf0] sm:$0xff] %v3477
        %3510 = vst [vmem:[%s167 + $0xf8] sm:$0xff] %v3478
        %v3511 = vadd.f32 %v3447, %v3448
        %v3512 = vadd.f32 %v3511, %v3449
        %v3513 = vadd.f32 %v3512, %v3450
        %v3514 = vadd.f32 %v3513, %v3451
        %v3515 = vadd.f32 %v3514, %v3452
        %v3516 = vadd.f32 %v3515, %v3453
        %v3517 = vadd.f32 %v3516, %v3454
        %v3518 = vadd.f32 %v3517, %v3455
        %v3519 = vadd.f32 %v3518, %v3456
        %v3520 = vadd.f32 %v3519, %v3457
        %v3521 = vadd.f32 %v3520, %v3458
        %v3522 = vadd.f32 %v3521, %v3459
        %v3523 = vadd.f32 %v3522, %v3460
        %v3524 = vadd.f32 %v3523, %v3461
        %v3525 = vadd.f32 %v3524, %v3462
        %v3526 = vadd.f32 %v3525, %v3463
        %v3527 = vadd.f32 %v3526, %v3464
        %v3528 = vadd.f32 %v3527, %v3465
        %v3529 = vadd.f32 %v3528, %v3466
        %v3530 = vadd.f32 %v3529, %v3467
        %v3531 = vadd.f32 %v3530, %v3468
        %v3532 = vadd.f32 %v3531, %v3469
        %v3533 = vadd.f32 %v3532, %v3470
        %v3534 = vadd.f32 %v3533, %v3471
        %v3535 = vadd.f32 %v3534, %v3472
        %v3536 = vadd.f32 %v3535, %v3473
        %v3537 = vadd.f32 %v3536, %v3474
        %v3538 = vadd.f32 %v3537, %v3475
        %v3539 = vadd.f32 %v3538, %v3476
        %v3540 = vadd.f32 %v3539, %v3477
        %v3541 = vadd.f32 %v3540, %v3478
        %v3542 = vrot.slane %v3541, 4
        %v3543 = vadd.f32 %v3541, %v3542
        %v3544 = vrot.slane %v3543, 2
        %v3545 = vadd.f32 %v3543, %v3544
        %v3546 = vrot.slane %v3545, 1
        %v3547 = vadd.f32 %v3545, %v3546
        %v3548 = vmul.f32 %v3447, %v3447
        %v3549 = vmul.f32 %v3448, %v3448
        %v3550 = vmul.f32 %v3449, %v3449
        %v3551 = vmul.f32 %v3450, %v3450
        %v3552 = vmul.f32 %v3451, %v3451
        %v3553 = vmul.f32 %v3452, %v3452
        %v3554 = vmul.f32 %v3453, %v3453
        %v3555 = vmul.f32 %v3454, %v3454
        %v3556 = vmul.f32 %v3455, %v3455
        %v3557 = vmul.f32 %v3456, %v3456
        %v3558 = vmul.f32 %v3457, %v3457
        %v3559 = vmul.f32 %v3458, %v3458
        %v3560 = vmul.f32 %v3459, %v3459
        %v3561 = vmul.f32 %v3460, %v3460
        %v3562 = vmul.f32 %v3461, %v3461
        %v3563 = vmul.f32 %v3462, %v3462
        %v3564 = vmul.f32 %v3463, %v3463
        %v3565 = vmul.f32 %v3464, %v3464
        %v3566 = vmul.f32 %v3465, %v3465
        %v3567 = vmul.f32 %v3466, %v3466
        %v3568 = vmul.f32 %v3467, %v3467
        %v3569 = vmul.f32 %v3468, %v3468
        %v3570 = vmul.f32 %v3469, %v3469
        %v3571 = vmul.f32 %v3470, %v3470
        %v3572 = vmul.f32 %v3471, %v3471
        %v3573 = vmul.f32 %v3472, %v3472
        %v3574 = vmul.f32 %v3473, %v3473
        %v3575 = vmul.f32 %v3474, %v3474
        %v3576 = vmul.f32 %v3475, %v3475
        %v3577 = vmul.f32 %v3476, %v3476
        %v3578 = vmul.f32 %v3477, %v3477
        %v3579 = vmul.f32 %v3478, %v3478
        %v3580 = vadd.f32 %v3548, %v3549
        %v3581 = vadd.f32 %v3580, %v3550
        %v3582 = vadd.f32 %v3581, %v3551
        %v3583 = vadd.f32 %v3582, %v3552
        %v3584 = vadd.f32 %v3583, %v3553
        %v3585 = vadd.f32 %v3584, %v3554
        %v3586 = vadd.f32 %v3585, %v3555
        %v3587 = vadd.f32 %v3586, %v3556
        %v3588 = vadd.f32 %v3587, %v3557
        %v3589 = vadd.f32 %v3588, %v3558
        %v3590 = vadd.f32 %v3589, %v3559
        %v3591 = vadd.f32 %v3590, %v3560
        %v3592 = vadd.f32 %v3591, %v3561
        %v3593 = vadd.f32 %v3592, %v3562
        %v3594 = vadd.f32 %v3593, %v3563
        %v3595 = vadd.f32 %v3594, %v3564
        %v3596 = vadd.f32 %v3595, %v3565
        %v3597 = vadd.f32 %v3596, %v3566
        %v3598 = vadd.f32 %v3597, %v3567
        %v3599 = vadd.f32 %v3598, %v3568
        %v3600 = vadd.f32 %v3599, %v3569
        %v3601 = vadd.f32 %v3600, %v3570
        %v3602 = vadd.f32 %v3601, %v3571
        %v3603 = vadd.f32 %v3602, %v3572
        %v3604 = vadd.f32 %v3603, %v3573
        %v3605 = vadd.f32 %v3604, %v3574
        %v3606 = vadd.f32 %v3605, %v3575
        %v3607 = vadd.f32 %v3606, %v3576
        %v3608 = vadd.f32 %v3607, %v3577
        %v3609 = vadd.f32 %v3608, %v3578
        %v3610 = vadd.f32 %v3609, %v3579
        %v3611 = vrot.slane %v3610, 4
        %v3612 = vadd.f32 %v3610, %v3611
        %v3613 = vrot.slane %v3612, 2
        %v3614 = vadd.f32 %v3612, %v3613
        %v3615 = vrot.slane %v3614, 1
        %v3616 = vadd.f32 %v3614, %v3615
        %vm3617 = vcmask 1040384
        %v3618 = vsel %vm3617, %v3547, %v3616
        %3619 = vst [vmem:[%s174] sm:$0x3] %v3618
        %s3620 = sand.u32 %s76, 1
        %s3621 = scalar_lea.sflag [#allocation4], %s3620
        %s3622 = sand.u32 %s76, 1
        %s3623 = smul.addr %s3622, 256
        %s3624 = scalar_lea.vmem [#allocation3], %s3623
        %s3625 = sand.u32 %s102, 1
        %s3626 = scalar_lea.sflag [#allocation6], %s3625
        %s3627 = sand.u32 %s102, 1
        %s3628 = smul.addr %s3627, 2
        %s3629 = scalar_lea.vmem [#allocation5], %s3628
        // Predicated region
        $region29: #{tpu_custom_call.1} parent=27 // pred_check
          %p3630 = pneg %p86
        $region30: #{tpu_custom_call.1} parent=27 // pred_check_branch
          %3632 = sbr.rel (%p3630) target = $region32
        $region31: #{tpu_custom_call.1} parent=27 // pred_region
          %s3634 = ssub.s32 4096, 4096
          %3635 = vsyncadd %s3621, %s3634
          %s3636 = smul.addr %s21, 32
          %s3637 = smul.addr %s3636, 128
          %s3638 = scalar_lea.hbm %s2, %s3637
          %s3639 = sshll.u32 %s3624, 4
          %s3640 = int_to_ptr.vmem [resolvable:$true] %s3639
          %3645 = dma.vmem_to_hbm [thread:$0]  %s3640, 4096, %s3638, %s3621, 128, 128, 8
        $region32: #{tpu_custom_call.1} parent=27 // pred_fallthru
          _
        // Predicated region
        $region33: #{tpu_custom_call.1} parent=27 // pred_check
          %p3646 = pneg %p112
        $region34: #{tpu_custom_call.1} parent=27 // pred_check_branch
          %3648 = sbr.rel (%p3646) target = $region36
        $region35: #{tpu_custom_call.1} parent=27 // pred_region
          %s3650 = ssub.s32 32, 32
          %3651 = vsyncadd %s3626, %s3650
          %s3652 = smul.addr %s21, 32
          %s3653 = scalar_lea.hbm %s3, %s3652
          %s3655 = sshll.u32 %s3629, 4
          %s3656 = int_to_ptr.vmem [resolvable:$true] %s3655
          %3658 = dma.vmem_to_hbm [thread:$0]  %s3656, 32, %s3653, %s3626
        $region36: #{tpu_custom_call.1} parent=27 // pred_fallthru
          _
      $region28: #{tpu_custom_call.1} parent=5 // pred_fallthru
        _
      %p3659 = scmp.le.s32.totalorder 2, %s16
      // Predicated region
      $region37: #{tpu_custom_call.1} parent=5 // pred_check
        %p3660 = pneg %p3659
      $region38: #{tpu_custom_call.1} parent=5 // pred_check_branch
        %3662 = sbr.rel (%p3660) target = $region40
      $region39: #{tpu_custom_call.1} parent=5 // pred_region
        %s3663 = ssub.s32 %s16, 2
        // Predicated region
        $region41: #{tpu_custom_call.1} parent=39 // pred_check
          %p3664 = pneg %p92
        $region42: #{tpu_custom_call.1} parent=39 // pred_check_branch
          %3666 = sbr.rel (%p3664) target = $region44
        $region43: #{tpu_custom_call.1} parent=39 // pred_region
          %s3667 = sand.u32 %s77, 1
          %s3668 = scalar_lea.sflag [#allocation4], %s3667
          %s3669 = sand.u32 %s77, 1
          %s3670 = smul.addr %s3669, 256
          %s3671 = scalar_lea.vmem [#allocation3], %s3670
          %3672 = dma.done %s3668, 4096
        $region44: #{tpu_custom_call.1} parent=39 // pred_fallthru
          _
        // Predicated region
        $region45: #{tpu_custom_call.1} parent=39 // pred_check
          %p3673 = pneg %p118
        $region46: #{tpu_custom_call.1} parent=39 // pred_check_branch
          %3675 = sbr.rel (%p3673) target = $region48
        $region47: #{tpu_custom_call.1} parent=39 // pred_region
          %s3676 = sand.u32 %s103, 1
          %s3677 = scalar_lea.sflag [#allocation6], %s3676
          %s3678 = sand.u32 %s103, 1
          %s3679 = smul.addr %s3678, 2
          %s3680 = scalar_lea.vmem [#allocation5], %s3679
          %3681 = dma.done %s3677, 32
        $region48: #{tpu_custom_call.1} parent=39 // pred_fallthru
          _
      $region40: #{tpu_custom_call.1} parent=5 // pred_fallthru
        _
    $region6: #{tpu_custom_call.1} parent=1 // loop_footer
      %s20 = sadd.s32 1, %s16
    $region7: #{tpu_custom_call.1} parent=1 // loop_footer_branch
      %15 = sbr.rel target = $region3
    $region8: #{tpu_custom_call.1} parent=1 // loop_exit
      _
    %3682 = vsyncpa [#allocation4], 1
    %s3683 = scalar_lea.sflag [#allocation4], 1
    %3684 = vsyncpa %s3683, 1
    %3685 = vsyncpa [#allocation6], 1
    %s3686 = scalar_lea.sflag [#allocation6], 1
    %3687 = vsyncpa %s3686, 1

</llo_original>
